<compile_context>
chip_gen: v7x
topology: tpu7x:2x2x1
jax: 0.10.0
libtpu: 0.0.40
codegen_flags: <defaults>
</compile_context>

<pallas_src>
import functools

import jax
import jax.numpy as jnp
from jax.experimental import pallas as pl
from jax.experimental.pallas import tpu as pltpu

# ---------------- synthetic "config" (small shapes) ----------------
BATCH = 2
SEQ = 16
HIDDEN = 32
N_HEADS = 2
HEAD_DIM = HIDDEN // N_HEADS
INTERMEDIATE = 64
N_LAYERS = 2
VOCAB = 64
PROMPT_LEN = 3
PROMPT_NUM = 1
PROMPT_LENS = PROMPT_LEN * PROMPT_NUM          # self.prompt_lens
PROMPT_TOKEN_ID = 60                           # config.prompt_token_ids
MASK_TOKEN_ID = 4                              # config.mask_token_ids
PROMPT_INIT_TOKEN_ID = 5                       # stands in for BERT id 2003
LN_EPS = 1e-12

H_PAD = 128                    # lane-dense width (HIDDEN / INTERMEDIATE zero-padded)
QKV_W = 3 * N_HEADS * H_PAD    # fused per-head-blocked QKV output width (768)
R_HM = N_HEADS * SEQ           # head-major query rows per batch element (32)
KPAD = 128                     # padded key count per batch element (lane-dense bias)
VEC_ROWS = 16                  # rows of the consolidated small-vector array

# row indices inside the consolidated `vecs` array (rows 0..3*N_HEADS-1 are the
# per-head q/k/v biases, block j = comp*N_HEADS + h)
_B0 = 3 * N_HEADS
(ROW_BO, ROW_LN1G, ROW_LN1B, ROW_B1, ROW_B2,
 ROW_LN2G, ROW_LN2B, ROW_EMBG, ROW_EMBB) = range(_B0, _B0 + 9)
assert _B0 + 9 <= VEC_ROWS and R_HM <= KPAD


# ---------------- in-kernel helpers ----------------
def _row(v, r):
    # static (1,128) row extraction from a small (VEC_ROWS,128) tile
    return v[r:r + 1, :]


def _layernorm(h, g, b):
    # Pad lanes of h are exactly 0 and gamma/beta are zero-padded there, so summing
    # over all H_PAD lanes with a 1/HIDDEN divisor gives the exact mean / E[x^2],
    # and pad lanes come out as (0 - mu) * rsqrt * 0 + 0 = 0.
    inv_h = 1.0 / HIDDEN
    mu = jnp.sum(h, axis=-1, keepdims=True) * inv_h
    ms = jnp.sum(h * h, axis=-1, keepdims=True) * inv_h
    var = jnp.maximum(ms - mu * mu, 0.0)
    return (h - mu) * jax.lax.rsqrt(var + LN_EPS) * g + b


# ---------------- Pallas kernel: fused BERT encoder (all layers, one batch/step) ----------------
def _encoder_kernel(x_ref, bias_ref, wqkv_ref, wmats_ref, vecs_ref, out_ref):
    x = x_ref[...]                       # (SEQ, H_PAD) f32, lanes >= HIDDEN are zero
    bias = bias_ref[0]                   # (R_HM, KPAD) f32, block-diag + key-pad mask

    # embedding LayerNorm (gamma/beta stashed in rows 13/14 of layer-0 vecs)
    vec0 = vecs_ref[0]
    x = _layernorm(x, _row(vec0, ROW_EMBG), _row(vec0, ROW_EMBB))

    kv_zero = jnp.zeros((KPAD - R_HM, H_PAD), jnp.float32)

    for l in range(N_LAYERS):                        # static unrolled layer loop
        vec = vecs_ref[l]                            # (VEC_ROWS, 128) f32

        # Fused, head-blocked QKV projection: one (SEQ,128)x(128,768) MXU matmul.
        # Softmax scale is pre-folded into the Q columns/bias at pack time.
        qkv = jnp.dot(x.astype(jnp.bfloat16), wqkv_ref[l],
                      preferred_element_type=jnp.float32)          # (SEQ, QKV_W)

        # All slicing below is at 128-lane (whole-vreg) boundaries; assembly into the
        # head-major row space is sublane-aligned row concatenation (no lane shuffles).
        def blk(comp, h):
            j = comp * N_HEADS + h
            return qkv[:, j * H_PAD:(j + 1) * H_PAD] + _row(vec, j)

        q_hm = jnp.concatenate([blk(0, h) for h in range(N_HEADS)], axis=0)      # (R_HM,128)
        k_hm = jnp.concatenate([blk(1, h) for h in range(N_HEADS)] + [kv_zero],
                               axis=0)                                            # (KPAD,128)
        v_hm = jnp.concatenate([blk(2, h) for h in range(N_HEADS)] + [kv_zero],
                               axis=0)                                            # (KPAD,128)

        # Block-diagonal scores for all heads at once: NT contraction (no explicit .T),
        # cross-head blocks and padded/invalid keys are killed by the additive bias.
        s = jax.lax.dot_general(q_hm.astype(jnp.bfloat16), k_hm.astype(jnp.bfloat16),
                                (((1,), (1,)), ((), ())),
                                preferred_element_type=jnp.float32) + bias        # (R_HM,KPAD)
        m = jnp.max(s, axis=-1, keepdims=True)
        e = jnp.exp(s - m)
        p = e * pl.reciprocal(jnp.sum(e, axis=-1, keepdims=True),
                              approx=True)           # EUP, not VALU divide
        ctx = jnp.dot(p.astype(jnp.bfloat16), v_hm.astype(jnp.bfloat16),
                      preferred_element_type=jnp.float32)                         # (R_HM,128)

        # Output projection with the head concat folded in: sum_h ctx_h @ wo_h.
        # Row slices of ctx / wmats are at sublane/vreg-aligned offsets.
        attn = _row(vec, ROW_BO)
        for h in range(N_HEADS):
            attn = attn + jnp.dot(
                ctx[h * SEQ:(h + 1) * SEQ, :].astype(jnp.bfloat16),
                wmats_ref[l, h * H_PAD:(h + 1) * H_PAD, :],
                preferred_element_type=jnp.float32)                               # (SEQ,128)

        h1 = _layernorm(x + attn, _row(vec, ROW_LN1G), _row(vec, ROW_LN1B))

        # FFN with tanh-approx GELU (w1 / w2 are full (128,128) tiles)
        f = jnp.dot(h1.astype(jnp.bfloat16), wmats_ref[l, 2 * H_PAD:3 * H_PAD, :],
                    preferred_element_type=jnp.float32) + _row(vec, ROW_B1)
        f = 0.5 * f * (1.0 + jnp.tanh(0.7978845608028654 *
                                      (f + 0.044715 * f * f * f)))
        f = jnp.dot(f.astype(jnp.bfloat16), wmats_ref[l, 3 * H_PAD:4 * H_PAD, :],
                    preferred_element_type=jnp.float32) + _row(vec, ROW_B2)

        x = _layernorm(h1 + f, _row(vec, ROW_LN2G), _row(vec, ROW_LN2B))

    out_ref[...] = x.astype(out_ref.dtype)           # (SEQ,128) lane-dense store


# ---------------- wrapper ----------------
def _attention_bias(mask):
    """(B, R_HM, KPAD) additive bias: 0 where query (head h, pos q) may attend key
    (head h', pos k) with h'==h and mask[b,k]==1; -1e9 everywhere else (other-head
    blocks, masked keys, and the KPAD padding columns).  Lane width is 128."""
    B, S = mask.shape
    key_valid = jnp.tile(mask.astype(jnp.float32), (1, N_HEADS))        # (B, H*S)
    key_valid = jnp.pad(key_valid, ((0, 0), (0, KPAD - N_HEADS * S)))   # (B, KPAD)
    q_head = jnp.repeat(jnp.arange(N_HEADS), S)                         # (H*S,)
    k_head = jnp.pad(q_head, (0, KPAD - N_HEADS * S), constant_values=-1)
    same_head = (q_head[:, None] == k_head[None, :]).astype(jnp.float32)
    allowed = same_head[None, :, :] * key_valid[:, None, :]             # (B, R_HM, KPAD)
    return (1.0 - allowed) * -1e9


def encoder_forward(emb, mask, packed):
    """emb: (B, S, HIDDEN) pre-LayerNorm embeddings; mask: (B, S) {0,1}.
    Returns (B, S, HIDDEN) final hidden states."""
    B, S, H = emb.shape
    x = jnp.pad(emb.reshape(B * S, H).astype(jnp.float32),
                ((0, 0), (0, H_PAD - H)))
    bias = _attention_bias(mask)

    out = pl.pallas_call(
        _encoder_kernel,
        out_shape=jax.ShapeDtypeStruct((B * S, H_PAD), jnp.float32),
        grid=(B,),                                   # batch-parallel (2 TCs on v7x)
        in_specs=[
            pl.BlockSpec((SEQ, H_PAD), lambda b: (b, 0)),
            pl.BlockSpec((1, R_HM, KPAD), lambda b: (b, 0, 0)),
            # weights: constant block index -> fetched once, reused every step
            pl.BlockSpec((N_LAYERS, H_PAD, QKV_W), lambda b: (0, 0, 0)),
            pl.BlockSpec((N_LAYERS, 4 * H_PAD, H_PAD), lambda b: (0, 0, 0)),
            pl.BlockSpec((N_LAYERS, VEC_ROWS, H_PAD), lambda b: (0, 0, 0)),
        ],
        out_specs=pl.BlockSpec((SEQ, H_PAD), lambda b: (b, 0)),
        compiler_params=pltpu.CompilerParams(
            dimension_semantics=("parallel",),
            vmem_limit_bytes=32 * 1024 * 1024),
    )(x, bias, packed['wqkv'], packed['wmats'], packed['vecs'])
    return out.reshape(B, S, H_PAD)[:, :, :H]


# ---------------- parameter init (deterministic, synthetic) ----------------
def init_params(key):
    keys = jax.random.split(key, 2 + 6 * N_LAYERS)

    def dense(k, fi, fo):
        return 0.02 * jax.random.normal(k, (fi, fo), jnp.float32)

    params = {
        'word_emb': 0.02 * jax.random.normal(keys[0], (VOCAB, HIDDEN), jnp.float32),
        'pos_emb': 0.02 * jax.random.normal(keys[1], (SEQ, HIDDEN), jnp.float32),
        'emb_ln_g': jnp.ones((HIDDEN,), jnp.float32),
        'emb_ln_b': jnp.zeros((HIDDEN,), jnp.float32),
    }
    # _init_prompt with config.prompt_init == 1: every soft-prompt row equals the
    # word embedding of a fixed token id.
    params['prompt_emb'] = jnp.tile(
        params['word_emb'][PROMPT_INIT_TOKEN_ID][None, :], (PROMPT_LENS, 1))
    layers = []
    ki = 2
    for _ in range(N_LAYERS):
        lp = {
            'wq': dense(keys[ki + 0], HIDDEN, HIDDEN), 'bq': jnp.zeros((HIDDEN,), jnp.float32),
            'wk': dense(keys[ki + 1], HIDDEN, HIDDEN), 'bk': jnp.zeros((HIDDEN,), jnp.float32),
            'wv': dense(keys[ki + 2], HIDDEN, HIDDEN), 'bv': jnp.zeros((HIDDEN,), jnp.float32),
            'wo': dense(keys[ki + 3], HIDDEN, HIDDEN), 'bo': jnp.zeros((HIDDEN,), jnp.float32),
            'ln1_g': jnp.ones((HIDDEN,), jnp.float32), 'ln1_b': jnp.zeros((HIDDEN,), jnp.float32),
            'w1': dense(keys[ki + 4], HIDDEN, INTERMEDIATE), 'b1': jnp.zeros((INTERMEDIATE,), jnp.float32),
            'w2': dense(keys[ki + 5], INTERMEDIATE, HIDDEN), 'b2': jnp.zeros((HIDDEN,), jnp.float32),
            'ln2_g': jnp.ones((HIDDEN,), jnp.float32), 'ln2_b': jnp.zeros((HIDDEN,), jnp.float32),
        }
        layers.append(lp)
        ki += 6
    params['layers'] = layers
    return params


def pack_params(params):
    """Pack all encoder parameters into 3 lane-dense arrays (3 HBM->VMEM DMAs):
       wqkv  (L, 128, 768) bf16 : per-head [Wq0|Wq1|Wk0|Wk1|Wv0|Wv1] 128-lane blocks,
                                  softmax scale pre-folded into the Q blocks,
       wmats (L, 512, 128) bf16 : row blocks [wo_h0; wo_h1; w1; w2], each (128,128),
       vecs  (L, 16, 128)  f32  : rows 0..5 per-head q/k/v bias, 6..12 bo/ln1/b1/b2/ln2,
                                  13..14 embedding-LN gamma/beta (layer 0 only).
    ZERO-PAD INVARIANT (required by the in-kernel 1/HIDDEN LayerNorm trick and the
    whole lane-padding scheme): every pad lane / pad row above is EXACTLY zero.
    Never fold biases into extra activation rows/lanes."""
    scale = 1.0 / float(HEAD_DIM) ** 0.5
    wqkv = jnp.zeros((N_LAYERS, H_PAD, QKV_W), jnp.float32)
    wmats = jnp.zeros((N_LAYERS, 4 * H_PAD, H_PAD), jnp.float32)
    vecs = jnp.zeros((N_LAYERS, VEC_ROWS, H_PAD), jnp.float32)

    for l, lp in enumerate(params['layers']):
        for h in range(N_HEADS):
            cs = slice(h * HEAD_DIM, (h + 1) * HEAD_DIM)
            jq, jk, jv = 0 * N_HEADS + h, 1 * N_HEADS + h, 2 * N_HEADS + h
            wqkv = wqkv.at[l, :HIDDEN, jq * H_PAD:jq * H_PAD + HEAD_DIM].set(lp['wq'][:, cs] * scale)
            wqkv = wqkv.at[l, :HIDDEN, jk * H_PAD:jk * H_PAD + HEAD_DIM].set(lp['wk'][:, cs])
            wqkv = wqkv.at[l, :HIDDEN, jv * H_PAD:jv * H_PAD + HEAD_DIM].set(lp['wv'][:, cs])
            vecs = vecs.at[l, jq, :HEAD_DIM].set(lp['bq'][cs] * scale)
            vecs = vecs.at[l, jk, :HEAD_DIM].set(lp['bk'][cs])
            vecs = vecs.at[l, jv, :HEAD_DIM].set(lp['bv'][cs])
            wmats = wmats.at[l, h * H_PAD:h * H_PAD + HEAD_DIM, :HIDDEN].set(lp['wo'][cs, :])
        wmats = wmats.at[l, 2 * H_PAD:2 * H_PAD + HIDDEN, :INTERMEDIATE].set(lp['w1'])
        wmats = wmats.at[l, 3 * H_PAD:3 * H_PAD + INTERMEDIATE, :HIDDEN].set(lp['w2'])
        vecs = vecs.at[l, ROW_BO, :HIDDEN].set(lp['bo'])
        vecs = vecs.at[l, ROW_LN1G, :HIDDEN].set(lp['ln1_g'])
        vecs = vecs.at[l, ROW_LN1B, :HIDDEN].set(lp['ln1_b'])
        vecs = vecs.at[l, ROW_B1, :INTERMEDIATE].set(lp['b1'])
        vecs = vecs.at[l, ROW_B2, :HIDDEN].set(lp['b2'])
        vecs = vecs.at[l, ROW_LN2G, :HIDDEN].set(lp['ln2_g'])
        vecs = vecs.at[l, ROW_LN2B, :HIDDEN].set(lp['ln2_b'])
    vecs = vecs.at[0, ROW_EMBG, :HIDDEN].set(params['emb_ln_g'])
    vecs = vecs.at[0, ROW_EMBB, :HIDDEN].set(params['emb_ln_b'])

    # assert the zero-pad invariant for all LayerNorm gamma/beta rows (review note)
    ln_pad = jnp.stack([vecs[:, r, HIDDEN:] for r in
                        (ROW_LN1G, ROW_LN1B, ROW_LN2G, ROW_LN2B, ROW_EMBG, ROW_EMBB)])
    assert float(jnp.max(jnp.abs(ln_pad))) == 0.0, "pad lanes of LN gamma/beta must be zero"

    return {'wqkv': wqkv.astype(jnp.bfloat16),
            'wmats': wmats.astype(jnp.bfloat16),
            'vecs': vecs}


# ---------------- glue: embedding_input + forward ----------------
def embedding_input(ids, word_emb, prompt_emb):
    # vectorized version of the python double-loop: the p-th prompt token in a
    # row is replaced by prompt_embedding[p].
    inp = word_emb[ids]                                   # (B,S,H)
    is_prompt = ids == PROMPT_TOKEN_ID
    occ = jnp.cumsum(is_prompt.astype(jnp.int32), axis=1) - 1
    occ = jnp.clip(occ, 0, PROMPT_LENS - 1)
    repl = prompt_emb[occ]                                # (B,S,H)
    return jnp.where(is_prompt[..., None], repl, inp)


@functools.partial(jax.jit, static_argnames=('is_des',))
def encoding_model_forward(ids, mask, params, packed, is_des=False):
    # pattern == 'hybridprompt'
    emb = embedding_input(ids, params['word_emb'], params['prompt_emb'])
    emb = emb + params['pos_emb'][None, :, :]
    x = encoder_forward(emb, mask, packed)                # fused Pallas encoder
    # TODO(synk): output_attentions from the HF encoder are requested but never
    # used in the reference return path, so they are not materialized here.
    B = ids.shape[0]
    if is_des:
        # matches torch.mean(outputs_words, dim=1): averages padded positions too
        return jnp.mean(x, axis=1)                        # average_outputs_words
    # np.argwhere(ids == mask_id)[0][0], falling back to 0 when absent
    mask_pos = jnp.argmax((ids == MASK_TOKEN_ID).astype(jnp.int32), axis=1)
    return x[jnp.arange(B), mask_pos]                     # mask_hidden


# ---------------- main ----------------
if __name__ == "__main__":
    key = jax.random.PRNGKey(0)
    pkey, ikey = jax.random.split(key)
    params = init_params(pkey)
    packed = pack_params(params)

    ids = jax.random.randint(ikey, (BATCH, SEQ), 6, VOCAB - 4, dtype=jnp.int32)
    ids = ids.at[:, 0].set(0)                              # [CLS]-like token
    ids = ids.at[:, 1:1 + PROMPT_LENS].set(PROMPT_TOKEN_ID)  # soft-prompt slots
    ids = ids.at[:, 6].set(MASK_TOKEN_ID)                  # [MASK] position
    mask = jnp.ones((BATCH, SEQ), jnp.int32)
    mask = mask.at[1, SEQ - 2:].set(0)                     # padding in row 1

    out = encoding_model_forward(ids, mask, params, packed, is_des=False)
    out = jax.block_until_ready(out)
    assert out.shape == (BATCH, HIDDEN) and out.dtype == jnp.float32
    assert bool(jnp.all(jnp.isfinite(out)))

    out_des = jax.block_until_ready(
        encoding_model_forward(ids, mask, params, packed, is_des=True))
    assert out_des.shape == (BATCH, HIDDEN)
    assert bool(jnp.all(jnp.isfinite(out_des)))

    print("KERNEL_OK")
</pallas_src>

<mosaic_0001>
module attributes {stable_mosaic.version = 11 : i64} {
  func.func @_encoder_kernel(%arg0: i32, %arg1: memref<16x128xf32, #tpu.memory_space<vmem>>, %arg2: memref<1x32x128xf32, #tpu.memory_space<vmem>>, %arg3: memref<2x128x768xbf16, #tpu.memory_space<vmem>>, %arg4: memref<2x512x128xbf16, #tpu.memory_space<vmem>>, %arg5: memref<2x16x128xf32, #tpu.memory_space<vmem>>, %arg6: memref<16x128xf32, #tpu.memory_space<vmem>>) attributes {dimension_semantics = [#tpu.dimension_semantics<parallel>], iteration_bounds = array<i64: 2>, scalar_prefetch = 0 : i64, scratch_operands = 0 : i64, tpu.core_type = #tpu.core_type<tc>, window_params = [{transform_indices = @transform_0, window_bounds = array<i64: 16, 128>}, {transform_indices = @transform_1, window_bounds = array<i64: 1, 32, 128>}, {pipeline_mode = #tpu.pipeline_mode<synchronous>, transform_indices = @transform_2, window_bounds = array<i64: 2, 128, 768>}, {pipeline_mode = #tpu.pipeline_mode<synchronous>, transform_indices = @transform_3, window_bounds = array<i64: 2, 512, 128>}, {pipeline_mode = #tpu.pipeline_mode<synchronous>, transform_indices = @transform_4, window_bounds = array<i64: 2, 16, 128>}, {transform_indices = @transform_5, window_bounds = array<i64: 16, 128>}]} {
    %c0 = arith.constant 0 : index
    %c0_0 = arith.constant 0 : index
    %0 = vector.load %arg1[%c0, %c0_0] : memref<16x128xf32, #tpu.memory_space<vmem>>, vector<16x128xf32>
    %c0_1 = arith.constant 0 : index
    %c0_2 = arith.constant 0 : index
    %c0_3 = arith.constant 0 : index
    %1 = vector.load %arg2[%c0_1, %c0_2, %c0_3] : memref<1x32x128xf32, #tpu.memory_space<vmem>>, vector<1x32x128xf32>
    %2 = vector.shape_cast %1 : vector<1x32x128xf32> to vector<32x128xf32>
    %c0_4 = arith.constant 0 : index
    %c0_5 = arith.constant 0 : index
    %c0_6 = arith.constant 0 : index
    %3 = vector.load %arg5[%c0_4, %c0_5, %c0_6] : memref<2x16x128xf32, #tpu.memory_space<vmem>>, vector<1x16x128xf32>
    %4 = vector.shape_cast %3 : vector<1x16x128xf32> to vector<16x128xf32>
    %5 = vector.extract_strided_slice %4 {offsets = [13, 0], sizes = [1, 128], strides = [1, 1]} : vector<16x128xf32> to vector<1x128xf32>
    %6 = vector.extract_strided_slice %4 {offsets = [14, 0], sizes = [1, 128], strides = [1, 1]} : vector<16x128xf32> to vector<1x128xf32>
    %cst = arith.constant dense<0.000000e+00> : vector<16xf32>
    %7 = vector.multi_reduction <add>, %0, %cst [1] : vector<16x128xf32> to vector<16xf32>
    %8 = vector.shape_cast %7 : vector<16xf32> to vector<16x1xf32>
    %cst_7 = arith.constant 3.125000e-02 : f32
    %9 = vector.broadcast %cst_7 : f32 to vector<16x1xf32>
    %10 = arith.mulf %8, %9 : vector<16x1xf32>
    %11 = arith.mulf %0, %0 : vector<16x128xf32>
    %cst_8 = arith.constant dense<0.000000e+00> : vector<16xf32>
    %12 = vector.multi_reduction <add>, %11, %cst_8 [1] : vector<16x128xf32> to vector<16xf32>
    %13 = vector.shape_cast %12 : vector<16xf32> to vector<16x1xf32>
    %cst_9 = arith.constant 3.125000e-02 : f32
    %14 = vector.broadcast %cst_9 : f32 to vector<16x1xf32>
    %15 = arith.mulf %13, %14 : vector<16x1xf32>
    %16 = arith.mulf %10, %10 : vector<16x1xf32>
    %17 = arith.subf %15, %16 : vector<16x1xf32>
    %cst_10 = arith.constant 0.000000e+00 : f32
    %18 = vector.broadcast %cst_10 : f32 to vector<16x1xf32>
    %19 = arith.maximumf %17, %18 : vector<16x1xf32>
    %20 = vector.broadcast %10 : vector<16x1xf32> to vector<16x128xf32>
    %21 = arith.subf %0, %20 : vector<16x128xf32>
    %cst_11 = arith.constant 9.99999996E-13 : f32
    %22 = vector.broadcast %cst_11 : f32 to vector<16x1xf32>
    %23 = arith.addf %19, %22 : vector<16x1xf32>
    %24 = math.rsqrt %23 : vector<16x1xf32>
    %25 = vector.broadcast %24 : vector<16x1xf32> to vector<16x128xf32>
    %26 = arith.mulf %21, %25 : vector<16x128xf32>
    %27 = vector.broadcast %5 : vector<1x128xf32> to vector<16x128xf32>
    %28 = arith.mulf %26, %27 : vector<16x128xf32>
    %29 = vector.broadcast %6 : vector<1x128xf32> to vector<16x128xf32>
    %30 = arith.addf %28, %29 : vector<16x128xf32>
    %cst_12 = arith.constant 0.000000e+00 : f32
    %31 = vector.broadcast %cst_12 : f32 to vector<96x128xf32>
    %c0_13 = arith.constant 0 : index
    %c0_14 = arith.constant 0 : index
    %c0_15 = arith.constant 0 : index
    %32 = vector.load %arg5[%c0_13, %c0_14, %c0_15] : memref<2x16x128xf32, #tpu.memory_space<vmem>>, vector<1x16x128xf32>
    %33 = vector.shape_cast %32 : vector<1x16x128xf32> to vector<16x128xf32>
    %34 = arith.truncf %30 : vector<16x128xf32> to vector<16x128xbf16>
    %c0_16 = arith.constant 0 : index
    %c0_17 = arith.constant 0 : index
    %c0_18 = arith.constant 0 : index
    %35 = vector.load %arg3[%c0_16, %c0_17, %c0_18] : memref<2x128x768xbf16, #tpu.memory_space<vmem>>, vector<1x128x768xbf16>
    %36 = vector.shape_cast %35 : vector<1x128x768xbf16> to vector<128x768xbf16>
    %cst_19 = arith.constant dense<0.000000e+00> : vector<16x768xf32>
    %37 = tpu.matmul %34, %36, %cst_19 {dimension_numbers = #tpu.dot_dimension_numbers<[1], [0], [0], [1], [0, 0, 1, 1], [], []>} : vector<16x128xbf16>, vector<128x768xbf16>, vector<16x768xf32> -> vector<16x768xf32>
    %38 = vector.extract_strided_slice %37 {offsets = [0, 0], sizes = [16, 128], strides = [1, 1]} : vector<16x768xf32> to vector<16x128xf32>
    %39 = vector.extract_strided_slice %33 {offsets = [0, 0], sizes = [1, 128], strides = [1, 1]} : vector<16x128xf32> to vector<1x128xf32>
    %40 = vector.broadcast %39 : vector<1x128xf32> to vector<16x128xf32>
    %41 = arith.addf %38, %40 : vector<16x128xf32>
    %42 = vector.extract_strided_slice %37 {offsets = [0, 128], sizes = [16, 128], strides = [1, 1]} : vector<16x768xf32> to vector<16x128xf32>
    %43 = vector.extract_strided_slice %33 {offsets = [1, 0], sizes = [1, 128], strides = [1, 1]} : vector<16x128xf32> to vector<1x128xf32>
    %44 = vector.broadcast %43 : vector<1x128xf32> to vector<16x128xf32>
    %45 = arith.addf %42, %44 : vector<16x128xf32>
    %46 = tpu.concatenate %41, %45 in 0 : vector<16x128xf32>, vector<16x128xf32> -> vector<32x128xf32>
    %47 = vector.extract_strided_slice %37 {offsets = [0, 256], sizes = [16, 128], strides = [1, 1]} : vector<16x768xf32> to vector<16x128xf32>
    %48 = vector.extract_strided_slice %33 {offsets = [2, 0], sizes = [1, 128], strides = [1, 1]} : vector<16x128xf32> to vector<1x128xf32>
    %49 = vector.broadcast %48 : vector<1x128xf32> to vector<16x128xf32>
    %50 = arith.addf %47, %49 : vector<16x128xf32>
    %51 = vector.extract_strided_slice %37 {offsets = [0, 384], sizes = [16, 128], strides = [1, 1]} : vector<16x768xf32> to vector<16x128xf32>
    %52 = vector.extract_strided_slice %33 {offsets = [3, 0], sizes = [1, 128], strides = [1, 1]} : vector<16x128xf32> to vector<1x128xf32>
    %53 = vector.broadcast %52 : vector<1x128xf32> to vector<16x128xf32>
    %54 = arith.addf %51, %53 : vector<16x128xf32>
    %55 = tpu.concatenate %50, %54, %31 in 0 : vector<16x128xf32>, vector<16x128xf32>, vector<96x128xf32> -> vector<128x128xf32>
    %56 = vector.extract_strided_slice %37 {offsets = [0, 512], sizes = [16, 128], strides = [1, 1]} : vector<16x768xf32> to vector<16x128xf32>
    %57 = vector.extract_strided_slice %33 {offsets = [4, 0], sizes = [1, 128], strides = [1, 1]} : vector<16x128xf32> to vector<1x128xf32>
    %58 = vector.broadcast %57 : vector<1x128xf32> to vector<16x128xf32>
    %59 = arith.addf %56, %58 : vector<16x128xf32>
    %60 = vector.extract_strided_slice %37 {offsets = [0, 640], sizes = [16, 128], strides = [1, 1]} : vector<16x768xf32> to vector<16x128xf32>
    %61 = vector.extract_strided_slice %33 {offsets = [5, 0], sizes = [1, 128], strides = [1, 1]} : vector<16x128xf32> to vector<1x128xf32>
    %62 = vector.broadcast %61 : vector<1x128xf32> to vector<16x128xf32>
    %63 = arith.addf %60, %62 : vector<16x128xf32>
    %64 = tpu.concatenate %59, %63, %31 in 0 : vector<16x128xf32>, vector<16x128xf32>, vector<96x128xf32> -> vector<128x128xf32>
    %65 = arith.truncf %46 : vector<32x128xf32> to vector<32x128xbf16>
    %66 = arith.truncf %55 : vector<128x128xf32> to vector<128x128xbf16>
    %cst_20 = arith.constant dense<0.000000e+00> : vector<32x128xf32>
    %67 = tpu.matmul %65, %66, %cst_20 {dimension_numbers = #tpu.dot_dimension_numbers<[1], [1], [0], [0], [0, 0, 1, 0], [], []>} : vector<32x128xbf16>, vector<128x128xbf16>, vector<32x128xf32> -> vector<32x128xf32>
    %68 = arith.addf %67, %2 : vector<32x128xf32>
    %cst_21 = arith.constant dense<0xFF800000> : vector<32xf32>
    %69 = vector.multi_reduction <maximumf>, %68, %cst_21 [1] : vector<32x128xf32> to vector<32xf32>
    %70 = vector.shape_cast %69 : vector<32xf32> to vector<32x1xf32>
    %71 = vector.broadcast %70 : vector<32x1xf32> to vector<32x128xf32>
    %72 = arith.subf %68, %71 : vector<32x128xf32>
    %73 = math.exp %72 : vector<32x128xf32>
    %cst_22 = arith.constant dense<0.000000e+00> : vector<32xf32>
    %74 = vector.multi_reduction <add>, %73, %cst_22 [1] : vector<32x128xf32> to vector<32xf32>
    %75 = vector.shape_cast %74 : vector<32xf32> to vector<32x1xf32>
    %76 = tpu.reciprocal %75 {approx = true} : vector<32x1xf32> -> vector<32x1xf32>
    %77 = vector.broadcast %76 : vector<32x1xf32> to vector<32x128xf32>
    %78 = arith.mulf %73, %77 : vector<32x128xf32>
    %79 = arith.truncf %78 : vector<32x128xf32> to vector<32x128xbf16>
    %80 = arith.truncf %64 : vector<128x128xf32> to vector<128x128xbf16>
    %cst_23 = arith.constant dense<0.000000e+00> : vector<32x128xf32>
    %81 = tpu.matmul %79, %80, %cst_23 {dimension_numbers = #tpu.dot_dimension_numbers<[1], [0], [0], [1], [0, 0, 1, 1], [], []>} : vector<32x128xbf16>, vector<128x128xbf16>, vector<32x128xf32> -> vector<32x128xf32>
    %82 = vector.extract_strided_slice %33 {offsets = [6, 0], sizes = [1, 128], strides = [1, 1]} : vector<16x128xf32> to vector<1x128xf32>
    %83 = vector.extract_strided_slice %81 {offsets = [0, 0], sizes = [16, 128], strides = [1, 1]} : vector<32x128xf32> to vector<16x128xf32>
    %84 = arith.truncf %83 : vector<16x128xf32> to vector<16x128xbf16>
    %c0_24 = arith.constant 0 : index
    %c0_25 = arith.constant 0 : index
    %c0_26 = arith.constant 0 : index
    %85 = vector.load %arg4[%c0_24, %c0_25, %c0_26] : memref<2x512x128xbf16, #tpu.memory_space<vmem>>, vector<1x128x128xbf16>
    %86 = vector.shape_cast %85 : vector<1x128x128xbf16> to vector<128x128xbf16>
    %cst_27 = arith.constant dense<0.000000e+00> : vector<16x128xf32>
    %87 = tpu.matmul %84, %86, %cst_27 {dimension_numbers = #tpu.dot_dimension_numbers<[1], [0], [0], [1], [0, 0, 1, 1], [], []>} : vector<16x128xbf16>, vector<128x128xbf16>, vector<16x128xf32> -> vector<16x128xf32>
    %88 = vector.broadcast %82 : vector<1x128xf32> to vector<16x128xf32>
    %89 = arith.addf %88, %87 : vector<16x128xf32>
    %90 = vector.extract_strided_slice %81 {offsets = [16, 0], sizes = [16, 128], strides = [1, 1]} : vector<32x128xf32> to vector<16x128xf32>
    %91 = arith.truncf %90 : vector<16x128xf32> to vector<16x128xbf16>
    %c0_28 = arith.constant 0 : index
    %c128 = arith.constant 128 : index
    %c0_29 = arith.constant 0 : index
    %92 = vector.load %arg4[%c0_28, %c128, %c0_29] : memref<2x512x128xbf16, #tpu.memory_space<vmem>>, vector<1x128x128xbf16>
    %93 = vector.shape_cast %92 : vector<1x128x128xbf16> to vector<128x128xbf16>
    %cst_30 = arith.constant dense<0.000000e+00> : vector<16x128xf32>
    %94 = tpu.matmul %91, %93, %cst_30 {dimension_numbers = #tpu.dot_dimension_numbers<[1], [0], [0], [1], [0, 0, 1, 1], [], []>} : vector<16x128xbf16>, vector<128x128xbf16>, vector<16x128xf32> -> vector<16x128xf32>
    %95 = arith.addf %89, %94 : vector<16x128xf32>
    %96 = arith.addf %30, %95 : vector<16x128xf32>
    %97 = vector.extract_strided_slice %33 {offsets = [7, 0], sizes = [1, 128], strides = [1, 1]} : vector<16x128xf32> to vector<1x128xf32>
    %98 = vector.extract_strided_slice %33 {offsets = [8, 0], sizes = [1, 128], strides = [1, 1]} : vector<16x128xf32> to vector<1x128xf32>
    %cst_31 = arith.constant dense<0.000000e+00> : vector<16xf32>
    %99 = vector.multi_reduction <add>, %96, %cst_31 [1] : vector<16x128xf32> to vector<16xf32>
    %100 = vector.shape_cast %99 : vector<16xf32> to vector<16x1xf32>
    %cst_32 = arith.constant 3.125000e-02 : f32
    %101 = vector.broadcast %cst_32 : f32 to vector<16x1xf32>
    %102 = arith.mulf %100, %101 : vector<16x1xf32>
    %103 = arith.mulf %96, %96 : vector<16x128xf32>
    %cst_33 = arith.constant dense<0.000000e+00> : vector<16xf32>
    %104 = vector.multi_reduction <add>, %103, %cst_33 [1] : vector<16x128xf32> to vector<16xf32>
    %105 = vector.shape_cast %104 : vector<16xf32> to vector<16x1xf32>
    %cst_34 = arith.constant 3.125000e-02 : f32
    %106 = vector.broadcast %cst_34 : f32 to vector<16x1xf32>
    %107 = arith.mulf %105, %106 : vector<16x1xf32>
    %108 = arith.mulf %102, %102 : vector<16x1xf32>
    %109 = arith.subf %107, %108 : vector<16x1xf32>
    %cst_35 = arith.constant 0.000000e+00 : f32
    %110 = vector.broadcast %cst_35 : f32 to vector<16x1xf32>
    %111 = arith.maximumf %109, %110 : vector<16x1xf32>
    %112 = vector.broadcast %102 : vector<16x1xf32> to vector<16x128xf32>
    %113 = arith.subf %96, %112 : vector<16x128xf32>
    %cst_36 = arith.constant 9.99999996E-13 : f32
    %114 = vector.broadcast %cst_36 : f32 to vector<16x1xf32>
    %115 = arith.addf %111, %114 : vector<16x1xf32>
    %116 = math.rsqrt %115 : vector<16x1xf32>
    %117 = vector.broadcast %116 : vector<16x1xf32> to vector<16x128xf32>
    %118 = arith.mulf %113, %117 : vector<16x128xf32>
    %119 = vector.broadcast %97 : vector<1x128xf32> to vector<16x128xf32>
    %120 = arith.mulf %118, %119 : vector<16x128xf32>
    %121 = vector.broadcast %98 : vector<1x128xf32> to vector<16x128xf32>
    %122 = arith.addf %120, %121 : vector<16x128xf32>
    %123 = arith.truncf %122 : vector<16x128xf32> to vector<16x128xbf16>
    %c0_37 = arith.constant 0 : index
    %c256 = arith.constant 256 : index
    %c0_38 = arith.constant 0 : index
    %124 = vector.load %arg4[%c0_37, %c256, %c0_38] : memref<2x512x128xbf16, #tpu.memory_space<vmem>>, vector<1x128x128xbf16>
    %125 = vector.shape_cast %124 : vector<1x128x128xbf16> to vector<128x128xbf16>
    %cst_39 = arith.constant dense<0.000000e+00> : vector<16x128xf32>
    %126 = tpu.matmul %123, %125, %cst_39 {dimension_numbers = #tpu.dot_dimension_numbers<[1], [0], [0], [1], [0, 0, 1, 1], [], []>} : vector<16x128xbf16>, vector<128x128xbf16>, vector<16x128xf32> -> vector<16x128xf32>
    %127 = vector.extract_strided_slice %33 {offsets = [9, 0], sizes = [1, 128], strides = [1, 1]} : vector<16x128xf32> to vector<1x128xf32>
    %128 = vector.broadcast %127 : vector<1x128xf32> to vector<16x128xf32>
    %129 = arith.addf %126, %128 : vector<16x128xf32>
    %cst_40 = arith.constant 5.000000e-01 : f32
    %130 = vector.broadcast %cst_40 : f32 to vector<16x128xf32>
    %131 = arith.mulf %130, %129 : vector<16x128xf32>
    %cst_41 = arith.constant 4.471500e-02 : f32
    %132 = vector.broadcast %cst_41 : f32 to vector<16x128xf32>
    %133 = arith.mulf %132, %129 : vector<16x128xf32>
    %134 = arith.mulf %133, %129 : vector<16x128xf32>
    %135 = arith.mulf %134, %129 : vector<16x128xf32>
    %136 = arith.addf %129, %135 : vector<16x128xf32>
    %cst_42 = arith.constant 0.797884583 : f32
    %137 = vector.broadcast %cst_42 : f32 to vector<16x128xf32>
    %138 = arith.mulf %137, %136 : vector<16x128xf32>
    %139 = math.tanh %138 : vector<16x128xf32>
    %cst_43 = arith.constant 1.000000e+00 : f32
    %140 = vector.broadcast %cst_43 : f32 to vector<16x128xf32>
    %141 = arith.addf %140, %139 : vector<16x128xf32>
    %142 = arith.mulf %131, %141 : vector<16x128xf32>
    %143 = arith.truncf %142 : vector<16x128xf32> to vector<16x128xbf16>
    %c0_44 = arith.constant 0 : index
    %c384 = arith.constant 384 : index
    %c0_45 = arith.constant 0 : index
    %144 = vector.load %arg4[%c0_44, %c384, %c0_45] : memref<2x512x128xbf16, #tpu.memory_space<vmem>>, vector<1x128x128xbf16>
    %145 = vector.shape_cast %144 : vector<1x128x128xbf16> to vector<128x128xbf16>
    %cst_46 = arith.constant dense<0.000000e+00> : vector<16x128xf32>
    %146 = tpu.matmul %143, %145, %cst_46 {dimension_numbers = #tpu.dot_dimension_numbers<[1], [0], [0], [1], [0, 0, 1, 1], [], []>} : vector<16x128xbf16>, vector<128x128xbf16>, vector<16x128xf32> -> vector<16x128xf32>
    %147 = vector.extract_strided_slice %33 {offsets = [10, 0], sizes = [1, 128], strides = [1, 1]} : vector<16x128xf32> to vector<1x128xf32>
    %148 = vector.broadcast %147 : vector<1x128xf32> to vector<16x128xf32>
    %149 = arith.addf %146, %148 : vector<16x128xf32>
    %150 = arith.addf %122, %149 : vector<16x128xf32>
    %151 = vector.extract_strided_slice %33 {offsets = [11, 0], sizes = [1, 128], strides = [1, 1]} : vector<16x128xf32> to vector<1x128xf32>
    %152 = vector.extract_strided_slice %33 {offsets = [12, 0], sizes = [1, 128], strides = [1, 1]} : vector<16x128xf32> to vector<1x128xf32>
    %cst_47 = arith.constant dense<0.000000e+00> : vector<16xf32>
    %153 = vector.multi_reduction <add>, %150, %cst_47 [1] : vector<16x128xf32> to vector<16xf32>
    %154 = vector.shape_cast %153 : vector<16xf32> to vector<16x1xf32>
    %cst_48 = arith.constant 3.125000e-02 : f32
    %155 = vector.broadcast %cst_48 : f32 to vector<16x1xf32>
    %156 = arith.mulf %154, %155 : vector<16x1xf32>
    %157 = arith.mulf %150, %150 : vector<16x128xf32>
    %cst_49 = arith.constant dense<0.000000e+00> : vector<16xf32>
    %158 = vector.multi_reduction <add>, %157, %cst_49 [1] : vector<16x128xf32> to vector<16xf32>
    %159 = vector.shape_cast %158 : vector<16xf32> to vector<16x1xf32>
    %cst_50 = arith.constant 3.125000e-02 : f32
    %160 = vector.broadcast %cst_50 : f32 to vector<16x1xf32>
    %161 = arith.mulf %159, %160 : vector<16x1xf32>
    %162 = arith.mulf %156, %156 : vector<16x1xf32>
    %163 = arith.subf %161, %162 : vector<16x1xf32>
    %cst_51 = arith.constant 0.000000e+00 : f32
    %164 = vector.broadcast %cst_51 : f32 to vector<16x1xf32>
    %165 = arith.maximumf %163, %164 : vector<16x1xf32>
    %166 = vector.broadcast %156 : vector<16x1xf32> to vector<16x128xf32>
    %167 = arith.subf %150, %166 : vector<16x128xf32>
    %cst_52 = arith.constant 9.99999996E-13 : f32
    %168 = vector.broadcast %cst_52 : f32 to vector<16x1xf32>
    %169 = arith.addf %165, %168 : vector<16x1xf32>
    %170 = math.rsqrt %169 : vector<16x1xf32>
    %171 = vector.broadcast %170 : vector<16x1xf32> to vector<16x128xf32>
    %172 = arith.mulf %167, %171 : vector<16x128xf32>
    %173 = vector.broadcast %151 : vector<1x128xf32> to vector<16x128xf32>
    %174 = arith.mulf %172, %173 : vector<16x128xf32>
    %175 = vector.broadcast %152 : vector<1x128xf32> to vector<16x128xf32>
    %176 = arith.addf %174, %175 : vector<16x128xf32>
    %c1 = arith.constant 1 : index
    %c0_53 = arith.constant 0 : index
    %c0_54 = arith.constant 0 : index
    %177 = vector.load %arg5[%c1, %c0_53, %c0_54] : memref<2x16x128xf32, #tpu.memory_space<vmem>>, vector<1x16x128xf32>
    %178 = vector.shape_cast %177 : vector<1x16x128xf32> to vector<16x128xf32>
    %179 = arith.truncf %176 : vector<16x128xf32> to vector<16x128xbf16>
    %c1_55 = arith.constant 1 : index
    %c0_56 = arith.constant 0 : index
    %c0_57 = arith.constant 0 : index
    %180 = vector.load %arg3[%c1_55, %c0_56, %c0_57] : memref<2x128x768xbf16, #tpu.memory_space<vmem>>, vector<1x128x768xbf16>
    %181 = vector.shape_cast %180 : vector<1x128x768xbf16> to vector<128x768xbf16>
    %cst_58 = arith.constant dense<0.000000e+00> : vector<16x768xf32>
    %182 = tpu.matmul %179, %181, %cst_58 {dimension_numbers = #tpu.dot_dimension_numbers<[1], [0], [0], [1], [0, 0, 1, 1], [], []>} : vector<16x128xbf16>, vector<128x768xbf16>, vector<16x768xf32> -> vector<16x768xf32>
    %183 = vector.extract_strided_slice %182 {offsets = [0, 0], sizes = [16, 128], strides = [1, 1]} : vector<16x768xf32> to vector<16x128xf32>
    %184 = vector.extract_strided_slice %178 {offsets = [0, 0], sizes = [1, 128], strides = [1, 1]} : vector<16x128xf32> to vector<1x128xf32>
    %185 = vector.broadcast %184 : vector<1x128xf32> to vector<16x128xf32>
    %186 = arith.addf %183, %185 : vector<16x128xf32>
    %187 = vector.extract_strided_slice %182 {offsets = [0, 128], sizes = [16, 128], strides = [1, 1]} : vector<16x768xf32> to vector<16x128xf32>
    %188 = vector.extract_strided_slice %178 {offsets = [1, 0], sizes = [1, 128], strides = [1, 1]} : vector<16x128xf32> to vector<1x128xf32>
    %189 = vector.broadcast %188 : vector<1x128xf32> to vector<16x128xf32>
    %190 = arith.addf %187, %189 : vector<16x128xf32>
    %191 = tpu.concatenate %186, %190 in 0 : vector<16x128xf32>, vector<16x128xf32> -> vector<32x128xf32>
    %192 = vector.extract_strided_slice %182 {offsets = [0, 256], sizes = [16, 128], strides = [1, 1]} : vector<16x768xf32> to vector<16x128xf32>
    %193 = vector.extract_strided_slice %178 {offsets = [2, 0], sizes = [1, 128], strides = [1, 1]} : vector<16x128xf32> to vector<1x128xf32>
    %194 = vector.broadcast %193 : vector<1x128xf32> to vector<16x128xf32>
    %195 = arith.addf %192, %194 : vector<16x128xf32>
    %196 = vector.extract_strided_slice %182 {offsets = [0, 384], sizes = [16, 128], strides = [1, 1]} : vector<16x768xf32> to vector<16x128xf32>
    %197 = vector.extract_strided_slice %178 {offsets = [3, 0], sizes = [1, 128], strides = [1, 1]} : vector<16x128xf32> to vector<1x128xf32>
    %198 = vector.broadcast %197 : vector<1x128xf32> to vector<16x128xf32>
    %199 = arith.addf %196, %198 : vector<16x128xf32>
    %200 = tpu.concatenate %195, %199, %31 in 0 : vector<16x128xf32>, vector<16x128xf32>, vector<96x128xf32> -> vector<128x128xf32>
    %201 = vector.extract_strided_slice %182 {offsets = [0, 512], sizes = [16, 128], strides = [1, 1]} : vector<16x768xf32> to vector<16x128xf32>
    %202 = vector.extract_strided_slice %178 {offsets = [4, 0], sizes = [1, 128], strides = [1, 1]} : vector<16x128xf32> to vector<1x128xf32>
    %203 = vector.broadcast %202 : vector<1x128xf32> to vector<16x128xf32>
    %204 = arith.addf %201, %203 : vector<16x128xf32>
    %205 = vector.extract_strided_slice %182 {offsets = [0, 640], sizes = [16, 128], strides = [1, 1]} : vector<16x768xf32> to vector<16x128xf32>
    %206 = vector.extract_strided_slice %178 {offsets = [5, 0], sizes = [1, 128], strides = [1, 1]} : vector<16x128xf32> to vector<1x128xf32>
    %207 = vector.broadcast %206 : vector<1x128xf32> to vector<16x128xf32>
    %208 = arith.addf %205, %207 : vector<16x128xf32>
    %209 = tpu.concatenate %204, %208, %31 in 0 : vector<16x128xf32>, vector<16x128xf32>, vector<96x128xf32> -> vector<128x128xf32>
    %210 = arith.truncf %191 : vector<32x128xf32> to vector<32x128xbf16>
    %211 = arith.truncf %200 : vector<128x128xf32> to vector<128x128xbf16>
    %cst_59 = arith.constant dense<0.000000e+00> : vector<32x128xf32>
    %212 = tpu.matmul %210, %211, %cst_59 {dimension_numbers = #tpu.dot_dimension_numbers<[1], [1], [0], [0], [0, 0, 1, 0], [], []>} : vector<32x128xbf16>, vector<128x128xbf16>, vector<32x128xf32> -> vector<32x128xf32>
    %213 = arith.addf %212, %2 : vector<32x128xf32>
    %cst_60 = arith.constant dense<0xFF800000> : vector<32xf32>
    %214 = vector.multi_reduction <maximumf>, %213, %cst_60 [1] : vector<32x128xf32> to vector<32xf32>
    %215 = vector.shape_cast %214 : vector<32xf32> to vector<32x1xf32>
    %216 = vector.broadcast %215 : vector<32x1xf32> to vector<32x128xf32>
    %217 = arith.subf %213, %216 : vector<32x128xf32>
    %218 = math.exp %217 : vector<32x128xf32>
    %cst_61 = arith.constant dense<0.000000e+00> : vector<32xf32>
    %219 = vector.multi_reduction <add>, %218, %cst_61 [1] : vector<32x128xf32> to vector<32xf32>
    %220 = vector.shape_cast %219 : vector<32xf32> to vector<32x1xf32>
    %221 = tpu.reciprocal %220 {approx = true} : vector<32x1xf32> -> vector<32x1xf32>
    %222 = vector.broadcast %221 : vector<32x1xf32> to vector<32x128xf32>
    %223 = arith.mulf %218, %222 : vector<32x128xf32>
    %224 = arith.truncf %223 : vector<32x128xf32> to vector<32x128xbf16>
    %225 = arith.truncf %209 : vector<128x128xf32> to vector<128x128xbf16>
    %cst_62 = arith.constant dense<0.000000e+00> : vector<32x128xf32>
    %226 = tpu.matmul %224, %225, %cst_62 {dimension_numbers = #tpu.dot_dimension_numbers<[1], [0], [0], [1], [0, 0, 1, 1], [], []>} : vector<32x128xbf16>, vector<128x128xbf16>, vector<32x128xf32> -> vector<32x128xf32>
    %227 = vector.extract_strided_slice %178 {offsets = [6, 0], sizes = [1, 128], strides = [1, 1]} : vector<16x128xf32> to vector<1x128xf32>
    %228 = vector.extract_strided_slice %226 {offsets = [0, 0], sizes = [16, 128], strides = [1, 1]} : vector<32x128xf32> to vector<16x128xf32>
    %229 = arith.truncf %228 : vector<16x128xf32> to vector<16x128xbf16>
    %c1_63 = arith.constant 1 : index
    %c0_64 = arith.constant 0 : index
    %c0_65 = arith.constant 0 : index
    %230 = vector.load %arg4[%c1_63, %c0_64, %c0_65] : memref<2x512x128xbf16, #tpu.memory_space<vmem>>, vector<1x128x128xbf16>
    %231 = vector.shape_cast %230 : vector<1x128x128xbf16> to vector<128x128xbf16>
    %cst_66 = arith.constant dense<0.000000e+00> : vector<16x128xf32>
    %232 = tpu.matmul %229, %231, %cst_66 {dimension_numbers = #tpu.dot_dimension_numbers<[1], [0], [0], [1], [0, 0, 1, 1], [], []>} : vector<16x128xbf16>, vector<128x128xbf16>, vector<16x128xf32> -> vector<16x128xf32>
    %233 = vector.broadcast %227 : vector<1x128xf32> to vector<16x128xf32>
    %234 = arith.addf %233, %232 : vector<16x128xf32>
    %235 = vector.extract_strided_slice %226 {offsets = [16, 0], sizes = [16, 128], strides = [1, 1]} : vector<32x128xf32> to vector<16x128xf32>
    %236 = arith.truncf %235 : vector<16x128xf32> to vector<16x128xbf16>
    %c1_67 = arith.constant 1 : index
    %c128_68 = arith.constant 128 : index
    %c0_69 = arith.constant 0 : index
    %237 = vector.load %arg4[%c1_67, %c128_68, %c0_69] : memref<2x512x128xbf16, #tpu.memory_space<vmem>>, vector<1x128x128xbf16>
    %238 = vector.shape_cast %237 : vector<1x128x128xbf16> to vector<128x128xbf16>
    %cst_70 = arith.constant dense<0.000000e+00> : vector<16x128xf32>
    %239 = tpu.matmul %236, %238, %cst_70 {dimension_numbers = #tpu.dot_dimension_numbers<[1], [0], [0], [1], [0, 0, 1, 1], [], []>} : vector<16x128xbf16>, vector<128x128xbf16>, vector<16x128xf32> -> vector<16x128xf32>
    %240 = arith.addf %234, %239 : vector<16x128xf32>
    %241 = arith.addf %176, %240 : vector<16x128xf32>
    %242 = vector.extract_strided_slice %178 {offsets = [7, 0], sizes = [1, 128], strides = [1, 1]} : vector<16x128xf32> to vector<1x128xf32>
    %243 = vector.extract_strided_slice %178 {offsets = [8, 0], sizes = [1, 128], strides = [1, 1]} : vector<16x128xf32> to vector<1x128xf32>
    %cst_71 = arith.constant dense<0.000000e+00> : vector<16xf32>
    %244 = vector.multi_reduction <add>, %241, %cst_71 [1] : vector<16x128xf32> to vector<16xf32>
    %245 = vector.shape_cast %244 : vector<16xf32> to vector<16x1xf32>
    %cst_72 = arith.constant 3.125000e-02 : f32
    %246 = vector.broadcast %cst_72 : f32 to vector<16x1xf32>
    %247 = arith.mulf %245, %246 : vector<16x1xf32>
    %248 = arith.mulf %241, %241 : vector<16x128xf32>
    %cst_73 = arith.constant dense<0.000000e+00> : vector<16xf32>
    %249 = vector.multi_reduction <add>, %248, %cst_73 [1] : vector<16x128xf32> to vector<16xf32>
    %250 = vector.shape_cast %249 : vector<16xf32> to vector<16x1xf32>
    %cst_74 = arith.constant 3.125000e-02 : f32
    %251 = vector.broadcast %cst_74 : f32 to vector<16x1xf32>
    %252 = arith.mulf %250, %251 : vector<16x1xf32>
    %253 = arith.mulf %247, %247 : vector<16x1xf32>
    %254 = arith.subf %252, %253 : vector<16x1xf32>
    %cst_75 = arith.constant 0.000000e+00 : f32
    %255 = vector.broadcast %cst_75 : f32 to vector<16x1xf32>
    %256 = arith.maximumf %254, %255 : vector<16x1xf32>
    %257 = vector.broadcast %247 : vector<16x1xf32> to vector<16x128xf32>
    %258 = arith.subf %241, %257 : vector<16x128xf32>
    %cst_76 = arith.constant 9.99999996E-13 : f32
    %259 = vector.broadcast %cst_76 : f32 to vector<16x1xf32>
    %260 = arith.addf %256, %259 : vector<16x1xf32>
    %261 = math.rsqrt %260 : vector<16x1xf32>
    %262 = vector.broadcast %261 : vector<16x1xf32> to vector<16x128xf32>
    %263 = arith.mulf %258, %262 : vector<16x128xf32>
    %264 = vector.broadcast %242 : vector<1x128xf32> to vector<16x128xf32>
    %265 = arith.mulf %263, %264 : vector<16x128xf32>
    %266 = vector.broadcast %243 : vector<1x128xf32> to vector<16x128xf32>
    %267 = arith.addf %265, %266 : vector<16x128xf32>
    %268 = arith.truncf %267 : vector<16x128xf32> to vector<16x128xbf16>
    %c1_77 = arith.constant 1 : index
    %c256_78 = arith.constant 256 : index
    %c0_79 = arith.constant 0 : index
    %269 = vector.load %arg4[%c1_77, %c256_78, %c0_79] : memref<2x512x128xbf16, #tpu.memory_space<vmem>>, vector<1x128x128xbf16>
    %270 = vector.shape_cast %269 : vector<1x128x128xbf16> to vector<128x128xbf16>
    %cst_80 = arith.constant dense<0.000000e+00> : vector<16x128xf32>
    %271 = tpu.matmul %268, %270, %cst_80 {dimension_numbers = #tpu.dot_dimension_numbers<[1], [0], [0], [1], [0, 0, 1, 1], [], []>} : vector<16x128xbf16>, vector<128x128xbf16>, vector<16x128xf32> -> vector<16x128xf32>
    %272 = vector.extract_strided_slice %178 {offsets = [9, 0], sizes = [1, 128], strides = [1, 1]} : vector<16x128xf32> to vector<1x128xf32>
    %273 = vector.broadcast %272 : vector<1x128xf32> to vector<16x128xf32>
    %274 = arith.addf %271, %273 : vector<16x128xf32>
    %cst_81 = arith.constant 5.000000e-01 : f32
    %275 = vector.broadcast %cst_81 : f32 to vector<16x128xf32>
    %276 = arith.mulf %275, %274 : vector<16x128xf32>
    %cst_82 = arith.constant 4.471500e-02 : f32
    %277 = vector.broadcast %cst_82 : f32 to vector<16x128xf32>
    %278 = arith.mulf %277, %274 : vector<16x128xf32>
    %279 = arith.mulf %278, %274 : vector<16x128xf32>
    %280 = arith.mulf %279, %274 : vector<16x128xf32>
    %281 = arith.addf %274, %280 : vector<16x128xf32>
    %cst_83 = arith.constant 0.797884583 : f32
    %282 = vector.broadcast %cst_83 : f32 to vector<16x128xf32>
    %283 = arith.mulf %282, %281 : vector<16x128xf32>
    %284 = math.tanh %283 : vector<16x128xf32>
    %cst_84 = arith.constant 1.000000e+00 : f32
    %285 = vector.broadcast %cst_84 : f32 to vector<16x128xf32>
    %286 = arith.addf %285, %284 : vector<16x128xf32>
    %287 = arith.mulf %276, %286 : vector<16x128xf32>
    %288 = arith.truncf %287 : vector<16x128xf32> to vector<16x128xbf16>
    %c1_85 = arith.constant 1 : index
    %c384_86 = arith.constant 384 : index
    %c0_87 = arith.constant 0 : index
    %289 = vector.load %arg4[%c1_85, %c384_86, %c0_87] : memref<2x512x128xbf16, #tpu.memory_space<vmem>>, vector<1x128x128xbf16>
    %290 = vector.shape_cast %289 : vector<1x128x128xbf16> to vector<128x128xbf16>
    %cst_88 = arith.constant dense<0.000000e+00> : vector<16x128xf32>
    %291 = tpu.matmul %288, %290, %cst_88 {dimension_numbers = #tpu.dot_dimension_numbers<[1], [0], [0], [1], [0, 0, 1, 1], [], []>} : vector<16x128xbf16>, vector<128x128xbf16>, vector<16x128xf32> -> vector<16x128xf32>
    %292 = vector.extract_strided_slice %178 {offsets = [10, 0], sizes = [1, 128], strides = [1, 1]} : vector<16x128xf32> to vector<1x128xf32>
    %293 = vector.broadcast %292 : vector<1x128xf32> to vector<16x128xf32>
    %294 = arith.addf %291, %293 : vector<16x128xf32>
    %295 = arith.addf %267, %294 : vector<16x128xf32>
    %296 = vector.extract_strided_slice %178 {offsets = [11, 0], sizes = [1, 128], strides = [1, 1]} : vector<16x128xf32> to vector<1x128xf32>
    %297 = vector.extract_strided_slice %178 {offsets = [12, 0], sizes = [1, 128], strides = [1, 1]} : vector<16x128xf32> to vector<1x128xf32>
    %cst_89 = arith.constant dense<0.000000e+00> : vector<16xf32>
    %298 = vector.multi_reduction <add>, %295, %cst_89 [1] : vector<16x128xf32> to vector<16xf32>
    %299 = vector.shape_cast %298 : vector<16xf32> to vector<16x1xf32>
    %cst_90 = arith.constant 3.125000e-02 : f32
    %300 = vector.broadcast %cst_90 : f32 to vector<16x1xf32>
    %301 = arith.mulf %299, %300 : vector<16x1xf32>
    %302 = arith.mulf %295, %295 : vector<16x128xf32>
    %cst_91 = arith.constant dense<0.000000e+00> : vector<16xf32>
    %303 = vector.multi_reduction <add>, %302, %cst_91 [1] : vector<16x128xf32> to vector<16xf32>
    %304 = vector.shape_cast %303 : vector<16xf32> to vector<16x1xf32>
    %cst_92 = arith.constant 3.125000e-02 : f32
    %305 = vector.broadcast %cst_92 : f32 to vector<16x1xf32>
    %306 = arith.mulf %304, %305 : vector<16x1xf32>
    %307 = arith.mulf %301, %301 : vector<16x1xf32>
    %308 = arith.subf %306, %307 : vector<16x1xf32>
    %cst_93 = arith.constant 0.000000e+00 : f32
    %309 = vector.broadcast %cst_93 : f32 to vector<16x1xf32>
    %310 = arith.maximumf %308, %309 : vector<16x1xf32>
    %311 = vector.broadcast %301 : vector<16x1xf32> to vector<16x128xf32>
    %312 = arith.subf %295, %311 : vector<16x128xf32>
    %cst_94 = arith.constant 9.99999996E-13 : f32
    %313 = vector.broadcast %cst_94 : f32 to vector<16x1xf32>
    %314 = arith.addf %310, %313 : vector<16x1xf32>
    %315 = math.rsqrt %314 : vector<16x1xf32>
    %316 = vector.broadcast %315 : vector<16x1xf32> to vector<16x128xf32>
    %317 = arith.mulf %312, %316 : vector<16x128xf32>
    %318 = vector.broadcast %296 : vector<1x128xf32> to vector<16x128xf32>
    %319 = arith.mulf %317, %318 : vector<16x128xf32>
    %320 = vector.broadcast %297 : vector<1x128xf32> to vector<16x128xf32>
    %321 = arith.addf %319, %320 : vector<16x128xf32>
    %c0_95 = arith.constant 0 : index
    %c0_96 = arith.constant 0 : index
    %322 = vector.load %arg6[%c0_95, %c0_96] : memref<16x128xf32, #tpu.memory_space<vmem>>, vector<16x128xf32>
    tpu.vector_store %arg6[%c0_95, %c0_96], %321 {strides = array<i32>} : memref<16x128xf32, #tpu.memory_space<vmem>>, vector<16x128xf32>,
    return
  }
  func.func @transform_0(%arg0: i32) -> (i32, i32) {
    %c0_i32 = arith.constant 0 : i32
    %c0_i32_0 = arith.constant 0 : i32
    return %arg0, %c0_i32 : i32, i32
  }
  func.func @transform_1(%arg0: i32) -> (i32, i32, i32) {
    %c0_i32 = arith.constant 0 : i32
    %c0_i32_0 = arith.constant 0 : i32
    %c0_i32_1 = arith.constant 0 : i32
    return %arg0, %c0_i32, %c0_i32_0 : i32, i32, i32
  }
  func.func @transform_2(%arg0: i32) -> (i32, i32, i32) {
    %c0_i32 = arith.constant 0 : i32
    %c0_i32_0 = arith.constant 0 : i32
    %c0_i32_1 = arith.constant 0 : i32
    %c0_i32_2 = arith.constant 0 : i32
    return %c0_i32, %c0_i32_0, %c0_i32_1 : i32, i32, i32
  }
  func.func @transform_3(%arg0: i32) -> (i32, i32, i32) {
    %c0_i32 = arith.constant 0 : i32
    %c0_i32_0 = arith.constant 0 : i32
    %c0_i32_1 = arith.constant 0 : i32
    %c0_i32_2 = arith.constant 0 : i32
    return %c0_i32, %c0_i32_0, %c0_i32_1 : i32, i32, i32
  }
  func.func @transform_4(%arg0: i32) -> (i32, i32, i32) {
    %c0_i32 = arith.constant 0 : i32
    %c0_i32_0 = arith.constant 0 : i32
    %c0_i32_1 = arith.constant 0 : i32
    %c0_i32_2 = arith.constant 0 : i32
    return %c0_i32, %c0_i32_0, %c0_i32_1 : i32, i32, i32
  }
  func.func @transform_5(%arg0: i32) -> (i32, i32) {
    %c0_i32 = arith.constant 0 : i32
    %c0_i32_0 = arith.constant 0 : i32
    return %arg0, %c0_i32 : i32, i32
  }
}

</mosaic_0001>

<llo_original>
// kernel: tile.9
$region0: #{tile.9}
  %s0 = inlined_call_operand.vmem [shape: f32[2,2,16], index: 0, kind: input, shape index: {}]
  %s1 = inlined_call_operand.vmem [shape: f32[2,32], index: 1, kind: output, shape index: {}]
  $region1: #{tile.9} parent=0
    #allocation0 [shape = 'u8[4096]{0}', space=vmem, size = 0x1000, scoped, tag = 'scoped mem for output reshape']
    #allocation1 [shape = 'u8[8192]{0}', space=vmem, size = 0x2000, scoped, tag = 'scoped mem for input reshape']
    %s3 = sshllo.u32 0, 2
    %s4 = scalar_lea.vmem %s0, 2
    %v5 = vld [vmem:[%s4] sm:%s3]
    %s6 = scalar_lea.vmem [#allocation1], 8
    %7 = vst [vmem:[%s6] sm:%s3] %v5
    %v8 = vld [vmem:[%s0] sm:%s3]
    %9 = vst [vmem:[#allocation1] sm:%s3] %v8
    %s10 = smov 3
    %v11 = vld [vmem:[#allocation1] ss:$8 sm:%s10]
    %vm12 = vcmask 130048
    %13 = vst.msk [vmem:[#allocation0] sm:$0x3] %vm12, %v11
    %s14 = scalar_lea.vmem [#allocation1], 1
    %s15 = smov 3
    %v16 = vld [vmem:[%s14] ss:$8 sm:%s15]
    %17 = vrot.lane.b32.xlu0 %v16, 16
    %v18 = vpop.permute.xlu0 %17
    %vm19 = vcmask 261248
    %20 = vst.msk [vmem:[#allocation0] sm:$0x3] %vm19, %v18
    %s22 = sshllo.u32 0, 2
    %v24 = vld [vmem:[#allocation0] sm:%s22]
    %s25 = sshllo.u32 0, 2
    %26 = vst [vmem:[%s1] sm:%s25] %v24

// kernel: encoding_model_forward.1
$region0: #{encoding_model_forward.1}
  #allocation0 [shape = 'u32[]', space=smem, size = 0x4, offset = 0x4, fixed_abs, tag = 'smem constant byte address 0x4 - core index']
  #allocation1 [shape = 'u32[144,128]{1,0:T(1,128)}', space=vmem, size = 0x12000, scoped, tag = 'internal scratch']
  %s0 = inlined_call_operand.vmem [shape: f32[32,128], index: 0, kind: input, shape index: {}]
  %s1 = inlined_call_operand.vmem [shape: f32[2,32,128], index: 1, kind: input, shape index: {}]
  %s2 = inlined_call_operand.vmem [shape: bf16[2,128,768], index: 2, kind: input, shape index: {}]
  %s3 = inlined_call_operand.hbm [shape: bf16[2,512,128], index: 3, kind: input, shape index: {}]
  %s4 = inlined_call_operand.vmem [shape: f32[2,16,128], index: 4, kind: input, shape index: {}]
  %s5 = inlined_call_operand.vmem [shape: f32[32,128], index: 5, kind: output, shape index: {}]
  %s6 = sld [smem:[#allocation0]]
  $region57: #{encoding_model_forward.1} parent=0
    _
  %s8 = ssub.s32 1, %s6
  %s9 = scalar_select 0, %s8, %s6
  $region1: #{encoding_model_forward.1} parent=0
    #allocation2 [shape = 'u8[262144]{0}', space=vmem, size = 0x40000, scoped, tag = 'input window, operand 3, single buffered']
    #allocation3 [shape = 's32[2]{0}', space=sflag, size = 0x8, scoped, tag = 'scoped memory for encoding_model_forward.1']
    %10 = vsyncpa [#allocation3], 0
    loop: start=0, step=1, limit=4
    $region2: #{encoding_model_forward.1} parent=1 // loop_pre_header
      _
    $region3: #{encoding_model_forward.1} parent=1 // loop_header
      %s12 = sphi 0, %s16
      %p13 = scmp.ge.s32.totalorder %s12, 4
      %s22 = sphi 0, %s24
      %s25 = sphi 0, %s22
      %s26 = sphi 0, %s25
      %s42 = sphi 0, %s26
      %s48 = sphi 0, %s50
      %s51 = sphi 0, %s48
      %s52 = sphi 0, %s51
      %s68 = sphi 0, %s52
      %s72 = sphi 0, %s72
      %s74 = sphi 0, %s72
      %s75 = sphi 0, %s74
      %s89 = sphi 0, %s75
      %s93 = sphi 0, %s93
      %s95 = sphi 0, %s93
      %s96 = sphi 0, %s95
      %s110 = sphi 0, %s96
      %s114 = sphi 0, %s114
      %s116 = sphi 0, %s114
      %s117 = sphi 0, %s116
      %s131 = sphi 0, %s117
      %s137 = sphi 0, %s139
      %s140 = sphi 0, %s137
      %s141 = sphi 0, %s140
      %s157 = sphi 0, %s141
    $region4: #{encoding_model_forward.1} parent=1 // loop_header_branch
      %15 = sbr.rel (%p13) target = $region8
    $region5: #{encoding_model_forward.1} parent=1 // loop_body
      %s17 = ssub.s32 %s12, 1
      %s18 = ssub.s32 %s12, 2
      %s19 = sadd.s32 %s12, 1
      %s20 = ssub.s32 %s12, %s19
      %p21 = scmp.eq.s32.totalorder %s20, 0
      %s23 = sadd.s32 %s22, 1
      %s24 = scalar_select %p21, %s22, %s23
      %p27 = pneg %p21
      %p28 = scmp.eq.s32.totalorder %s12, 1
      %p29 = por %p27, %p28
      %p30 = scmp.ne.s32.totalorder %s22, %s25
      %p31 = scmp.eq.s32.totalorder %s12, 0
      %p32 = por %p30, %p31
      %p33 = scmp.ne.s32.totalorder %s22, %s25
      %p34 = scmp.eq.s32.totalorder %s17, 1
      %p35 = por %p33, %p34
      %p36 = scmp.ne.s32.totalorder %s25, %s26
      %p37 = scmp.eq.s32.totalorder %s17, 0
      %p38 = por %p36, %p37
      %p39 = scmp.ne.s32.totalorder %s25, %s26
      %p40 = scmp.eq.s32.totalorder %s18, 1
      %p41 = por %p39, %p40
      %p43 = scmp.ne.s32.totalorder %s26, %s42
      %p44 = scmp.eq.s32.totalorder %s18, 0
      %p45 = por %p43, %p44
      %s46 = ssub.s32 %s12, %s19
      %p47 = scmp.eq.s32.totalorder %s46, 0
      %s49 = sadd.s32 %s48, 1
      %s50 = scalar_select %p47, %s48, %s49
      %p53 = pneg %p47
      %p54 = scmp.eq.s32.totalorder %s12, 1
      %p55 = por %p53, %p54
      %p56 = scmp.ne.s32.totalorder %s48, %s51
      %p57 = scmp.eq.s32.totalorder %s12, 0
      %p58 = por %p56, %p57
      %p59 = scmp.ne.s32.totalorder %s48, %s51
      %p60 = scmp.eq.s32.totalorder %s17, 1
      %p61 = por %p59, %p60
      %p62 = scmp.ne.s32.totalorder %s51, %s52
      %p63 = scmp.eq.s32.totalorder %s17, 0
      %p64 = por %p62, %p63
      %p65 = scmp.ne.s32.totalorder %s51, %s52
      %p66 = scmp.eq.s32.totalorder %s18, 1
      %p67 = por %p65, %p66
      %p69 = scmp.ne.s32.totalorder %s52, %s68
      %p70 = scmp.eq.s32.totalorder %s18, 0
      %p71 = por %p69, %p70
      %s73 = sadd.s32 %s72, 1
      %p76 = scmp.eq.s32.totalorder %s12, 1
      %p77 = scmp.ne.s32.totalorder %s72, %s74
      %p78 = scmp.eq.s32.totalorder %s12, 0
      %p79 = por %p77, %p78
      %p80 = scmp.ne.s32.totalorder %s72, %s74
      %p81 = scmp.eq.s32.totalorder %s17, 1
      %p82 = por %p80, %p81
      %p83 = scmp.ne.s32.totalorder %s74, %s75
      %p84 = scmp.eq.s32.totalorder %s17, 0
      %p85 = por %p83, %p84
      %p86 = scmp.ne.s32.totalorder %s74, %s75
      %p87 = scmp.eq.s32.totalorder %s18, 1
      %p88 = por %p86, %p87
      %p90 = scmp.ne.s32.totalorder %s75, %s89
      %p91 = scmp.eq.s32.totalorder %s18, 0
      %p92 = por %p90, %p91
      %s94 = sadd.s32 %s93, 1
      %p97 = scmp.eq.s32.totalorder %s12, 1
      %p98 = scmp.ne.s32.totalorder %s93, %s95
      %p99 = scmp.eq.s32.totalorder %s12, 0
      %p100 = por %p98, %p99
      %p101 = scmp.ne.s32.totalorder %s93, %s95
      %p102 = scmp.eq.s32.totalorder %s17, 1
      %p103 = por %p101, %p102
      %p104 = scmp.ne.s32.totalorder %s95, %s96
      %p105 = scmp.eq.s32.totalorder %s17, 0
      %p106 = por %p104, %p105
      %p107 = scmp.ne.s32.totalorder %s95, %s96
      %p108 = scmp.eq.s32.totalorder %s18, 1
      %p109 = por %p107, %p108
      %p111 = scmp.ne.s32.totalorder %s96, %s110
      %p112 = scmp.eq.s32.totalorder %s18, 0
      %p113 = por %p111, %p112
      %s115 = sadd.s32 %s114, 1
      %p118 = scmp.eq.s32.totalorder %s12, 1
      %p119 = scmp.ne.s32.totalorder %s114, %s116
      %p120 = scmp.eq.s32.totalorder %s12, 0
      %p121 = por %p119, %p120
      %p122 = scmp.ne.s32.totalorder %s114, %s116
      %p123 = scmp.eq.s32.totalorder %s17, 1
      %p124 = por %p122, %p123
      %p125 = scmp.ne.s32.totalorder %s116, %s117
      %p126 = scmp.eq.s32.totalorder %s17, 0
      %p127 = por %p125, %p126
      %p128 = scmp.ne.s32.totalorder %s116, %s117
      %p129 = scmp.eq.s32.totalorder %s18, 1
      %p130 = por %p128, %p129
      %p132 = scmp.ne.s32.totalorder %s117, %s131
      %p133 = scmp.eq.s32.totalorder %s18, 0
      %p134 = por %p132, %p133
      %s135 = ssub.s32 %s12, %s19
      %p136 = scmp.eq.s32.totalorder %s135, 0
      %s138 = sadd.s32 %s137, 1
      %s139 = scalar_select %p136, %s137, %s138
      %p142 = pneg %p136
      %p143 = scmp.eq.s32.totalorder %s12, 1
      %p144 = por %p142, %p143
      %p145 = scmp.ne.s32.totalorder %s137, %s140
      %p146 = scmp.eq.s32.totalorder %s12, 0
      %p147 = por %p145, %p146
      %p148 = scmp.ne.s32.totalorder %s137, %s140
      %p149 = scmp.eq.s32.totalorder %s17, 1
      %p150 = por %p148, %p149
      %p151 = scmp.ne.s32.totalorder %s140, %s141
      %p152 = scmp.eq.s32.totalorder %s17, 0
      %p153 = por %p151, %p152
      %p154 = scmp.ne.s32.totalorder %s140, %s141
      %p155 = scmp.eq.s32.totalorder %s18, 1
      %p156 = por %p154, %p155
      %p158 = scmp.ne.s32.totalorder %s141, %s157
      %p159 = scmp.eq.s32.totalorder %s18, 0
      %p160 = por %p158, %p159
      %p161 = scmp.le.s32.totalorder 1, %s12
      %p162 = scmp.lt.s32.totalorder %s12, 3
      %p163 = pnand %p161, %p162
      %p164 = pneg %p163
      // Predicated region
      $region9: #{encoding_model_forward.1} parent=5 // pred_check
        _
      $region10: #{encoding_model_forward.1} parent=5 // pred_check_branch
        %166 = sbr.rel (%p163) target = $region12
      $region11: #{encoding_model_forward.1} parent=5 // pred_region
        %s167 = ssub.s32 %s12, 1
        // Predicated region
        $region13: #{encoding_model_forward.1} parent=11 // pred_check
          %p168 = pneg %p85
        $region14: #{encoding_model_forward.1} parent=11 // pred_check_branch
          %170 = sbr.rel (%p168) target = $region16
        $region15: #{encoding_model_forward.1} parent=11 // pred_region
          _
        $region16: #{encoding_model_forward.1} parent=11 // pred_fallthru
          _
        // Predicated region
        $region17: #{encoding_model_forward.1} parent=11 // pred_check
          %p171 = pneg %p106
        $region18: #{encoding_model_forward.1} parent=11 // pred_check_branch
          %173 = sbr.rel (%p171) target = $region20
        $region19: #{encoding_model_forward.1} parent=11 // pred_region
          %s175 = ssub.s32 8192, 8192
          %176 = vsyncadd [#allocation3], %s175
          %s177 = sshll.u32 [#allocation2], 4
          %s178 = int_to_ptr.vmem [resolvable:$true] %s177
          %183 = dma.hbm_to_vmem [thread:$0]  %s3, 8192, %s178, [#allocation3], 64, 64, 4
        $region20: #{encoding_model_forward.1} parent=11 // pred_fallthru
          _
        // Predicated region
        $region21: #{encoding_model_forward.1} parent=11 // pred_check
          %p184 = pneg %p127
        $region22: #{encoding_model_forward.1} parent=11 // pred_check_branch
          %186 = sbr.rel (%p184) target = $region24
        $region23: #{encoding_model_forward.1} parent=11 // pred_region
          _
        $region24: #{encoding_model_forward.1} parent=11 // pred_fallthru
          _
      $region12: #{encoding_model_forward.1} parent=5 // pred_fallthru
        _
      %p187 = scmp.lt.s32.totalorder %s12, 2
      // Predicated region
      $region25: #{encoding_model_forward.1} parent=5 // pred_check
        %p188 = pneg %p187
      $region26: #{encoding_model_forward.1} parent=5 // pred_check_branch
        %190 = sbr.rel (%p188) target = $region28
      $region27: #{encoding_model_forward.1} parent=5 // pred_region
        // Predicated region
        $region29: #{encoding_model_forward.1} parent=27 // pred_check
          %p191 = pneg %p32
        $region30: #{encoding_model_forward.1} parent=27 // pred_check_branch
          %193 = sbr.rel (%p191) target = $region32
        $region31: #{encoding_model_forward.1} parent=27 // pred_region
          %s194 = smul.u32 2, %s12
          %p195 = scmp.lt.s32.totalorder %s194, 3
          %s196 = scalar_select %p195, %s194, 3
          %s197 = smul.addr %s196, 8
          %s198 = scalar_lea.vmem %s0, %s197
          %s199 = smul.u32 2, %s12
        $region32: #{encoding_model_forward.1} parent=27 // pred_fallthru
          _
        // Predicated region
        $region33: #{encoding_model_forward.1} parent=27 // pred_check
          %p200 = pneg %p58
        $region34: #{encoding_model_forward.1} parent=27 // pred_check_branch
          %202 = sbr.rel (%p200) target = $region36
        $region35: #{encoding_model_forward.1} parent=27 // pred_region
          %p203 = scmp.lt.s32.totalorder %s12, 1
          %s204 = scalar_select %p203, %s12, 1
          %s205 = smul.addr %s204, 4
          %s206 = smul.addr %s205, 8
          %s207 = scalar_lea.vmem %s1, %s206
        $region36: #{encoding_model_forward.1} parent=27 // pred_fallthru
          _
      $region28: #{encoding_model_forward.1} parent=5 // pred_fallthru
        _
      %p208 = scmp.le.s32.totalorder 1, %s12
      %p209 = scmp.lt.s32.totalorder %s12, 3
      %p210 = pnand %p208, %p209
      %p211 = pneg %p210
      // Predicated region
      $region37: #{encoding_model_forward.1} parent=5 // pred_check
        _
      $region38: #{encoding_model_forward.1} parent=5 // pred_check_branch
        %213 = sbr.rel (%p210) target = $region40
      $region39: #{encoding_model_forward.1} parent=5 // pred_region
        %s214 = ssub.s32 %s12, 1
        // Predicated region
        $region41: #{encoding_model_forward.1} parent=39 // pred_check
          %p215 = pneg %p106
        $region42: #{encoding_model_forward.1} parent=39 // pred_check_branch
          %217 = sbr.rel (%p215) target = $region44
        $region43: #{encoding_model_forward.1} parent=39 // pred_region
          %218 = dma.done [#allocation3], 8192
        $region44: #{encoding_model_forward.1} parent=39 // pred_fallthru
          _
        %s219 = smul.u32 2, %s17
        %p220 = scmp.lt.s32.totalorder %s219, 3
        %s221 = scalar_select %p220, %s219, 3
        %s222 = smul.addr %s221, 8
        %s223 = scalar_lea.vmem %s0, %s222
        %p224 = pneg %p38
        %p225 = pneg %p35
        %p226 = scmp.lt.s32.totalorder %s17, 1
        %s227 = scalar_select %p226, %s17, 1
        %s228 = smul.addr %s227, 4
        %s229 = smul.addr %s228, 8
        %s230 = scalar_lea.vmem %s1, %s229
        %p231 = pneg %p64
        %p232 = pneg %p61
        %p233 = pneg %p85
        %p234 = pneg %p82
        %p235 = pneg %p106
        %p236 = pneg %p103
        %p237 = pneg %p127
        %p238 = pneg %p124
        %p239 = pneg %p153
        %p240 = pneg %p150
        %s241 = smul.u32 2, %s17
        %p242 = scmp.lt.s32.totalorder %s241, 3
        %s243 = scalar_select %p242, %s241, 3
        %s244 = smul.addr %s243, 8
        %s245 = scalar_lea.vmem %s5, %s244
        %s246 = smul.u32 2, %s17
        %p247 = scmp.lt.s32.totalorder %s246, 3
        %s248 = scalar_select %p247, %s246, 3
        %s249 = smul.addr %s248, 8
        %s250 = scalar_lea.vmem %s0, %s249
        %s251 = smul.u32 2, %s17
        %p252 = scmp.lt.s32.totalorder %s17, 1
        %s253 = scalar_select %p252, %s17, 1
        %s254 = smul.addr %s253, 4
        %s255 = smul.addr %s254, 8
        %s256 = scalar_lea.vmem %s1, %s255
        %s257 = smul.u32 2, %s17
        %p258 = scmp.lt.s32.totalorder %s257, 3
        %s259 = scalar_select %p258, %s257, 3
        %s260 = smul.addr %s259, 8
        %s261 = scalar_lea.vmem %s5, %s260
        %s262 = smul.u32 2, %s17
        %v264 = vld [vmem:[%s250] sm:$0xff]
        %v265 = vld [vmem:[%s250 + $0x8] sm:$0xff]
        %v266 = vld [vmem:[%s256] sm:$0xff]
        %v267 = vld [vmem:[%s256 + $0x8] sm:$0xff]
        %v268 = vld [vmem:[%s256 + $0x10] sm:$0xff]
        %v269 = vld [vmem:[%s256 + $0x18] sm:$0xff]
        %v270 = vld [vmem:[%s4] sm:$0xff]
        %v271 = vld [vmem:[%s4 + $0x8] sm:$0xff]
        %272 = vadd.xlane.f32.xlu0 %v264
        %v273 = vpop.xlane.xlu0 %272
        %274 = vadd.xlane.f32.xlu0 %v265
        %v275 = vpop.xlane.xlu0 %274
        %v276 = vmul.f32 %v273, 0.03125
        %v277 = vmul.f32 %v275, 0.03125
        %v278 = vmul.f32 %v264, %v264
        %v279 = vmul.f32 %v265, %v265
        %280 = vadd.xlane.f32.xlu0 %v278
        %v281 = vpop.xlane.xlu0 %280
        %282 = vadd.xlane.f32.xlu0 %v279
        %v283 = vpop.xlane.xlu0 %282
        %v284 = vmul.f32 %v281, 0.03125
        %v285 = vmul.f32 %v283, 0.03125
        %v286 = vmul.f32 %v276, %v276
        %v287 = vmul.f32 %v277, %v277
        %v288 = vsub.f32 %v284, %v286
        %v289 = vsub.f32 %v285, %v287
        %v290 = vmax.f32 %v288, 0.0
        %v291 = vmax.f32 %v289, 0.0
        %v292 = vsub.f32 %v264, %v276
        %v293 = vsub.f32 %v265, %v277
        %v294 = vadd.f32 %v290, 1e-12
        %v295 = vadd.f32 %v291, 1e-12
        %v296 = vrsqrt.pop %v294
        %v297 = vrsqrt.pop %v295
        %v298 = vmul.f32 %v292, %v296
        %v299 = vmul.f32 %v293, %v297
        %v300 = vlaneseq
        %v301 = vshrl.u32 %v300, 7
        %v302 = vsub.s32 5, %v301
        %v303 = vrot.slane %v271, %v302
        %v304 = vmul.f32 %v298, %v303
        %v305 = vmul.f32 %v299, %v303
        %v306 = vlaneseq
        %v307 = vshrl.u32 %v306, 7
        %v308 = vsub.s32 6, %v307
        %v309 = vrot.slane %v271, %v308
        %v310 = vadd.f32 %v304, %v309
        %v311 = vadd.f32 %v305, %v309
        %v312 = vpack.c.bf16 %v311, %v310
        %v313 = vld [vmem:[%s2] sm:$0xff]
        %v314 = vld [vmem:[%s2 + $0x8] sm:$0xff]
        %v315 = vld [vmem:[%s2 + $0x10] sm:$0xff]
        %v316 = vld [vmem:[%s2 + $0x18] sm:$0xff]
        %v317 = vld [vmem:[%s2 + $0x20] sm:$0xff]
        %v318 = vld [vmem:[%s2 + $0x28] sm:$0xff]
        %v319 = vld [vmem:[%s2 + $0x30] sm:$0xff]
        %v320 = vld [vmem:[%s2 + $0x38] sm:$0xff]
        %v321 = vld [vmem:[%s2 + $0x40] sm:$0xff]
        %v322 = vld [vmem:[%s2 + $0x48] sm:$0xff]
        %v323 = vld [vmem:[%s2 + $0x50] sm:$0xff]
        %v324 = vld [vmem:[%s2 + $0x58] sm:$0xff]
        %v325 = vld [vmem:[%s2 + $0x60] sm:$0xff]
        %v326 = vld [vmem:[%s2 + $0x68] sm:$0xff]
        %v327 = vld [vmem:[%s2 + $0x70] sm:$0xff]
        %v328 = vld [vmem:[%s2 + $0x78] sm:$0xff]
        %v329 = vld [vmem:[%s2 + $0x80] sm:$0xff]
        %v330 = vld [vmem:[%s2 + $0x88] sm:$0xff]
        %v331 = vld [vmem:[%s2 + $0x90] sm:$0xff]
        %v332 = vld [vmem:[%s2 + $0x98] sm:$0xff]
        %v333 = vld [vmem:[%s2 + $0xa0] sm:$0xff]
        %v334 = vld [vmem:[%s2 + $0xa8] sm:$0xff]
        %v335 = vld [vmem:[%s2 + $0xb0] sm:$0xff]
        %v336 = vld [vmem:[%s2 + $0xb8] sm:$0xff]
        %v337 = vld [vmem:[%s2 + $0xc0] sm:$0xff]
        %v338 = vld [vmem:[%s2 + $0xc8] sm:$0xff]
        %v339 = vld [vmem:[%s2 + $0xd0] sm:$0xff]
        %v340 = vld [vmem:[%s2 + $0xd8] sm:$0xff]
        %v341 = vld [vmem:[%s2 + $0xe0] sm:$0xff]
        %v342 = vld [vmem:[%s2 + $0xe8] sm:$0xff]
        %v343 = vld [vmem:[%s2 + $0xf0] sm:$0xff]
        %v344 = vld [vmem:[%s2 + $0xf8] sm:$0xff]
        %v345 = vld [vmem:[%s2 + $0x100] sm:$0xff]
        %v346 = vld [vmem:[%s2 + $0x108] sm:$0xff]
        %v347 = vld [vmem:[%s2 + $0x110] sm:$0xff]
        %v348 = vld [vmem:[%s2 + $0x118] sm:$0xff]
        %v349 = vld [vmem:[%s2 + $0x120] sm:$0xff]
        %v350 = vld [vmem:[%s2 + $0x128] sm:$0xff]
        %v351 = vld [vmem:[%s2 + $0x130] sm:$0xff]
        %v352 = vld [vmem:[%s2 + $0x138] sm:$0xff]
        %v353 = vld [vmem:[%s2 + $0x140] sm:$0xff]
        %v354 = vld [vmem:[%s2 + $0x148] sm:$0xff]
        %v355 = vld [vmem:[%s2 + $0x150] sm:$0xff]
        %v356 = vld [vmem:[%s2 + $0x158] sm:$0xff]
        %v357 = vld [vmem:[%s2 + $0x160] sm:$0xff]
        %v358 = vld [vmem:[%s2 + $0x168] sm:$0xff]
        %v359 = vld [vmem:[%s2 + $0x170] sm:$0xff]
        %v360 = vld [vmem:[%s2 + $0x178] sm:$0xff]
        %v409 = vunpack.c.l.b16 %v313
        %v410 = vunpack.c.h.b16 %v313
        %v411 = vunpack.c.l.b16 %v314
        %v412 = vunpack.c.h.b16 %v314
        %v413 = vunpack.c.l.b16 %v315
        %v414 = vunpack.c.h.b16 %v315
        %v415 = vunpack.c.l.b16 %v316
        %v416 = vunpack.c.h.b16 %v316
        %v417 = vunpack.c.l.b16 %v317
        %v418 = vunpack.c.h.b16 %v317
        %v419 = vunpack.c.l.b16 %v318
        %v420 = vunpack.c.h.b16 %v318
        %v421 = vunpack.c.l.b16 %v319
        %v422 = vunpack.c.h.b16 %v319
        %v423 = vunpack.c.l.b16 %v320
        %v424 = vunpack.c.h.b16 %v320
        %v425 = vunpack.c.l.b16 %v321
        %v426 = vunpack.c.h.b16 %v321
        %v427 = vunpack.c.l.b16 %v322
        %v428 = vunpack.c.h.b16 %v322
        %v429 = vunpack.c.l.b16 %v323
        %v430 = vunpack.c.h.b16 %v323
        %v431 = vunpack.c.l.b16 %v324
        %v432 = vunpack.c.h.b16 %v324
        %v433 = vunpack.c.l.b16 %v325
        %v434 = vunpack.c.h.b16 %v325
        %v435 = vunpack.c.l.b16 %v326
        %v436 = vunpack.c.h.b16 %v326
        %v437 = vunpack.c.l.b16 %v327
        %v438 = vunpack.c.h.b16 %v327
        %v439 = vunpack.c.l.b16 %v328
        %v440 = vunpack.c.h.b16 %v328
        %v441 = vunpack.c.l.b16 %v329
        %v442 = vunpack.c.h.b16 %v329
        %v443 = vunpack.c.l.b16 %v330
        %v444 = vunpack.c.h.b16 %v330
        %v445 = vunpack.c.l.b16 %v331
        %v446 = vunpack.c.h.b16 %v331
        %v447 = vunpack.c.l.b16 %v332
        %v448 = vunpack.c.h.b16 %v332
        %v449 = vunpack.c.l.b16 %v333
        %v450 = vunpack.c.h.b16 %v333
        %v451 = vunpack.c.l.b16 %v334
        %v452 = vunpack.c.h.b16 %v334
        %v453 = vunpack.c.l.b16 %v335
        %v454 = vunpack.c.h.b16 %v335
        %v455 = vunpack.c.l.b16 %v336
        %v456 = vunpack.c.h.b16 %v336
        %v457 = vunpack.c.l.b16 %v337
        %v458 = vunpack.c.h.b16 %v337
        %v459 = vunpack.c.l.b16 %v338
        %v460 = vunpack.c.h.b16 %v338
        %v461 = vunpack.c.l.b16 %v339
        %v462 = vunpack.c.h.b16 %v339
        %v463 = vunpack.c.l.b16 %v340
        %v464 = vunpack.c.h.b16 %v340
        %v465 = vunpack.c.l.b16 %v341
        %v466 = vunpack.c.h.b16 %v341
        %v467 = vunpack.c.l.b16 %v342
        %v468 = vunpack.c.h.b16 %v342
        %v469 = vunpack.c.l.b16 %v343
        %v470 = vunpack.c.h.b16 %v343
        %v471 = vunpack.c.l.b16 %v344
        %v472 = vunpack.c.h.b16 %v344
        %v473 = vunpack.c.l.b16 %v345
        %v474 = vunpack.c.h.b16 %v345
        %v475 = vunpack.c.l.b16 %v346
        %v476 = vunpack.c.h.b16 %v346
        %v477 = vunpack.c.l.b16 %v347
        %v478 = vunpack.c.h.b16 %v347
        %v479 = vunpack.c.l.b16 %v348
        %v480 = vunpack.c.h.b16 %v348
        %v481 = vunpack.c.l.b16 %v349
        %v482 = vunpack.c.h.b16 %v349
        %v483 = vunpack.c.l.b16 %v350
        %v484 = vunpack.c.h.b16 %v350
        %v485 = vunpack.c.l.b16 %v351
        %v486 = vunpack.c.h.b16 %v351
        %v487 = vunpack.c.l.b16 %v352
        %v488 = vunpack.c.h.b16 %v352
        %v489 = vunpack.c.l.b16 %v353
        %v490 = vunpack.c.h.b16 %v353
        %v491 = vunpack.c.l.b16 %v354
        %v492 = vunpack.c.h.b16 %v354
        %v493 = vunpack.c.l.b16 %v355
        %v494 = vunpack.c.h.b16 %v355
        %v495 = vunpack.c.l.b16 %v356
        %v496 = vunpack.c.h.b16 %v356
        %v497 = vunpack.c.l.b16 %v357
        %v498 = vunpack.c.h.b16 %v357
        %v499 = vunpack.c.l.b16 %v358
        %v500 = vunpack.c.h.b16 %v358
        %v501 = vunpack.c.l.b16 %v359
        %v502 = vunpack.c.h.b16 %v359
        %v503 = vunpack.c.l.b16 %v360
        %v504 = vunpack.c.h.b16 %v360
        %v505 = vpack.c.b16 %v415, %v409
        %v506 = vpack.c.b16 %v416, %v410
        %v507 = vpack.c.b16 %v417, %v411
        %v508 = vpack.c.b16 %v418, %v412
        %v509 = vpack.c.b16 %v419, %v413
        %v510 = vpack.c.b16 %v420, %v414
        %v511 = vpack.c.b16 %v427, %v421
        %v512 = vpack.c.b16 %v428, %v422
        %v513 = vpack.c.b16 %v429, %v423
        %v514 = vpack.c.b16 %v430, %v424
        %v515 = vpack.c.b16 %v431, %v425
        %v516 = vpack.c.b16 %v432, %v426
        %v517 = vpack.c.b16 %v439, %v433
        %v518 = vpack.c.b16 %v440, %v434
        %v519 = vpack.c.b16 %v441, %v435
        %v520 = vpack.c.b16 %v442, %v436
        %v521 = vpack.c.b16 %v443, %v437
        %v522 = vpack.c.b16 %v444, %v438
        %v523 = vpack.c.b16 %v451, %v445
        %v524 = vpack.c.b16 %v452, %v446
        %v525 = vpack.c.b16 %v453, %v447
        %v526 = vpack.c.b16 %v454, %v448
        %v527 = vpack.c.b16 %v455, %v449
        %v528 = vpack.c.b16 %v456, %v450
        %v529 = vpack.c.b16 %v463, %v457
        %v530 = vpack.c.b16 %v464, %v458
        %v531 = vpack.c.b16 %v465, %v459
        %v532 = vpack.c.b16 %v466, %v460
        %v533 = vpack.c.b16 %v467, %v461
        %v534 = vpack.c.b16 %v468, %v462
        %v535 = vpack.c.b16 %v475, %v469
        %v536 = vpack.c.b16 %v476, %v470
        %v537 = vpack.c.b16 %v477, %v471
        %v538 = vpack.c.b16 %v478, %v472
        %v539 = vpack.c.b16 %v479, %v473
        %v540 = vpack.c.b16 %v480, %v474
        %v541 = vpack.c.b16 %v487, %v481
        %v542 = vpack.c.b16 %v488, %v482
        %v543 = vpack.c.b16 %v489, %v483
        %v544 = vpack.c.b16 %v490, %v484
        %v545 = vpack.c.b16 %v491, %v485
        %v546 = vpack.c.b16 %v492, %v486
        %v547 = vpack.c.b16 %v499, %v493
        %v548 = vpack.c.b16 %v500, %v494
        %v549 = vpack.c.b16 %v501, %v495
        %v550 = vpack.c.b16 %v502, %v496
        %v551 = vpack.c.b16 %v503, %v497
        %v552 = vpack.c.b16 %v504, %v498
        %601 = vmatprep.subr.bf16.mxu0 %v506
        %602 = vmatpush1.bf16.msra.mxu0 %v505
        %603 = vmatprep.subr.bf16.mxu0 %v512
        %604 = vmatpush1.bf16.msra.mxu0 %v511
        %605 = vmatprep.subr.bf16.mxu0 %v518
        %606 = vmatpush1.bf16.msra.mxu0 %v517
        %607 = vmatprep.subr.bf16.mxu0 %v524
        %608 = vmatpush1.bf16.msra.mxu0 %v523
        %609 = vmatprep.subr.bf16.mxu0 %v530
        %610 = vmatpush1.bf16.msra.mxu0 %v529
        %611 = vmatprep.subr.bf16.mxu0 %v536
        %612 = vmatpush1.bf16.msra.mxu0 %v535
        %613 = vmatprep.subr.bf16.mxu0 %v542
        %614 = vmatpush1.bf16.msra.mxu0 %v541
        %615 = vmatprep.subr.bf16.mxu0 %v548
        %616 = vmatpush1.bf16.msra.mxu0 %v547
        %617 = vmatprep.subr.bf16.mxu0 0
        %618 = vmatpush1.bf16.msra.mxu0 0
        %619 = vmatprep.subr.bf16.mxu0 0
        %620 = vmatpush1.bf16.msra.mxu0 0
        %621 = vmatprep.subr.bf16.mxu0 0
        %622 = vmatpush1.bf16.msra.mxu0 0
        %623 = vmatprep.subr.bf16.mxu0 0
        %624 = vmatpush1.bf16.msra.mxu0 0
        %625 = vmatprep.subr.bf16.mxu0 0
        %626 = vmatpush1.bf16.msra.mxu0 0
        %627 = vmatprep.subr.bf16.mxu0 0
        %628 = vmatpush1.bf16.msra.mxu0 0
        %629 = vmatprep.subr.bf16.mxu0 0
        %630 = vmatpush1.bf16.msra.mxu0 0
        %631 = vmatprep.subr.bf16.mxu0 0
        %632 = vmatpush1.bf16.msra.mxu0 0
        %633 = vmatprep.mubr.bf16.mxu0 0
        %634 = vmatmul.mubr.bf16.gmra.mrb[0].mxu0 %v312
        %v635 = vpop.f32.mrb[0].mxu0
        %v636 = vadd.f32 0.0, %v635
        %v637 = vpop.f32.mrb[0].mxu0
        %v638 = vadd.f32 0.0, %v637
        %v639 = vpop.f32.mrb[0].mxu0
        %v640 = vadd.f32 0.0, %v639
        %v641 = vpop.f32.mrb[0].mxu0
        %v642 = vadd.f32 0.0, %v641
        %643 = vdwg.mxu0
        %644 = vmatprep.subr.bf16.mxu0 %v508
        %645 = vmatpush1.bf16.msra.mxu0 %v507
        %646 = vmatprep.subr.bf16.mxu0 %v514
        %647 = vmatpush1.bf16.msra.mxu0 %v513
        %648 = vmatprep.subr.bf16.mxu0 %v520
        %649 = vmatpush1.bf16.msra.mxu0 %v519
        %650 = vmatprep.subr.bf16.mxu0 %v526
        %651 = vmatpush1.bf16.msra.mxu0 %v525
        %652 = vmatprep.subr.bf16.mxu0 %v532
        %653 = vmatpush1.bf16.msra.mxu0 %v531
        %654 = vmatprep.subr.bf16.mxu0 %v538
        %655 = vmatpush1.bf16.msra.mxu0 %v537
        %656 = vmatprep.subr.bf16.mxu0 %v544
        %657 = vmatpush1.bf16.msra.mxu0 %v543
        %658 = vmatprep.subr.bf16.mxu0 %v550
        %659 = vmatpush1.bf16.msra.mxu0 %v549
        %660 = vmatprep.subr.bf16.mxu0 0
        %661 = vmatpush1.bf16.msra.mxu0 0
        %662 = vmatprep.subr.bf16.mxu0 0
        %663 = vmatpush1.bf16.msra.mxu0 0
        %664 = vmatprep.subr.bf16.mxu0 0
        %665 = vmatpush1.bf16.msra.mxu0 0
        %666 = vmatprep.subr.bf16.mxu0 0
        %667 = vmatpush1.bf16.msra.mxu0 0
        %668 = vmatprep.subr.bf16.mxu0 0
        %669 = vmatpush1.bf16.msra.mxu0 0
        %670 = vmatprep.subr.bf16.mxu0 0
        %671 = vmatpush1.bf16.msra.mxu0 0
        %672 = vmatprep.subr.bf16.mxu0 0
        %673 = vmatpush1.bf16.msra.mxu0 0
        %674 = vmatprep.subr.bf16.mxu0 0
        %675 = vmatpush1.bf16.msra.mxu0 0
        %676 = vmatprep.mubr.bf16.mxu0 0
        %677 = vmatmul.mubr.bf16.gmra.mrb[0].mxu0 %v312
        %v678 = vpop.f32.mrb[0].mxu0
        %v679 = vadd.f32 0.0, %v678
        %v680 = vpop.f32.mrb[0].mxu0
        %v681 = vadd.f32 0.0, %v680
        %v682 = vpop.f32.mrb[0].mxu0
        %v683 = vadd.f32 0.0, %v682
        %v684 = vpop.f32.mrb[0].mxu0
        %v685 = vadd.f32 0.0, %v684
        %686 = vdwg.mxu0
        %687 = vmatprep.subr.bf16.mxu0 %v510
        %688 = vmatpush1.bf16.msra.mxu0 %v509
        %689 = vmatprep.subr.bf16.mxu0 %v516
        %690 = vmatpush1.bf16.msra.mxu0 %v515
        %691 = vmatprep.subr.bf16.mxu0 %v522
        %692 = vmatpush1.bf16.msra.mxu0 %v521
        %693 = vmatprep.subr.bf16.mxu0 %v528
        %694 = vmatpush1.bf16.msra.mxu0 %v527
        %695 = vmatprep.subr.bf16.mxu0 %v534
        %696 = vmatpush1.bf16.msra.mxu0 %v533
        %697 = vmatprep.subr.bf16.mxu0 %v540
        %698 = vmatpush1.bf16.msra.mxu0 %v539
        %699 = vmatprep.subr.bf16.mxu0 %v546
        %700 = vmatpush1.bf16.msra.mxu0 %v545
        %701 = vmatprep.subr.bf16.mxu0 %v552
        %702 = vmatpush1.bf16.msra.mxu0 %v551
        %703 = vmatprep.subr.bf16.mxu0 0
        %704 = vmatpush1.bf16.msra.mxu0 0
        %705 = vmatprep.subr.bf16.mxu0 0
        %706 = vmatpush1.bf16.msra.mxu0 0
        %707 = vmatprep.subr.bf16.mxu0 0
        %708 = vmatpush1.bf16.msra.mxu0 0
        %709 = vmatprep.subr.bf16.mxu0 0
        %710 = vmatpush1.bf16.msra.mxu0 0
        %711 = vmatprep.subr.bf16.mxu0 0
        %712 = vmatpush1.bf16.msra.mxu0 0
        %713 = vmatprep.subr.bf16.mxu0 0
        %714 = vmatpush1.bf16.msra.mxu0 0
        %715 = vmatprep.subr.bf16.mxu0 0
        %716 = vmatpush1.bf16.msra.mxu0 0
        %717 = vmatprep.subr.bf16.mxu0 0
        %718 = vmatpush1.bf16.msra.mxu0 0
        %719 = vmatprep.mubr.bf16.mxu0 0
        %720 = vmatmul.mubr.bf16.gmra.mrb[0].mxu0 %v312
        %v721 = vpop.f32.mrb[0].mxu0
        %v722 = vadd.f32 0.0, %v721
        %v723 = vpop.f32.mrb[0].mxu0
        %v724 = vadd.f32 0.0, %v723
        %v725 = vpop.f32.mrb[0].mxu0
        %v726 = vadd.f32 0.0, %v725
        %v727 = vpop.f32.mrb[0].mxu0
        %v728 = vadd.f32 0.0, %v727
        %729 = vdwg.mxu0
        %v730 = vlaneseq
        %v731 = vshrl.u32 %v730, 7
        %v732 = vsub.s32 0, %v731
        %v733 = vrot.slane %v270, %v732
        %v734 = vadd.f32 %v636, %v733
        %v735 = vadd.f32 %v640, %v733
        %v736 = vlaneseq
        %v737 = vshrl.u32 %v736, 7
        %v738 = vsub.s32 1, %v737
        %v739 = vrot.slane %v270, %v738
        %v740 = vadd.f32 %v638, %v739
        %v741 = vadd.f32 %v642, %v739
        %v742 = vlaneseq
        %v743 = vshrl.u32 %v742, 7
        %v744 = vsub.s32 2, %v743
        %v745 = vrot.slane %v270, %v744
        %v746 = vadd.f32 %v679, %v745
        %v747 = vadd.f32 %v683, %v745
        %v748 = vlaneseq
        %v749 = vshrl.u32 %v748, 7
        %v750 = vsub.s32 3, %v749
        %v751 = vrot.slane %v270, %v750
        %v752 = vadd.f32 %v681, %v751
        %v753 = vadd.f32 %v685, %v751
        %v754 = vlaneseq
        %v755 = vshrl.u32 %v754, 7
        %v756 = vsub.s32 4, %v755
        %v757 = vrot.slane %v270, %v756
        %v758 = vadd.f32 %v722, %v757
        %v759 = vadd.f32 %v726, %v757
        %v760 = vlaneseq
        %v761 = vshrl.u32 %v760, 7
        %v762 = vsub.s32 5, %v761
        %v763 = vrot.slane %v270, %v762
        %v764 = vadd.f32 %v724, %v763
        %v765 = vadd.f32 %v728, %v763
        %v766 = vpack.c.bf16 %v735, %v734
        %v767 = vpack.c.bf16 %v741, %v740
        %v768 = vpack.c.bf16 %v747, %v746
        %v769 = vpack.c.bf16 %v753, %v752
        %v770 = vpack.c.bf16 0.0, 0.0
        %771 = vmatprep.subr.bf16.mxu0 0
        %772 = vmatpush1.bf16.xpose.msra.mxu0 %v768
        %773 = vmatprep.subr.bf16.mxu0 0
        %774 = vmatpush1.bf16.xpose.msra.mxu0 %v769
        %775 = vmatprep.subr.bf16.mxu0 0
        %776 = vmatpush1.bf16.xpose.msra.mxu0 %v770
        %777 = vmatprep.subr.bf16.mxu0 0
        %778 = vmatpush1.bf16.xpose.msra.mxu0 %v770
        %779 = vmatprep.subr.bf16.mxu0 0
        %780 = vmatpush1.bf16.xpose.msra.mxu0 %v770
        %781 = vmatprep.subr.bf16.mxu0 0
        %782 = vmatpush1.bf16.xpose.msra.mxu0 %v770
        %783 = vmatprep.subr.bf16.mxu0 0
        %784 = vmatpush1.bf16.xpose.msra.mxu0 %v770
        %785 = vmatprep.subr.bf16.mxu0 0
        %786 = vmatpush1.bf16.xpose.msra.mxu0 %v770
        %787 = vmatprep.subr.bf16.mxu0 0
        %788 = vmatpush1.bf16.xpose.msra.mxu0 0
        %789 = vmatprep.subr.bf16.mxu0 0
        %790 = vmatpush1.bf16.xpose.msra.mxu0 0
        %791 = vmatprep.subr.bf16.mxu0 0
        %792 = vmatpush1.bf16.xpose.msra.mxu0 0
        %793 = vmatprep.subr.bf16.mxu0 0
        %794 = vmatpush1.bf16.xpose.msra.mxu0 0
        %795 = vmatprep.subr.bf16.mxu0 0
        %796 = vmatpush1.bf16.xpose.msra.mxu0 0
        %797 = vmatprep.subr.bf16.mxu0 0
        %798 = vmatpush1.bf16.xpose.msra.mxu0 0
        %799 = vmatprep.subr.bf16.mxu0 0
        %800 = vmatpush1.bf16.xpose.msra.mxu0 0
        %801 = vmatprep.subr.bf16.mxu0 0
        %802 = vmatpush1.bf16.xpose.msra.mxu0 0
        %803 = vmatprep.mubr.bf16.mxu0 0
        %804 = vmatmul.mubr.bf16.gmra.mrb[0].mxu0 %v766
        %v805 = vpop.f32.mrb[0].mxu0
        %v806 = vadd.f32 %v266, %v805
        %v807 = vpop.f32.mrb[0].mxu0
        %v808 = vpop.f32.mrb[0].mxu0
        %v809 = vadd.f32 %v267, %v808
        %v810 = vpop.f32.mrb[0].mxu0
        %811 = vmatprep.mubr.bf16.mxu0 0
        %812 = vmatmul.mubr.bf16.gmra.mrb[0].mxu0 %v767
        %v813 = vpop.f32.mrb[0].mxu0
        %v814 = vadd.f32 %v268, %v813
        %v815 = vpop.f32.mrb[0].mxu0
        %v816 = vpop.f32.mrb[0].mxu0
        %v817 = vadd.f32 %v269, %v816
        %v818 = vpop.f32.mrb[0].mxu0
        %819 = vdwg.mxu0
        %820 = vmax.xlane.f32.xlu0 %v806
        %v821 = vpop.xlane.xlu0 %820
        %822 = vmax.xlane.f32.xlu0 %v809
        %v823 = vpop.xlane.xlu0 %822
        %824 = vmax.xlane.f32.xlu0 %v814
        %v825 = vpop.xlane.xlu0 %824
        %826 = vmax.xlane.f32.xlu0 %v817
        %v827 = vpop.xlane.xlu0 %826
        %v828 = vsub.f32 %v806, %v821
        %v829 = vsub.f32 %v809, %v823
        %v830 = vsub.f32 %v814, %v825
        %v831 = vsub.f32 %v817, %v827
        %v832 = vmul.f32 %v828, 1.442695
        %v833 = vpow.pop %v832
        %v834 = vmul.f32 %v829, 1.442695
        %v835 = vpow.pop %v834
        %v836 = vmul.f32 %v830, 1.442695
        %v837 = vpow.pop %v836
        %v838 = vmul.f32 %v831, 1.442695
        %v839 = vpow.pop %v838
        %840 = vadd.xlane.f32.xlu0 %v833
        %v841 = vpop.xlane.xlu0 %840
        %842 = vadd.xlane.f32.xlu0 %v835
        %v843 = vpop.xlane.xlu0 %842
        %844 = vadd.xlane.f32.xlu0 %v837
        %v845 = vpop.xlane.xlu0 %844
        %846 = vadd.xlane.f32.xlu0 %v839
        %v847 = vpop.xlane.xlu0 %846
        %v848 = vrcp.pop %v841
        %v849 = vrcp.pop %v843
        %v850 = vrcp.pop %v845
        %v851 = vrcp.pop %v847
        %v852 = vmul.f32 %v833, %v848
        %v853 = vmul.f32 %v835, %v849
        %v854 = vmul.f32 %v837, %v850
        %v855 = vmul.f32 %v839, %v851
        %v856 = vpack.c.bf16 %v853, %v852
        %v857 = vpack.c.bf16 %v855, %v854
        %v858 = vpack.c.bf16 %v759, %v758
        %v859 = vpack.c.bf16 %v765, %v764
        %860 = vmatprep.subr.bf16.mxu0 0
        %861 = vmatpush1.bf16.msra.mxu0 %v858
        %862 = vmatprep.subr.bf16.mxu0 0
        %863 = vmatpush1.bf16.msra.mxu0 %v859
        %864 = vmatprep.subr.bf16.mxu0 0
        %865 = vmatpush1.bf16.msra.mxu0 %v770
        %866 = vmatprep.subr.bf16.mxu0 0
        %867 = vmatpush1.bf16.msra.mxu0 %v770
        %868 = vmatprep.subr.bf16.mxu0 0
        %869 = vmatpush1.bf16.msra.mxu0 %v770
        %870 = vmatprep.subr.bf16.mxu0 0
        %871 = vmatpush1.bf16.msra.mxu0 %v770
        %872 = vmatprep.subr.bf16.mxu0 0
        %873 = vmatpush1.bf16.msra.mxu0 %v770
        %874 = vmatprep.subr.bf16.mxu0 0
        %875 = vmatpush1.bf16.msra.mxu0 %v770
        %876 = vmatprep.subr.bf16.mxu0 0
        %877 = vmatpush1.bf16.msra.mxu0 0
        %878 = vmatprep.subr.bf16.mxu0 0
        %879 = vmatpush1.bf16.msra.mxu0 0
        %880 = vmatprep.subr.bf16.mxu0 0
        %881 = vmatpush1.bf16.msra.mxu0 0
        %882 = vmatprep.subr.bf16.mxu0 0
        %883 = vmatpush1.bf16.msra.mxu0 0
        %884 = vmatprep.subr.bf16.mxu0 0
        %885 = vmatpush1.bf16.msra.mxu0 0
        %886 = vmatprep.subr.bf16.mxu0 0
        %887 = vmatpush1.bf16.msra.mxu0 0
        %888 = vmatprep.subr.bf16.mxu0 0
        %889 = vmatpush1.bf16.msra.mxu0 0
        %890 = vmatprep.subr.bf16.mxu0 0
        %891 = vmatpush1.bf16.msra.mxu0 0
        %892 = vmatprep.mubr.bf16.mxu0 0
        %893 = vmatmul.mubr.bf16.gmra.mrb[0].mxu0 %v856
        %v894 = vpop.f32.mrb[0].mxu0
        %v895 = vadd.f32 0.0, %v894
        %v896 = vpop.f32.mrb[0].mxu0
        %v897 = vpop.f32.mrb[0].mxu0
        %v898 = vadd.f32 0.0, %v897
        %v899 = vpop.f32.mrb[0].mxu0
        %900 = vmatprep.mubr.bf16.mxu0 0
        %901 = vmatmul.mubr.bf16.gmra.mrb[0].mxu0 %v857
        %v902 = vpop.f32.mrb[0].mxu0
        %v903 = vadd.f32 0.0, %v902
        %v904 = vpop.f32.mrb[0].mxu0
        %v905 = vpop.f32.mrb[0].mxu0
        %v906 = vadd.f32 0.0, %v905
        %v907 = vpop.f32.mrb[0].mxu0
        %908 = vdwg.mxu0
        %v909 = vpack.c.bf16 %v898, %v895
        %v910 = vld [vmem:[#allocation2] sm:$0xf]
        %v911 = vld [vmem:[#allocation2 + $0x4] sm:$0xf]
        %v912 = vld [vmem:[#allocation2 + $0x8] sm:$0xf]
        %v913 = vld [vmem:[#allocation2 + $0xc] sm:$0xf]
        %v914 = vld [vmem:[#allocation2 + $0x10] sm:$0xf]
        %v915 = vld [vmem:[#allocation2 + $0x14] sm:$0xf]
        %v916 = vld [vmem:[#allocation2 + $0x18] sm:$0xf]
        %v917 = vld [vmem:[#allocation2 + $0x1c] sm:$0xf]
        %v918 = vld [vmem:[#allocation2 + $0x20] sm:$0xf]
        %v919 = vld [vmem:[#allocation2 + $0x24] sm:$0xf]
        %v920 = vld [vmem:[#allocation2 + $0x28] sm:$0xf]
        %v921 = vld [vmem:[#allocation2 + $0x2c] sm:$0xf]
        %v922 = vld [vmem:[#allocation2 + $0x30] sm:$0xf]
        %v923 = vld [vmem:[#allocation2 + $0x34] sm:$0xf]
        %v924 = vld [vmem:[#allocation2 + $0x38] sm:$0xf]
        %v925 = vld [vmem:[#allocation2 + $0x3c] sm:$0xf]
        %v942 = vunpack.c.l.b16 %v910
        %v943 = vunpack.c.l.b16 %v911
        %v944 = vunpack.c.l.b16 %v912
        %v945 = vunpack.c.l.b16 %v913
        %v946 = vunpack.c.l.b16 %v914
        %v947 = vunpack.c.l.b16 %v915
        %v948 = vunpack.c.l.b16 %v916
        %v949 = vunpack.c.l.b16 %v917
        %v950 = vunpack.c.l.b16 %v918
        %v951 = vunpack.c.l.b16 %v919
        %v952 = vunpack.c.l.b16 %v920
        %v953 = vunpack.c.l.b16 %v921
        %v954 = vunpack.c.l.b16 %v922
        %v955 = vunpack.c.l.b16 %v923
        %v956 = vunpack.c.l.b16 %v924
        %v957 = vunpack.c.l.b16 %v925
        %v958 = vpack.c.b16 %v943, %v942
        %v959 = vpack.c.b16 %v945, %v944
        %v960 = vpack.c.b16 %v947, %v946
        %v961 = vpack.c.b16 %v949, %v948
        %v962 = vpack.c.b16 %v951, %v950
        %v963 = vpack.c.b16 %v953, %v952
        %v964 = vpack.c.b16 %v955, %v954
        %v965 = vpack.c.b16 %v957, %v956
        %974 = vmatprep.subr.bf16.mxu0 0
        %975 = vmatpush1.bf16.msra.mxu0 %v958
        %976 = vmatprep.subr.bf16.mxu0 0
        %977 = vmatpush1.bf16.msra.mxu0 %v959
        %978 = vmatprep.subr.bf16.mxu0 0
        %979 = vmatpush1.bf16.msra.mxu0 %v960
        %980 = vmatprep.subr.bf16.mxu0 0
        %981 = vmatpush1.bf16.msra.mxu0 %v961
        %982 = vmatprep.subr.bf16.mxu0 0
        %983 = vmatpush1.bf16.msra.mxu0 %v962
        %984 = vmatprep.subr.bf16.mxu0 0
        %985 = vmatpush1.bf16.msra.mxu0 %v963
        %986 = vmatprep.subr.bf16.mxu0 0
        %987 = vmatpush1.bf16.msra.mxu0 %v964
        %988 = vmatprep.subr.bf16.mxu0 0
        %989 = vmatpush1.bf16.msra.mxu0 %v965
        %990 = vmatprep.subr.bf16.mxu0 0
        %991 = vmatpush1.bf16.msra.mxu0 0
        %992 = vmatprep.subr.bf16.mxu0 0
        %993 = vmatpush1.bf16.msra.mxu0 0
        %994 = vmatprep.subr.bf16.mxu0 0
        %995 = vmatpush1.bf16.msra.mxu0 0
        %996 = vmatprep.subr.bf16.mxu0 0
        %997 = vmatpush1.bf16.msra.mxu0 0
        %998 = vmatprep.subr.bf16.mxu0 0
        %999 = vmatpush1.bf16.msra.mxu0 0
        %1000 = vmatprep.subr.bf16.mxu0 0
        %1001 = vmatpush1.bf16.msra.mxu0 0
        %1002 = vmatprep.subr.bf16.mxu0 0
        %1003 = vmatpush1.bf16.msra.mxu0 0
        %1004 = vmatprep.subr.bf16.mxu0 0
        %1005 = vmatpush1.bf16.msra.mxu0 0
        %1006 = vmatprep.mubr.bf16.mxu0 0
        %1007 = vmatmul.mubr.bf16.gmra.mrb[0].mxu0 %v909
        %v1008 = vpop.f32.mrb[0].mxu0
        %v1009 = vadd.f32 0.0, %v1008
        %v1010 = vpop.f32.mrb[0].mxu0
        %v1011 = vpop.f32.mrb[0].mxu0
        %v1012 = vadd.f32 0.0, %v1011
        %v1013 = vpop.f32.mrb[0].mxu0
        %1014 = vdwg.mxu0
        %v1015 = vlaneseq
        %v1016 = vshrl.u32 %v1015, 7
        %v1017 = vsub.s32 6, %v1016
        %v1018 = vrot.slane %v270, %v1017
        %v1019 = vadd.f32 %v1018, %v1009
        %v1020 = vadd.f32 %v1018, %v1012
        %v1021 = vpack.c.bf16 %v906, %v903
        %v1022 = vld [vmem:[#allocation2 + $0x40] sm:$0xf]
        %v1023 = vld [vmem:[#allocation2 + $0x44] sm:$0xf]
        %v1024 = vld [vmem:[#allocation2 + $0x48] sm:$0xf]
        %v1025 = vld [vmem:[#allocation2 + $0x4c] sm:$0xf]
        %v1026 = vld [vmem:[#allocation2 + $0x50] sm:$0xf]
        %v1027 = vld [vmem:[#allocation2 + $0x54] sm:$0xf]
        %v1028 = vld [vmem:[#allocation2 + $0x58] sm:$0xf]
        %v1029 = vld [vmem:[#allocation2 + $0x5c] sm:$0xf]
        %v1030 = vld [vmem:[#allocation2 + $0x60] sm:$0xf]
        %v1031 = vld [vmem:[#allocation2 + $0x64] sm:$0xf]
        %v1032 = vld [vmem:[#allocation2 + $0x68] sm:$0xf]
        %v1033 = vld [vmem:[#allocation2 + $0x6c] sm:$0xf]
        %v1034 = vld [vmem:[#allocation2 + $0x70] sm:$0xf]
        %v1035 = vld [vmem:[#allocation2 + $0x74] sm:$0xf]
        %v1036 = vld [vmem:[#allocation2 + $0x78] sm:$0xf]
        %v1037 = vld [vmem:[#allocation2 + $0x7c] sm:$0xf]
        %v1054 = vunpack.c.l.b16 %v1022
        %v1055 = vunpack.c.l.b16 %v1023
        %v1056 = vunpack.c.l.b16 %v1024
        %v1057 = vunpack.c.l.b16 %v1025
        %v1058 = vunpack.c.l.b16 %v1026
        %v1059 = vunpack.c.l.b16 %v1027
        %v1060 = vunpack.c.l.b16 %v1028
        %v1061 = vunpack.c.l.b16 %v1029
        %v1062 = vunpack.c.l.b16 %v1030
        %v1063 = vunpack.c.l.b16 %v1031
        %v1064 = vunpack.c.l.b16 %v1032
        %v1065 = vunpack.c.l.b16 %v1033
        %v1066 = vunpack.c.l.b16 %v1034
        %v1067 = vunpack.c.l.b16 %v1035
        %v1068 = vunpack.c.l.b16 %v1036
        %v1069 = vunpack.c.l.b16 %v1037
        %v1070 = vpack.c.b16 %v1055, %v1054
        %v1071 = vpack.c.b16 %v1057, %v1056
        %v1072 = vpack.c.b16 %v1059, %v1058
        %v1073 = vpack.c.b16 %v1061, %v1060
        %v1074 = vpack.c.b16 %v1063, %v1062
        %v1075 = vpack.c.b16 %v1065, %v1064
        %v1076 = vpack.c.b16 %v1067, %v1066
        %v1077 = vpack.c.b16 %v1069, %v1068
        %1086 = vmatprep.subr.bf16.mxu0 0
        %1087 = vmatpush1.bf16.msra.mxu0 %v1070
        %1088 = vmatprep.subr.bf16.mxu0 0
        %1089 = vmatpush1.bf16.msra.mxu0 %v1071
        %1090 = vmatprep.subr.bf16.mxu0 0
        %1091 = vmatpush1.bf16.msra.mxu0 %v1072
        %1092 = vmatprep.subr.bf16.mxu0 0
        %1093 = vmatpush1.bf16.msra.mxu0 %v1073
        %1094 = vmatprep.subr.bf16.mxu0 0
        %1095 = vmatpush1.bf16.msra.mxu0 %v1074
        %1096 = vmatprep.subr.bf16.mxu0 0
        %1097 = vmatpush1.bf16.msra.mxu0 %v1075
        %1098 = vmatprep.subr.bf16.mxu0 0
        %1099 = vmatpush1.bf16.msra.mxu0 %v1076
        %1100 = vmatprep.subr.bf16.mxu0 0
        %1101 = vmatpush1.bf16.msra.mxu0 %v1077
        %1102 = vmatprep.subr.bf16.mxu0 0
        %1103 = vmatpush1.bf16.msra.mxu0 0
        %1104 = vmatprep.subr.bf16.mxu0 0
        %1105 = vmatpush1.bf16.msra.mxu0 0
        %1106 = vmatprep.subr.bf16.mxu0 0
        %1107 = vmatpush1.bf16.msra.mxu0 0
        %1108 = vmatprep.subr.bf16.mxu0 0
        %1109 = vmatpush1.bf16.msra.mxu0 0
        %1110 = vmatprep.subr.bf16.mxu0 0
        %1111 = vmatpush1.bf16.msra.mxu0 0
        %1112 = vmatprep.subr.bf16.mxu0 0
        %1113 = vmatpush1.bf16.msra.mxu0 0
        %1114 = vmatprep.subr.bf16.mxu0 0
        %1115 = vmatpush1.bf16.msra.mxu0 0
        %1116 = vmatprep.subr.bf16.mxu0 0
        %1117 = vmatpush1.bf16.msra.mxu0 0
        %1118 = vmatprep.mubr.bf16.mxu0 0
        %1119 = vmatmul.mubr.bf16.gmra.mrb[0].mxu0 %v1021
        %v1120 = vpop.f32.mrb[0].mxu0
        %v1121 = vadd.f32 0.0, %v1120
        %v1122 = vpop.f32.mrb[0].mxu0
        %v1123 = vpop.f32.mrb[0].mxu0
        %v1124 = vadd.f32 0.0, %v1123
        %v1125 = vpop.f32.mrb[0].mxu0
        %1126 = vdwg.mxu0
        %v1127 = vadd.f32 %v1019, %v1121
        %v1128 = vadd.f32 %v1020, %v1124
        %v1129 = vadd.f32 %v310, %v1127
        %v1130 = vadd.f32 %v311, %v1128
        %1131 = vadd.xlane.f32.xlu0 %v1129
        %v1132 = vpop.xlane.xlu0 %1131
        %1133 = vadd.xlane.f32.xlu0 %v1130
        %v1134 = vpop.xlane.xlu0 %1133
        %v1135 = vmul.f32 %v1132, 0.03125
        %v1136 = vmul.f32 %v1134, 0.03125
        %v1137 = vmul.f32 %v1129, %v1129
        %v1138 = vmul.f32 %v1130, %v1130
        %1139 = vadd.xlane.f32.xlu0 %v1137
        %v1140 = vpop.xlane.xlu0 %1139
        %1141 = vadd.xlane.f32.xlu0 %v1138
        %v1142 = vpop.xlane.xlu0 %1141
        %v1143 = vmul.f32 %v1140, 0.03125
        %v1144 = vmul.f32 %v1142, 0.03125
        %v1145 = vmul.f32 %v1135, %v1135
        %v1146 = vmul.f32 %v1136, %v1136
        %v1147 = vsub.f32 %v1143, %v1145
        %v1148 = vsub.f32 %v1144, %v1146
        %v1149 = vmax.f32 %v1147, 0.0
        %v1150 = vmax.f32 %v1148, 0.0
        %v1151 = vsub.f32 %v1129, %v1135
        %v1152 = vsub.f32 %v1130, %v1136
        %v1153 = vadd.f32 %v1149, 1e-12
        %v1154 = vadd.f32 %v1150, 1e-12
        %v1155 = vrsqrt.pop %v1153
        %v1156 = vrsqrt.pop %v1154
        %v1157 = vmul.f32 %v1151, %v1155
        %v1158 = vmul.f32 %v1152, %v1156
        %v1159 = vlaneseq
        %v1160 = vshrl.u32 %v1159, 7
        %v1161 = vsub.s32 7, %v1160
        %v1162 = vrot.slane %v270, %v1161
        %v1163 = vmul.f32 %v1157, %v1162
        %v1164 = vmul.f32 %v1158, %v1162
        %v1165 = vlaneseq
        %v1166 = vshrl.u32 %v1165, 7
        %v1167 = vsub.s32 0, %v1166
        %v1168 = vrot.slane %v271, %v1167
        %v1169 = vadd.f32 %v1163, %v1168
        %v1170 = vadd.f32 %v1164, %v1168
        %v1171 = vpack.c.bf16 %v1170, %v1169
        %v1172 = vld [vmem:[#allocation2 + $0x80] sm:$0xf]
        %v1173 = vld [vmem:[#allocation2 + $0x84] sm:$0xf]
        %v1174 = vld [vmem:[#allocation2 + $0x88] sm:$0xf]
        %v1175 = vld [vmem:[#allocation2 + $0x8c] sm:$0xf]
        %v1176 = vld [vmem:[#allocation2 + $0x90] sm:$0xf]
        %v1177 = vld [vmem:[#allocation2 + $0x94] sm:$0xf]
        %v1178 = vld [vmem:[#allocation2 + $0x98] sm:$0xf]
        %v1179 = vld [vmem:[#allocation2 + $0x9c] sm:$0xf]
        %v1180 = vld [vmem:[#allocation2 + $0xa0] sm:$0xf]
        %v1181 = vld [vmem:[#allocation2 + $0xa4] sm:$0xf]
        %v1182 = vld [vmem:[#allocation2 + $0xa8] sm:$0xf]
        %v1183 = vld [vmem:[#allocation2 + $0xac] sm:$0xf]
        %v1184 = vld [vmem:[#allocation2 + $0xb0] sm:$0xf]
        %v1185 = vld [vmem:[#allocation2 + $0xb4] sm:$0xf]
        %v1186 = vld [vmem:[#allocation2 + $0xb8] sm:$0xf]
        %v1187 = vld [vmem:[#allocation2 + $0xbc] sm:$0xf]
        %v1188 = vlaneseq
        %v1189 = vshrl.u32 %v1188, 7
        %v1190 = vsub.s32 1, %v1189
        %v1191 = vrot.slane %v271, %v1190
        %v1208 = vunpack.c.l.b16 %v1172
        %v1209 = vunpack.c.l.b16 %v1173
        %v1210 = vunpack.c.l.b16 %v1174
        %v1211 = vunpack.c.l.b16 %v1175
        %v1212 = vunpack.c.l.b16 %v1176
        %v1213 = vunpack.c.l.b16 %v1177
        %v1214 = vunpack.c.l.b16 %v1178
        %v1215 = vunpack.c.l.b16 %v1179
        %v1216 = vunpack.c.l.b16 %v1180
        %v1217 = vunpack.c.l.b16 %v1181
        %v1218 = vunpack.c.l.b16 %v1182
        %v1219 = vunpack.c.l.b16 %v1183
        %v1220 = vunpack.c.l.b16 %v1184
        %v1221 = vunpack.c.l.b16 %v1185
        %v1222 = vunpack.c.l.b16 %v1186
        %v1223 = vunpack.c.l.b16 %v1187
        %v1224 = vpack.c.b16 %v1209, %v1208
        %v1225 = vpack.c.b16 %v1211, %v1210
        %v1226 = vpack.c.b16 %v1213, %v1212
        %v1227 = vpack.c.b16 %v1215, %v1214
        %v1228 = vpack.c.b16 %v1217, %v1216
        %v1229 = vpack.c.b16 %v1219, %v1218
        %v1230 = vpack.c.b16 %v1221, %v1220
        %v1231 = vpack.c.b16 %v1223, %v1222
        %1240 = vmatprep.subr.bf16.mxu0 0
        %1241 = vmatpush1.bf16.msra.mxu0 %v1224
        %1242 = vmatprep.subr.bf16.mxu0 0
        %1243 = vmatpush1.bf16.msra.mxu0 %v1225
        %1244 = vmatprep.subr.bf16.mxu0 0
        %1245 = vmatpush1.bf16.msra.mxu0 %v1226
        %1246 = vmatprep.subr.bf16.mxu0 0
        %1247 = vmatpush1.bf16.msra.mxu0 %v1227
        %1248 = vmatprep.subr.bf16.mxu0 0
        %1249 = vmatpush1.bf16.msra.mxu0 %v1228
        %1250 = vmatprep.subr.bf16.mxu0 0
        %1251 = vmatpush1.bf16.msra.mxu0 %v1229
        %1252 = vmatprep.subr.bf16.mxu0 0
        %1253 = vmatpush1.bf16.msra.mxu0 %v1230
        %1254 = vmatprep.subr.bf16.mxu0 0
        %1255 = vmatpush1.bf16.msra.mxu0 %v1231
        %1256 = vmatprep.subr.bf16.mxu0 0
        %1257 = vmatpush1.bf16.msra.mxu0 0
        %1258 = vmatprep.subr.bf16.mxu0 0
        %1259 = vmatpush1.bf16.msra.mxu0 0
        %1260 = vmatprep.subr.bf16.mxu0 0
        %1261 = vmatpush1.bf16.msra.mxu0 0
        %1262 = vmatprep.subr.bf16.mxu0 0
        %1263 = vmatpush1.bf16.msra.mxu0 0
        %1264 = vmatprep.subr.bf16.mxu0 0
        %1265 = vmatpush1.bf16.msra.mxu0 0
        %1266 = vmatprep.subr.bf16.mxu0 0
        %1267 = vmatpush1.bf16.msra.mxu0 0
        %1268 = vmatprep.subr.bf16.mxu0 0
        %1269 = vmatpush1.bf16.msra.mxu0 0
        %1270 = vmatprep.subr.bf16.mxu0 0
        %1271 = vmatpush1.bf16.msra.mxu0 0
        %1272 = vmatprep.mubr.bf16.mxu0 0
        %1273 = vmatmul.mubr.bf16.gmra.mrb[0].mxu0 %v1171
        %v1274 = vpop.f32.mrb[0].mxu0
        %v1275 = vadd.f32 %v1191, %v1274
        %v1276 = vpop.f32.mrb[0].mxu0
        %v1277 = vpop.f32.mrb[0].mxu0
        %v1278 = vadd.f32 %v1191, %v1277
        %v1279 = vpop.f32.mrb[0].mxu0
        %1280 = vdwg.mxu0
        %v1281 = vmul.f32 %v1275, 0.5
        %v1282 = vmul.f32 %v1278, 0.5
        %v1283 = vmul.f32 %v1275, 0.044715
        %v1284 = vmul.f32 %v1278, 0.044715
        %v1285 = vmul.f32 %v1283, %v1275
        %v1286 = vmul.f32 %v1284, %v1278
        %v1287 = vmul.f32 %v1285, %v1275
        %v1288 = vmul.f32 %v1286, %v1278
        %v1289 = vadd.f32 %v1275, %v1287
        %v1290 = vadd.f32 %v1278, %v1288
        %v1291 = vmul.f32 %v1289, 0.7978846
        %v1292 = vmul.f32 %v1290, 0.7978846
        %v1293 = vtanh.pop %v1291
        %v1294 = vtanh.pop %v1292
        %v1295 = vadd.f32 %v1293, 1.0
        %v1296 = vadd.f32 %v1294, 1.0
        %v1297 = vmul.f32 %v1281, %v1295
        %v1298 = vmul.f32 %v1282, %v1296
        %v1299 = vpack.c.bf16 %v1298, %v1297
        %v1300 = vld [vmem:[#allocation2 + $0xc0] sm:$0xf]
        %v1301 = vld [vmem:[#allocation2 + $0xc4] sm:$0xf]
        %v1302 = vld [vmem:[#allocation2 + $0xc8] sm:$0xf]
        %v1303 = vld [vmem:[#allocation2 + $0xcc] sm:$0xf]
        %v1304 = vld [vmem:[#allocation2 + $0xd0] sm:$0xf]
        %v1305 = vld [vmem:[#allocation2 + $0xd4] sm:$0xf]
        %v1306 = vld [vmem:[#allocation2 + $0xd8] sm:$0xf]
        %v1307 = vld [vmem:[#allocation2 + $0xdc] sm:$0xf]
        %v1308 = vld [vmem:[#allocation2 + $0xe0] sm:$0xf]
        %v1309 = vld [vmem:[#allocation2 + $0xe4] sm:$0xf]
        %v1310 = vld [vmem:[#allocation2 + $0xe8] sm:$0xf]
        %v1311 = vld [vmem:[#allocation2 + $0xec] sm:$0xf]
        %v1312 = vld [vmem:[#allocation2 + $0xf0] sm:$0xf]
        %v1313 = vld [vmem:[#allocation2 + $0xf4] sm:$0xf]
        %v1314 = vld [vmem:[#allocation2 + $0xf8] sm:$0xf]
        %v1315 = vld [vmem:[#allocation2 + $0xfc] sm:$0xf]
        %v1316 = vlaneseq
        %v1317 = vshrl.u32 %v1316, 7
        %v1318 = vsub.s32 2, %v1317
        %v1319 = vrot.slane %v271, %v1318
        %v1336 = vunpack.c.l.b16 %v1300
        %v1337 = vunpack.c.l.b16 %v1301
        %v1338 = vunpack.c.l.b16 %v1302
        %v1339 = vunpack.c.l.b16 %v1303
        %v1340 = vunpack.c.l.b16 %v1304
        %v1341 = vunpack.c.l.b16 %v1305
        %v1342 = vunpack.c.l.b16 %v1306
        %v1343 = vunpack.c.l.b16 %v1307
        %v1344 = vunpack.c.l.b16 %v1308
        %v1345 = vunpack.c.l.b16 %v1309
        %v1346 = vunpack.c.l.b16 %v1310
        %v1347 = vunpack.c.l.b16 %v1311
        %v1348 = vunpack.c.l.b16 %v1312
        %v1349 = vunpack.c.l.b16 %v1313
        %v1350 = vunpack.c.l.b16 %v1314
        %v1351 = vunpack.c.l.b16 %v1315
        %v1352 = vpack.c.b16 %v1337, %v1336
        %v1353 = vpack.c.b16 %v1339, %v1338
        %v1354 = vpack.c.b16 %v1341, %v1340
        %v1355 = vpack.c.b16 %v1343, %v1342
        %v1356 = vpack.c.b16 %v1345, %v1344
        %v1357 = vpack.c.b16 %v1347, %v1346
        %v1358 = vpack.c.b16 %v1349, %v1348
        %v1359 = vpack.c.b16 %v1351, %v1350
        %1368 = vmatprep.subr.bf16.mxu0 0
        %1369 = vmatpush1.bf16.msra.mxu0 %v1352
        %1370 = vmatprep.subr.bf16.mxu0 0
        %1371 = vmatpush1.bf16.msra.mxu0 %v1353
        %1372 = vmatprep.subr.bf16.mxu0 0
        %1373 = vmatpush1.bf16.msra.mxu0 %v1354
        %1374 = vmatprep.subr.bf16.mxu0 0
        %1375 = vmatpush1.bf16.msra.mxu0 %v1355
        %1376 = vmatprep.subr.bf16.mxu0 0
        %1377 = vmatpush1.bf16.msra.mxu0 %v1356
        %1378 = vmatprep.subr.bf16.mxu0 0
        %1379 = vmatpush1.bf16.msra.mxu0 %v1357
        %1380 = vmatprep.subr.bf16.mxu0 0
        %1381 = vmatpush1.bf16.msra.mxu0 %v1358
        %1382 = vmatprep.subr.bf16.mxu0 0
        %1383 = vmatpush1.bf16.msra.mxu0 %v1359
        %1384 = vmatprep.subr.bf16.mxu0 0
        %1385 = vmatpush1.bf16.msra.mxu0 0
        %1386 = vmatprep.subr.bf16.mxu0 0
        %1387 = vmatpush1.bf16.msra.mxu0 0
        %1388 = vmatprep.subr.bf16.mxu0 0
        %1389 = vmatpush1.bf16.msra.mxu0 0
        %1390 = vmatprep.subr.bf16.mxu0 0
        %1391 = vmatpush1.bf16.msra.mxu0 0
        %1392 = vmatprep.subr.bf16.mxu0 0
        %1393 = vmatpush1.bf16.msra.mxu0 0
        %1394 = vmatprep.subr.bf16.mxu0 0
        %1395 = vmatpush1.bf16.msra.mxu0 0
        %1396 = vmatprep.subr.bf16.mxu0 0
        %1397 = vmatpush1.bf16.msra.mxu0 0
        %1398 = vmatprep.subr.bf16.mxu0 0
        %1399 = vmatpush1.bf16.msra.mxu0 0
        %1400 = vmatprep.mubr.bf16.mxu0 0
        %1401 = vmatmul.mubr.bf16.gmra.mrb[0].mxu0 %v1299
        %v1402 = vpop.f32.mrb[0].mxu0
        %v1403 = vadd.f32 %v1319, %v1402
        %v1404 = vpop.f32.mrb[0].mxu0
        %v1405 = vpop.f32.mrb[0].mxu0
        %v1406 = vadd.f32 %v1319, %v1405
        %v1407 = vpop.f32.mrb[0].mxu0
        %1408 = vdwg.mxu0
        %v1409 = vadd.f32 %v1169, %v1403
        %v1410 = vadd.f32 %v1170, %v1406
        %1411 = vadd.xlane.f32.xlu0 %v1409
        %v1412 = vpop.xlane.xlu0 %1411
        %1413 = vadd.xlane.f32.xlu0 %v1410
        %v1414 = vpop.xlane.xlu0 %1413
        %v1415 = vmul.f32 %v1412, 0.03125
        %v1416 = vmul.f32 %v1414, 0.03125
        %v1417 = vmul.f32 %v1409, %v1409
        %v1418 = vmul.f32 %v1410, %v1410
        %1419 = vadd.xlane.f32.xlu0 %v1417
        %v1420 = vpop.xlane.xlu0 %1419
        %1421 = vadd.xlane.f32.xlu0 %v1418
        %v1422 = vpop.xlane.xlu0 %1421
        %v1423 = vmul.f32 %v1420, 0.03125
        %v1424 = vmul.f32 %v1422, 0.03125
        %v1425 = vmul.f32 %v1415, %v1415
        %v1426 = vmul.f32 %v1416, %v1416
        %v1427 = vsub.f32 %v1423, %v1425
        %v1428 = vsub.f32 %v1424, %v1426
        %v1429 = vmax.f32 %v1427, 0.0
        %v1430 = vmax.f32 %v1428, 0.0
        %v1431 = vsub.f32 %v1409, %v1415
        %v1432 = vsub.f32 %v1410, %v1416
        %v1433 = vadd.f32 %v1429, 1e-12
        %v1434 = vadd.f32 %v1430, 1e-12
        %v1435 = vrsqrt.pop %v1433
        %v1436 = vrsqrt.pop %v1434
        %v1437 = vmul.f32 %v1431, %v1435
        %v1438 = vmul.f32 %v1432, %v1436
        %v1439 = vlaneseq
        %v1440 = vshrl.u32 %v1439, 7
        %v1441 = vsub.s32 3, %v1440
        %v1442 = vrot.slane %v271, %v1441
        %v1443 = vmul.f32 %v1437, %v1442
        %v1444 = vmul.f32 %v1438, %v1442
        %v1445 = vlaneseq
        %v1446 = vshrl.u32 %v1445, 7
        %v1447 = vsub.s32 4, %v1446
        %v1448 = vrot.slane %v271, %v1447
        %v1449 = vadd.f32 %v1443, %v1448
        %v1450 = vadd.f32 %v1444, %v1448
        %s1451 = scalar_lea.vmem %s4, 16
        %v1452 = vld [vmem:[%s1451] sm:$0xff]
        %v1453 = vld [vmem:[%s1451 + $0x8] sm:$0xff]
        %v1454 = vpack.c.bf16 %v1450, %v1449
        %s1455 = scalar_lea.vmem %s2, 384
        %v1456 = vld [vmem:[%s1455] sm:$0xff]
        %v1457 = vld [vmem:[%s1455 + $0x8] sm:$0xff]
        %v1458 = vld [vmem:[%s1455 + $0x10] sm:$0xff]
        %v1459 = vld [vmem:[%s1455 + $0x18] sm:$0xff]
        %v1460 = vld [vmem:[%s1455 + $0x20] sm:$0xff]
        %v1461 = vld [vmem:[%s1455 + $0x28] sm:$0xff]
        %v1462 = vld [vmem:[%s1455 + $0x30] sm:$0xff]
        %v1463 = vld [vmem:[%s1455 + $0x38] sm:$0xff]
        %v1464 = vld [vmem:[%s1455 + $0x40] sm:$0xff]
        %v1465 = vld [vmem:[%s1455 + $0x48] sm:$0xff]
        %v1466 = vld [vmem:[%s1455 + $0x50] sm:$0xff]
        %v1467 = vld [vmem:[%s1455 + $0x58] sm:$0xff]
        %v1468 = vld [vmem:[%s1455 + $0x60] sm:$0xff]
        %v1469 = vld [vmem:[%s1455 + $0x68] sm:$0xff]
        %v1470 = vld [vmem:[%s1455 + $0x70] sm:$0xff]
        %v1471 = vld [vmem:[%s1455 + $0x78] sm:$0xff]
        %v1472 = vld [vmem:[%s1455 + $0x80] sm:$0xff]
        %v1473 = vld [vmem:[%s1455 + $0x88] sm:$0xff]
        %v1474 = vld [vmem:[%s1455 + $0x90] sm:$0xff]
        %v1475 = vld [vmem:[%s1455 + $0x98] sm:$0xff]
        %v1476 = vld [vmem:[%s1455 + $0xa0] sm:$0xff]
        %v1477 = vld [vmem:[%s1455 + $0xa8] sm:$0xff]
        %v1478 = vld [vmem:[%s1455 + $0xb0] sm:$0xff]
        %v1479 = vld [vmem:[%s1455 + $0xb8] sm:$0xff]
        %v1480 = vld [vmem:[%s1455 + $0xc0] sm:$0xff]
        %v1481 = vld [vmem:[%s1455 + $0xc8] sm:$0xff]
        %v1482 = vld [vmem:[%s1455 + $0xd0] sm:$0xff]
        %v1483 = vld [vmem:[%s1455 + $0xd8] sm:$0xff]
        %v1484 = vld [vmem:[%s1455 + $0xe0] sm:$0xff]
        %v1485 = vld [vmem:[%s1455 + $0xe8] sm:$0xff]
        %v1486 = vld [vmem:[%s1455 + $0xf0] sm:$0xff]
        %v1487 = vld [vmem:[%s1455 + $0xf8] sm:$0xff]
        %v1488 = vld [vmem:[%s1455 + $0x100] sm:$0xff]
        %v1489 = vld [vmem:[%s1455 + $0x108] sm:$0xff]
        %v1490 = vld [vmem:[%s1455 + $0x110] sm:$0xff]
        %v1491 = vld [vmem:[%s1455 + $0x118] sm:$0xff]
        %v1492 = vld [vmem:[%s1455 + $0x120] sm:$0xff]
        %v1493 = vld [vmem:[%s1455 + $0x128] sm:$0xff]
        %v1494 = vld [vmem:[%s1455 + $0x130] sm:$0xff]
        %v1495 = vld [vmem:[%s1455 + $0x138] sm:$0xff]
        %v1496 = vld [vmem:[%s1455 + $0x140] sm:$0xff]
        %v1497 = vld [vmem:[%s1455 + $0x148] sm:$0xff]
        %v1498 = vld [vmem:[%s1455 + $0x150] sm:$0xff]
        %v1499 = vld [vmem:[%s1455 + $0x158] sm:$0xff]
        %v1500 = vld [vmem:[%s1455 + $0x160] sm:$0xff]
        %v1501 = vld [vmem:[%s1455 + $0x168] sm:$0xff]
        %v1502 = vld [vmem:[%s1455 + $0x170] sm:$0xff]
        %v1503 = vld [vmem:[%s1455 + $0x178] sm:$0xff]
        %v1552 = vunpack.c.l.b16 %v1456
        %v1553 = vunpack.c.h.b16 %v1456
        %v1554 = vunpack.c.l.b16 %v1457
        %v1555 = vunpack.c.h.b16 %v1457
        %v1556 = vunpack.c.l.b16 %v1458
        %v1557 = vunpack.c.h.b16 %v1458
        %v1558 = vunpack.c.l.b16 %v1459
        %v1559 = vunpack.c.h.b16 %v1459
        %v1560 = vunpack.c.l.b16 %v1460
        %v1561 = vunpack.c.h.b16 %v1460
        %v1562 = vunpack.c.l.b16 %v1461
        %v1563 = vunpack.c.h.b16 %v1461
        %v1564 = vunpack.c.l.b16 %v1462
        %v1565 = vunpack.c.h.b16 %v1462
        %v1566 = vunpack.c.l.b16 %v1463
        %v1567 = vunpack.c.h.b16 %v1463
        %v1568 = vunpack.c.l.b16 %v1464
        %v1569 = vunpack.c.h.b16 %v1464
        %v1570 = vunpack.c.l.b16 %v1465
        %v1571 = vunpack.c.h.b16 %v1465
        %v1572 = vunpack.c.l.b16 %v1466
        %v1573 = vunpack.c.h.b16 %v1466
        %v1574 = vunpack.c.l.b16 %v1467
        %v1575 = vunpack.c.h.b16 %v1467
        %v1576 = vunpack.c.l.b16 %v1468
        %v1577 = vunpack.c.h.b16 %v1468
        %v1578 = vunpack.c.l.b16 %v1469
        %v1579 = vunpack.c.h.b16 %v1469
        %v1580 = vunpack.c.l.b16 %v1470
        %v1581 = vunpack.c.h.b16 %v1470
        %v1582 = vunpack.c.l.b16 %v1471
        %v1583 = vunpack.c.h.b16 %v1471
        %v1584 = vunpack.c.l.b16 %v1472
        %v1585 = vunpack.c.h.b16 %v1472
        %v1586 = vunpack.c.l.b16 %v1473
        %v1587 = vunpack.c.h.b16 %v1473
        %v1588 = vunpack.c.l.b16 %v1474
        %v1589 = vunpack.c.h.b16 %v1474
        %v1590 = vunpack.c.l.b16 %v1475
        %v1591 = vunpack.c.h.b16 %v1475
        %v1592 = vunpack.c.l.b16 %v1476
        %v1593 = vunpack.c.h.b16 %v1476
        %v1594 = vunpack.c.l.b16 %v1477
        %v1595 = vunpack.c.h.b16 %v1477
        %v1596 = vunpack.c.l.b16 %v1478
        %v1597 = vunpack.c.h.b16 %v1478
        %v1598 = vunpack.c.l.b16 %v1479
        %v1599 = vunpack.c.h.b16 %v1479
        %v1600 = vunpack.c.l.b16 %v1480
        %v1601 = vunpack.c.h.b16 %v1480
        %v1602 = vunpack.c.l.b16 %v1481
        %v1603 = vunpack.c.h.b16 %v1481
        %v1604 = vunpack.c.l.b16 %v1482
        %v1605 = vunpack.c.h.b16 %v1482
        %v1606 = vunpack.c.l.b16 %v1483
        %v1607 = vunpack.c.h.b16 %v1483
        %v1608 = vunpack.c.l.b16 %v1484
        %v1609 = vunpack.c.h.b16 %v1484
        %v1610 = vunpack.c.l.b16 %v1485
        %v1611 = vunpack.c.h.b16 %v1485
        %v1612 = vunpack.c.l.b16 %v1486
        %v1613 = vunpack.c.h.b16 %v1486
        %v1614 = vunpack.c.l.b16 %v1487
        %v1615 = vunpack.c.h.b16 %v1487
        %v1616 = vunpack.c.l.b16 %v1488
        %v1617 = vunpack.c.h.b16 %v1488
        %v1618 = vunpack.c.l.b16 %v1489
        %v1619 = vunpack.c.h.b16 %v1489
        %v1620 = vunpack.c.l.b16 %v1490
        %v1621 = vunpack.c.h.b16 %v1490
        %v1622 = vunpack.c.l.b16 %v1491
        %v1623 = vunpack.c.h.b16 %v1491
        %v1624 = vunpack.c.l.b16 %v1492
        %v1625 = vunpack.c.h.b16 %v1492
        %v1626 = vunpack.c.l.b16 %v1493
        %v1627 = vunpack.c.h.b16 %v1493
        %v1628 = vunpack.c.l.b16 %v1494
        %v1629 = vunpack.c.h.b16 %v1494
        %v1630 = vunpack.c.l.b16 %v1495
        %v1631 = vunpack.c.h.b16 %v1495
        %v1632 = vunpack.c.l.b16 %v1496
        %v1633 = vunpack.c.h.b16 %v1496
        %v1634 = vunpack.c.l.b16 %v1497
        %v1635 = vunpack.c.h.b16 %v1497
        %v1636 = vunpack.c.l.b16 %v1498
        %v1637 = vunpack.c.h.b16 %v1498
        %v1638 = vunpack.c.l.b16 %v1499
        %v1639 = vunpack.c.h.b16 %v1499
        %v1640 = vunpack.c.l.b16 %v1500
        %v1641 = vunpack.c.h.b16 %v1500
        %v1642 = vunpack.c.l.b16 %v1501
        %v1643 = vunpack.c.h.b16 %v1501
        %v1644 = vunpack.c.l.b16 %v1502
        %v1645 = vunpack.c.h.b16 %v1502
        %v1646 = vunpack.c.l.b16 %v1503
        %v1647 = vunpack.c.h.b16 %v1503
        %v1648 = vpack.c.b16 %v1558, %v1552
        %v1649 = vpack.c.b16 %v1559, %v1553
        %v1650 = vpack.c.b16 %v1560, %v1554
        %v1651 = vpack.c.b16 %v1561, %v1555
        %v1652 = vpack.c.b16 %v1562, %v1556
        %v1653 = vpack.c.b16 %v1563, %v1557
        %v1654 = vpack.c.b16 %v1570, %v1564
        %v1655 = vpack.c.b16 %v1571, %v1565
        %v1656 = vpack.c.b16 %v1572, %v1566
        %v1657 = vpack.c.b16 %v1573, %v1567
        %v1658 = vpack.c.b16 %v1574, %v1568
        %v1659 = vpack.c.b16 %v1575, %v1569
        %v1660 = vpack.c.b16 %v1582, %v1576
        %v1661 = vpack.c.b16 %v1583, %v1577
        %v1662 = vpack.c.b16 %v1584, %v1578
        %v1663 = vpack.c.b16 %v1585, %v1579
        %v1664 = vpack.c.b16 %v1586, %v1580
        %v1665 = vpack.c.b16 %v1587, %v1581
        %v1666 = vpack.c.b16 %v1594, %v1588
        %v1667 = vpack.c.b16 %v1595, %v1589
        %v1668 = vpack.c.b16 %v1596, %v1590
        %v1669 = vpack.c.b16 %v1597, %v1591
        %v1670 = vpack.c.b16 %v1598, %v1592
        %v1671 = vpack.c.b16 %v1599, %v1593
        %v1672 = vpack.c.b16 %v1606, %v1600
        %v1673 = vpack.c.b16 %v1607, %v1601
        %v1674 = vpack.c.b16 %v1608, %v1602
        %v1675 = vpack.c.b16 %v1609, %v1603
        %v1676 = vpack.c.b16 %v1610, %v1604
        %v1677 = vpack.c.b16 %v1611, %v1605
        %v1678 = vpack.c.b16 %v1618, %v1612
        %v1679 = vpack.c.b16 %v1619, %v1613
        %v1680 = vpack.c.b16 %v1620, %v1614
        %v1681 = vpack.c.b16 %v1621, %v1615
        %v1682 = vpack.c.b16 %v1622, %v1616
        %v1683 = vpack.c.b16 %v1623, %v1617
        %v1684 = vpack.c.b16 %v1630, %v1624
        %v1685 = vpack.c.b16 %v1631, %v1625
        %v1686 = vpack.c.b16 %v1632, %v1626
        %v1687 = vpack.c.b16 %v1633, %v1627
        %v1688 = vpack.c.b16 %v1634, %v1628
        %v1689 = vpack.c.b16 %v1635, %v1629
        %v1690 = vpack.c.b16 %v1642, %v1636
        %v1691 = vpack.c.b16 %v1643, %v1637
        %v1692 = vpack.c.b16 %v1644, %v1638
        %v1693 = vpack.c.b16 %v1645, %v1639
        %v1694 = vpack.c.b16 %v1646, %v1640
        %v1695 = vpack.c.b16 %v1647, %v1641
        %1744 = vmatprep.subr.bf16.mxu0 %v1649
        %1745 = vmatpush1.bf16.msra.mxu0 %v1648
        %1746 = vmatprep.subr.bf16.mxu0 %v1655
        %1747 = vmatpush1.bf16.msra.mxu0 %v1654
        %1748 = vmatprep.subr.bf16.mxu0 %v1661
        %1749 = vmatpush1.bf16.msra.mxu0 %v1660
        %1750 = vmatprep.subr.bf16.mxu0 %v1667
        %1751 = vmatpush1.bf16.msra.mxu0 %v1666
        %1752 = vmatprep.subr.bf16.mxu0 %v1673
        %1753 = vmatpush1.bf16.msra.mxu0 %v1672
        %1754 = vmatprep.subr.bf16.mxu0 %v1679
        %1755 = vmatpush1.bf16.msra.mxu0 %v1678
        %1756 = vmatprep.subr.bf16.mxu0 %v1685
        %1757 = vmatpush1.bf16.msra.mxu0 %v1684
        %1758 = vmatprep.subr.bf16.mxu0 %v1691
        %1759 = vmatpush1.bf16.msra.mxu0 %v1690
        %1760 = vmatprep.subr.bf16.mxu0 0
        %1761 = vmatpush1.bf16.msra.mxu0 0
        %1762 = vmatprep.subr.bf16.mxu0 0
        %1763 = vmatpush1.bf16.msra.mxu0 0
        %1764 = vmatprep.subr.bf16.mxu0 0
        %1765 = vmatpush1.bf16.msra.mxu0 0
        %1766 = vmatprep.subr.bf16.mxu0 0
        %1767 = vmatpush1.bf16.msra.mxu0 0
        %1768 = vmatprep.subr.bf16.mxu0 0
        %1769 = vmatpush1.bf16.msra.mxu0 0
        %1770 = vmatprep.subr.bf16.mxu0 0
        %1771 = vmatpush1.bf16.msra.mxu0 0
        %1772 = vmatprep.subr.bf16.mxu0 0
        %1773 = vmatpush1.bf16.msra.mxu0 0
        %1774 = vmatprep.subr.bf16.mxu0 0
        %1775 = vmatpush1.bf16.msra.mxu0 0
        %1776 = vmatprep.mubr.bf16.mxu0 0
        %1777 = vmatmul.mubr.bf16.gmra.mrb[0].mxu0 %v1454
        %v1778 = vpop.f32.mrb[0].mxu0
        %v1779 = vadd.f32 0.0, %v1778
        %v1780 = vpop.f32.mrb[0].mxu0
        %v1781 = vadd.f32 0.0, %v1780
        %v1782 = vpop.f32.mrb[0].mxu0
        %v1783 = vadd.f32 0.0, %v1782
        %v1784 = vpop.f32.mrb[0].mxu0
        %v1785 = vadd.f32 0.0, %v1784
        %1786 = vdwg.mxu0
        %1787 = vmatprep.subr.bf16.mxu0 %v1651
        %1788 = vmatpush1.bf16.msra.mxu0 %v1650
        %1789 = vmatprep.subr.bf16.mxu0 %v1657
        %1790 = vmatpush1.bf16.msra.mxu0 %v1656
        %1791 = vmatprep.subr.bf16.mxu0 %v1663
        %1792 = vmatpush1.bf16.msra.mxu0 %v1662
        %1793 = vmatprep.subr.bf16.mxu0 %v1669
        %1794 = vmatpush1.bf16.msra.mxu0 %v1668
        %1795 = vmatprep.subr.bf16.mxu0 %v1675
        %1796 = vmatpush1.bf16.msra.mxu0 %v1674
        %1797 = vmatprep.subr.bf16.mxu0 %v1681
        %1798 = vmatpush1.bf16.msra.mxu0 %v1680
        %1799 = vmatprep.subr.bf16.mxu0 %v1687
        %1800 = vmatpush1.bf16.msra.mxu0 %v1686
        %1801 = vmatprep.subr.bf16.mxu0 %v1693
        %1802 = vmatpush1.bf16.msra.mxu0 %v1692
        %1803 = vmatprep.subr.bf16.mxu0 0
        %1804 = vmatpush1.bf16.msra.mxu0 0
        %1805 = vmatprep.subr.bf16.mxu0 0
        %1806 = vmatpush1.bf16.msra.mxu0 0
        %1807 = vmatprep.subr.bf16.mxu0 0
        %1808 = vmatpush1.bf16.msra.mxu0 0
        %1809 = vmatprep.subr.bf16.mxu0 0
        %1810 = vmatpush1.bf16.msra.mxu0 0
        %1811 = vmatprep.subr.bf16.mxu0 0
        %1812 = vmatpush1.bf16.msra.mxu0 0
        %1813 = vmatprep.subr.bf16.mxu0 0
        %1814 = vmatpush1.bf16.msra.mxu0 0
        %1815 = vmatprep.subr.bf16.mxu0 0
        %1816 = vmatpush1.bf16.msra.mxu0 0
        %1817 = vmatprep.subr.bf16.mxu0 0
        %1818 = vmatpush1.bf16.msra.mxu0 0
        %1819 = vmatprep.mubr.bf16.mxu0 0
        %1820 = vmatmul.mubr.bf16.gmra.mrb[0].mxu0 %v1454
        %v1821 = vpop.f32.mrb[0].mxu0
        %v1822 = vadd.f32 0.0, %v1821
        %v1823 = vpop.f32.mrb[0].mxu0
        %v1824 = vadd.f32 0.0, %v1823
        %v1825 = vpop.f32.mrb[0].mxu0
        %v1826 = vadd.f32 0.0, %v1825
        %v1827 = vpop.f32.mrb[0].mxu0
        %v1828 = vadd.f32 0.0, %v1827
        %1829 = vdwg.mxu0
        %1830 = vmatprep.subr.bf16.mxu0 %v1653
        %1831 = vmatpush1.bf16.msra.mxu0 %v1652
        %1832 = vmatprep.subr.bf16.mxu0 %v1659
        %1833 = vmatpush1.bf16.msra.mxu0 %v1658
        %1834 = vmatprep.subr.bf16.mxu0 %v1665
        %1835 = vmatpush1.bf16.msra.mxu0 %v1664
        %1836 = vmatprep.subr.bf16.mxu0 %v1671
        %1837 = vmatpush1.bf16.msra.mxu0 %v1670
        %1838 = vmatprep.subr.bf16.mxu0 %v1677
        %1839 = vmatpush1.bf16.msra.mxu0 %v1676
        %1840 = vmatprep.subr.bf16.mxu0 %v1683
        %1841 = vmatpush1.bf16.msra.mxu0 %v1682
        %1842 = vmatprep.subr.bf16.mxu0 %v1689
        %1843 = vmatpush1.bf16.msra.mxu0 %v1688
        %1844 = vmatprep.subr.bf16.mxu0 %v1695
        %1845 = vmatpush1.bf16.msra.mxu0 %v1694
        %1846 = vmatprep.subr.bf16.mxu0 0
        %1847 = vmatpush1.bf16.msra.mxu0 0
        %1848 = vmatprep.subr.bf16.mxu0 0
        %1849 = vmatpush1.bf16.msra.mxu0 0
        %1850 = vmatprep.subr.bf16.mxu0 0
        %1851 = vmatpush1.bf16.msra.mxu0 0
        %1852 = vmatprep.subr.bf16.mxu0 0
        %1853 = vmatpush1.bf16.msra.mxu0 0
        %1854 = vmatprep.subr.bf16.mxu0 0
        %1855 = vmatpush1.bf16.msra.mxu0 0
        %1856 = vmatprep.subr.bf16.mxu0 0
        %1857 = vmatpush1.bf16.msra.mxu0 0
        %1858 = vmatprep.subr.bf16.mxu0 0
        %1859 = vmatpush1.bf16.msra.mxu0 0
        %1860 = vmatprep.subr.bf16.mxu0 0
        %1861 = vmatpush1.bf16.msra.mxu0 0
        %1862 = vmatprep.mubr.bf16.mxu0 0
        %1863 = vmatmul.mubr.bf16.gmra.mrb[0].mxu0 %v1454
        %v1864 = vpop.f32.mrb[0].mxu0
        %v1865 = vadd.f32 0.0, %v1864
        %v1866 = vpop.f32.mrb[0].mxu0
        %v1867 = vadd.f32 0.0, %v1866
        %v1868 = vpop.f32.mrb[0].mxu0
        %v1869 = vadd.f32 0.0, %v1868
        %v1870 = vpop.f32.mrb[0].mxu0
        %v1871 = vadd.f32 0.0, %v1870
        %1872 = vdwg.mxu0
        %v1873 = vlaneseq
        %v1874 = vshrl.u32 %v1873, 7
        %v1875 = vsub.s32 0, %v1874
        %v1876 = vrot.slane %v1452, %v1875
        %v1877 = vadd.f32 %v1779, %v1876
        %v1878 = vadd.f32 %v1783, %v1876
        %v1879 = vlaneseq
        %v1880 = vshrl.u32 %v1879, 7
        %v1881 = vsub.s32 1, %v1880
        %v1882 = vrot.slane %v1452, %v1881
        %v1883 = vadd.f32 %v1781, %v1882
        %v1884 = vadd.f32 %v1785, %v1882
        %v1885 = vlaneseq
        %v1886 = vshrl.u32 %v1885, 7
        %v1887 = vsub.s32 2, %v1886
        %v1888 = vrot.slane %v1452, %v1887
        %v1889 = vadd.f32 %v1822, %v1888
        %v1890 = vadd.f32 %v1826, %v1888
        %v1891 = vlaneseq
        %v1892 = vshrl.u32 %v1891, 7
        %v1893 = vsub.s32 3, %v1892
        %v1894 = vrot.slane %v1452, %v1893
        %v1895 = vadd.f32 %v1824, %v1894
        %v1896 = vadd.f32 %v1828, %v1894
        %v1897 = vlaneseq
        %v1898 = vshrl.u32 %v1897, 7
        %v1899 = vsub.s32 4, %v1898
        %v1900 = vrot.slane %v1452, %v1899
        %v1901 = vadd.f32 %v1865, %v1900
        %v1902 = vadd.f32 %v1869, %v1900
        %v1903 = vlaneseq
        %v1904 = vshrl.u32 %v1903, 7
        %v1905 = vsub.s32 5, %v1904
        %v1906 = vrot.slane %v1452, %v1905
        %v1907 = vadd.f32 %v1867, %v1906
        %v1908 = vadd.f32 %v1871, %v1906
        %v1909 = vpack.c.bf16 %v1878, %v1877
        %v1910 = vpack.c.bf16 %v1884, %v1883
        %v1911 = vpack.c.bf16 %v1890, %v1889
        %v1912 = vpack.c.bf16 %v1896, %v1895
        %1913 = vmatprep.subr.bf16.mxu0 0
        %1914 = vmatpush1.bf16.xpose.msra.mxu0 %v1911
        %1915 = vmatprep.subr.bf16.mxu0 0
        %1916 = vmatpush1.bf16.xpose.msra.mxu0 %v1912
        %1917 = vmatprep.subr.bf16.mxu0 0
        %1918 = vmatpush1.bf16.xpose.msra.mxu0 %v770
        %1919 = vmatprep.subr.bf16.mxu0 0
        %1920 = vmatpush1.bf16.xpose.msra.mxu0 %v770
        %1921 = vmatprep.subr.bf16.mxu0 0
        %1922 = vmatpush1.bf16.xpose.msra.mxu0 %v770
        %1923 = vmatprep.subr.bf16.mxu0 0
        %1924 = vmatpush1.bf16.xpose.msra.mxu0 %v770
        %1925 = vmatprep.subr.bf16.mxu0 0
        %1926 = vmatpush1.bf16.xpose.msra.mxu0 %v770
        %1927 = vmatprep.subr.bf16.mxu0 0
        %1928 = vmatpush1.bf16.xpose.msra.mxu0 %v770
        %1929 = vmatprep.subr.bf16.mxu0 0
        %1930 = vmatpush1.bf16.xpose.msra.mxu0 0
        %1931 = vmatprep.subr.bf16.mxu0 0
        %1932 = vmatpush1.bf16.xpose.msra.mxu0 0
        %1933 = vmatprep.subr.bf16.mxu0 0
        %1934 = vmatpush1.bf16.xpose.msra.mxu0 0
        %1935 = vmatprep.subr.bf16.mxu0 0
        %1936 = vmatpush1.bf16.xpose.msra.mxu0 0
        %1937 = vmatprep.subr.bf16.mxu0 0
        %1938 = vmatpush1.bf16.xpose.msra.mxu0 0
        %1939 = vmatprep.subr.bf16.mxu0 0
        %1940 = vmatpush1.bf16.xpose.msra.mxu0 0
        %1941 = vmatprep.subr.bf16.mxu0 0
        %1942 = vmatpush1.bf16.xpose.msra.mxu0 0
        %1943 = vmatprep.subr.bf16.mxu0 0
        %1944 = vmatpush1.bf16.xpose.msra.mxu0 0
        %1945 = vmatprep.mubr.bf16.mxu0 0
        %1946 = vmatmul.mubr.bf16.gmra.mrb[0].mxu0 %v1909
        %v1947 = vpop.f32.mrb[0].mxu0
        %v1948 = vadd.f32 %v266, %v1947
        %v1949 = vpop.f32.mrb[0].mxu0
        %v1950 = vpop.f32.mrb[0].mxu0
        %v1951 = vadd.f32 %v267, %v1950
        %v1952 = vpop.f32.mrb[0].mxu0
        %1953 = vmatprep.mubr.bf16.mxu0 0
        %1954 = vmatmul.mubr.bf16.gmra.mrb[0].mxu0 %v1910
        %v1955 = vpop.f32.mrb[0].mxu0
        %v1956 = vadd.f32 %v268, %v1955
        %v1957 = vpop.f32.mrb[0].mxu0
        %v1958 = vpop.f32.mrb[0].mxu0
        %v1959 = vadd.f32 %v269, %v1958
        %v1960 = vpop.f32.mrb[0].mxu0
        %1961 = vdwg.mxu0
        %1962 = vmax.xlane.f32.xlu0 %v1948
        %v1963 = vpop.xlane.xlu0 %1962
        %1964 = vmax.xlane.f32.xlu0 %v1951
        %v1965 = vpop.xlane.xlu0 %1964
        %1966 = vmax.xlane.f32.xlu0 %v1956
        %v1967 = vpop.xlane.xlu0 %1966
        %1968 = vmax.xlane.f32.xlu0 %v1959
        %v1969 = vpop.xlane.xlu0 %1968
        %v1970 = vsub.f32 %v1948, %v1963
        %v1971 = vsub.f32 %v1951, %v1965
        %v1972 = vsub.f32 %v1956, %v1967
        %v1973 = vsub.f32 %v1959, %v1969
        %v1974 = vmul.f32 %v1970, 1.442695
        %v1975 = vpow.pop %v1974
        %v1976 = vmul.f32 %v1971, 1.442695
        %v1977 = vpow.pop %v1976
        %v1978 = vmul.f32 %v1972, 1.442695
        %v1979 = vpow.pop %v1978
        %v1980 = vmul.f32 %v1973, 1.442695
        %v1981 = vpow.pop %v1980
        %1982 = vadd.xlane.f32.xlu0 %v1975
        %v1983 = vpop.xlane.xlu0 %1982
        %1984 = vadd.xlane.f32.xlu0 %v1977
        %v1985 = vpop.xlane.xlu0 %1984
        %1986 = vadd.xlane.f32.xlu0 %v1979
        %v1987 = vpop.xlane.xlu0 %1986
        %1988 = vadd.xlane.f32.xlu0 %v1981
        %v1989 = vpop.xlane.xlu0 %1988
        %v1990 = vrcp.pop %v1983
        %v1991 = vrcp.pop %v1985
        %v1992 = vrcp.pop %v1987
        %v1993 = vrcp.pop %v1989
        %v1994 = vmul.f32 %v1975, %v1990
        %v1995 = vmul.f32 %v1977, %v1991
        %v1996 = vmul.f32 %v1979, %v1992
        %v1997 = vmul.f32 %v1981, %v1993
        %v1998 = vpack.c.bf16 %v1995, %v1994
        %v1999 = vpack.c.bf16 %v1997, %v1996
        %v2000 = vpack.c.bf16 %v1902, %v1901
        %v2001 = vpack.c.bf16 %v1908, %v1907
        %2002 = vmatprep.subr.bf16.mxu0 0
        %2003 = vmatpush1.bf16.msra.mxu0 %v2000
        %2004 = vmatprep.subr.bf16.mxu0 0
        %2005 = vmatpush1.bf16.msra.mxu0 %v2001
        %2006 = vmatprep.subr.bf16.mxu0 0
        %2007 = vmatpush1.bf16.msra.mxu0 %v770
        %2008 = vmatprep.subr.bf16.mxu0 0
        %2009 = vmatpush1.bf16.msra.mxu0 %v770
        %2010 = vmatprep.subr.bf16.mxu0 0
        %2011 = vmatpush1.bf16.msra.mxu0 %v770
        %2012 = vmatprep.subr.bf16.mxu0 0
        %2013 = vmatpush1.bf16.msra.mxu0 %v770
        %2014 = vmatprep.subr.bf16.mxu0 0
        %2015 = vmatpush1.bf16.msra.mxu0 %v770
        %2016 = vmatprep.subr.bf16.mxu0 0
        %2017 = vmatpush1.bf16.msra.mxu0 %v770
        %2018 = vmatprep.subr.bf16.mxu0 0
        %2019 = vmatpush1.bf16.msra.mxu0 0
        %2020 = vmatprep.subr.bf16.mxu0 0
        %2021 = vmatpush1.bf16.msra.mxu0 0
        %2022 = vmatprep.subr.bf16.mxu0 0
        %2023 = vmatpush1.bf16.msra.mxu0 0
        %2024 = vmatprep.subr.bf16.mxu0 0
        %2025 = vmatpush1.bf16.msra.mxu0 0
        %2026 = vmatprep.subr.bf16.mxu0 0
        %2027 = vmatpush1.bf16.msra.mxu0 0
        %2028 = vmatprep.subr.bf16.mxu0 0
        %2029 = vmatpush1.bf16.msra.mxu0 0
        %2030 = vmatprep.subr.bf16.mxu0 0
        %2031 = vmatpush1.bf16.msra.mxu0 0
        %2032 = vmatprep.subr.bf16.mxu0 0
        %2033 = vmatpush1.bf16.msra.mxu0 0
        %2034 = vmatprep.mubr.bf16.mxu0 0
        %2035 = vmatmul.mubr.bf16.gmra.mrb[0].mxu0 %v1998
        %v2036 = vpop.f32.mrb[0].mxu0
        %v2037 = vadd.f32 0.0, %v2036
        %v2038 = vpop.f32.mrb[0].mxu0
        %v2039 = vpop.f32.mrb[0].mxu0
        %v2040 = vadd.f32 0.0, %v2039
        %v2041 = vpop.f32.mrb[0].mxu0
        %2042 = vmatprep.mubr.bf16.mxu0 0
        %2043 = vmatmul.mubr.bf16.gmra.mrb[0].mxu0 %v1999
        %v2044 = vpop.f32.mrb[0].mxu0
        %v2045 = vadd.f32 0.0, %v2044
        %v2046 = vpop.f32.mrb[0].mxu0
        %v2047 = vpop.f32.mrb[0].mxu0
        %v2048 = vadd.f32 0.0, %v2047
        %v2049 = vpop.f32.mrb[0].mxu0
        %2050 = vdwg.mxu0
        %v2051 = vpack.c.bf16 %v2040, %v2037
        %s2052 = scalar_lea.vmem [#allocation2], 256
        %v2053 = vld [vmem:[%s2052] sm:$0xf]
        %v2054 = vld [vmem:[%s2052 + $0x4] sm:$0xf]
        %v2055 = vld [vmem:[%s2052 + $0x8] sm:$0xf]
        %v2056 = vld [vmem:[%s2052 + $0xc] sm:$0xf]
        %v2057 = vld [vmem:[%s2052 + $0x10] sm:$0xf]
        %v2058 = vld [vmem:[%s2052 + $0x14] sm:$0xf]
        %v2059 = vld [vmem:[%s2052 + $0x18] sm:$0xf]
        %v2060 = vld [vmem:[%s2052 + $0x1c] sm:$0xf]
        %v2061 = vld [vmem:[%s2052 + $0x20] sm:$0xf]
        %v2062 = vld [vmem:[%s2052 + $0x24] sm:$0xf]
        %v2063 = vld [vmem:[%s2052 + $0x28] sm:$0xf]
        %v2064 = vld [vmem:[%s2052 + $0x2c] sm:$0xf]
        %v2065 = vld [vmem:[%s2052 + $0x30] sm:$0xf]
        %v2066 = vld [vmem:[%s2052 + $0x34] sm:$0xf]
        %v2067 = vld [vmem:[%s2052 + $0x38] sm:$0xf]
        %v2068 = vld [vmem:[%s2052 + $0x3c] sm:$0xf]
        %v2085 = vunpack.c.l.b16 %v2053
        %v2086 = vunpack.c.l.b16 %v2054
        %v2087 = vunpack.c.l.b16 %v2055
        %v2088 = vunpack.c.l.b16 %v2056
        %v2089 = vunpack.c.l.b16 %v2057
        %v2090 = vunpack.c.l.b16 %v2058
        %v2091 = vunpack.c.l.b16 %v2059
        %v2092 = vunpack.c.l.b16 %v2060
        %v2093 = vunpack.c.l.b16 %v2061
        %v2094 = vunpack.c.l.b16 %v2062
        %v2095 = vunpack.c.l.b16 %v2063
        %v2096 = vunpack.c.l.b16 %v2064
        %v2097 = vunpack.c.l.b16 %v2065
        %v2098 = vunpack.c.l.b16 %v2066
        %v2099 = vunpack.c.l.b16 %v2067
        %v2100 = vunpack.c.l.b16 %v2068
        %v2101 = vpack.c.b16 %v2086, %v2085
        %v2102 = vpack.c.b16 %v2088, %v2087
        %v2103 = vpack.c.b16 %v2090, %v2089
        %v2104 = vpack.c.b16 %v2092, %v2091
        %v2105 = vpack.c.b16 %v2094, %v2093
        %v2106 = vpack.c.b16 %v2096, %v2095
        %v2107 = vpack.c.b16 %v2098, %v2097
        %v2108 = vpack.c.b16 %v2100, %v2099
        %2117 = vmatprep.subr.bf16.mxu0 0
        %2118 = vmatpush1.bf16.msra.mxu0 %v2101
        %2119 = vmatprep.subr.bf16.mxu0 0
        %2120 = vmatpush1.bf16.msra.mxu0 %v2102
        %2121 = vmatprep.subr.bf16.mxu0 0
        %2122 = vmatpush1.bf16.msra.mxu0 %v2103
        %2123 = vmatprep.subr.bf16.mxu0 0
        %2124 = vmatpush1.bf16.msra.mxu0 %v2104
        %2125 = vmatprep.subr.bf16.mxu0 0
        %2126 = vmatpush1.bf16.msra.mxu0 %v2105
        %2127 = vmatprep.subr.bf16.mxu0 0
        %2128 = vmatpush1.bf16.msra.mxu0 %v2106
        %2129 = vmatprep.subr.bf16.mxu0 0
        %2130 = vmatpush1.bf16.msra.mxu0 %v2107
        %2131 = vmatprep.subr.bf16.mxu0 0
        %2132 = vmatpush1.bf16.msra.mxu0 %v2108
        %2133 = vmatprep.subr.bf16.mxu0 0
        %2134 = vmatpush1.bf16.msra.mxu0 0
        %2135 = vmatprep.subr.bf16.mxu0 0
        %2136 = vmatpush1.bf16.msra.mxu0 0
        %2137 = vmatprep.subr.bf16.mxu0 0
        %2138 = vmatpush1.bf16.msra.mxu0 0
        %2139 = vmatprep.subr.bf16.mxu0 0
        %2140 = vmatpush1.bf16.msra.mxu0 0
        %2141 = vmatprep.subr.bf16.mxu0 0
        %2142 = vmatpush1.bf16.msra.mxu0 0
        %2143 = vmatprep.subr.bf16.mxu0 0
        %2144 = vmatpush1.bf16.msra.mxu0 0
        %2145 = vmatprep.subr.bf16.mxu0 0
        %2146 = vmatpush1.bf16.msra.mxu0 0
        %2147 = vmatprep.subr.bf16.mxu0 0
        %2148 = vmatpush1.bf16.msra.mxu0 0
        %2149 = vmatprep.mubr.bf16.mxu0 0
        %2150 = vmatmul.mubr.bf16.gmra.mrb[0].mxu0 %v2051
        %v2151 = vpop.f32.mrb[0].mxu0
        %v2152 = vadd.f32 0.0, %v2151
        %v2153 = vpop.f32.mrb[0].mxu0
        %v2154 = vpop.f32.mrb[0].mxu0
        %v2155 = vadd.f32 0.0, %v2154
        %v2156 = vpop.f32.mrb[0].mxu0
        %2157 = vdwg.mxu0
        %v2158 = vlaneseq
        %v2159 = vshrl.u32 %v2158, 7
        %v2160 = vsub.s32 6, %v2159
        %v2161 = vrot.slane %v1452, %v2160
        %v2162 = vadd.f32 %v2161, %v2152
        %v2163 = vadd.f32 %v2161, %v2155
        %v2164 = vpack.c.bf16 %v2048, %v2045
        %v2165 = vld [vmem:[%s2052 + $0x40] sm:$0xf]
        %v2166 = vld [vmem:[%s2052 + $0x44] sm:$0xf]
        %v2167 = vld [vmem:[%s2052 + $0x48] sm:$0xf]
        %v2168 = vld [vmem:[%s2052 + $0x4c] sm:$0xf]
        %v2169 = vld [vmem:[%s2052 + $0x50] sm:$0xf]
        %v2170 = vld [vmem:[%s2052 + $0x54] sm:$0xf]
        %v2171 = vld [vmem:[%s2052 + $0x58] sm:$0xf]
        %v2172 = vld [vmem:[%s2052 + $0x5c] sm:$0xf]
        %v2173 = vld [vmem:[%s2052 + $0x60] sm:$0xf]
        %v2174 = vld [vmem:[%s2052 + $0x64] sm:$0xf]
        %v2175 = vld [vmem:[%s2052 + $0x68] sm:$0xf]
        %v2176 = vld [vmem:[%s2052 + $0x6c] sm:$0xf]
        %v2177 = vld [vmem:[%s2052 + $0x70] sm:$0xf]
        %v2178 = vld [vmem:[%s2052 + $0x74] sm:$0xf]
        %v2179 = vld [vmem:[%s2052 + $0x78] sm:$0xf]
        %v2180 = vld [vmem:[%s2052 + $0x7c] sm:$0xf]
        %v2197 = vunpack.c.l.b16 %v2165
        %v2198 = vunpack.c.l.b16 %v2166
        %v2199 = vunpack.c.l.b16 %v2167
        %v2200 = vunpack.c.l.b16 %v2168
        %v2201 = vunpack.c.l.b16 %v2169
        %v2202 = vunpack.c.l.b16 %v2170
        %v2203 = vunpack.c.l.b16 %v2171
        %v2204 = vunpack.c.l.b16 %v2172
        %v2205 = vunpack.c.l.b16 %v2173
        %v2206 = vunpack.c.l.b16 %v2174
        %v2207 = vunpack.c.l.b16 %v2175
        %v2208 = vunpack.c.l.b16 %v2176
        %v2209 = vunpack.c.l.b16 %v2177
        %v2210 = vunpack.c.l.b16 %v2178
        %v2211 = vunpack.c.l.b16 %v2179
        %v2212 = vunpack.c.l.b16 %v2180
        %v2213 = vpack.c.b16 %v2198, %v2197
        %v2214 = vpack.c.b16 %v2200, %v2199
        %v2215 = vpack.c.b16 %v2202, %v2201
        %v2216 = vpack.c.b16 %v2204, %v2203
        %v2217 = vpack.c.b16 %v2206, %v2205
        %v2218 = vpack.c.b16 %v2208, %v2207
        %v2219 = vpack.c.b16 %v2210, %v2209
        %v2220 = vpack.c.b16 %v2212, %v2211
        %2229 = vmatprep.subr.bf16.mxu0 0
        %2230 = vmatpush1.bf16.msra.mxu0 %v2213
        %2231 = vmatprep.subr.bf16.mxu0 0
        %2232 = vmatpush1.bf16.msra.mxu0 %v2214
        %2233 = vmatprep.subr.bf16.mxu0 0
        %2234 = vmatpush1.bf16.msra.mxu0 %v2215
        %2235 = vmatprep.subr.bf16.mxu0 0
        %2236 = vmatpush1.bf16.msra.mxu0 %v2216
        %2237 = vmatprep.subr.bf16.mxu0 0
        %2238 = vmatpush1.bf16.msra.mxu0 %v2217
        %2239 = vmatprep.subr.bf16.mxu0 0
        %2240 = vmatpush1.bf16.msra.mxu0 %v2218
        %2241 = vmatprep.subr.bf16.mxu0 0
        %2242 = vmatpush1.bf16.msra.mxu0 %v2219
        %2243 = vmatprep.subr.bf16.mxu0 0
        %2244 = vmatpush1.bf16.msra.mxu0 %v2220
        %2245 = vmatprep.subr.bf16.mxu0 0
        %2246 = vmatpush1.bf16.msra.mxu0 0
        %2247 = vmatprep.subr.bf16.mxu0 0
        %2248 = vmatpush1.bf16.msra.mxu0 0
        %2249 = vmatprep.subr.bf16.mxu0 0
        %2250 = vmatpush1.bf16.msra.mxu0 0
        %2251 = vmatprep.subr.bf16.mxu0 0
        %2252 = vmatpush1.bf16.msra.mxu0 0
        %2253 = vmatprep.subr.bf16.mxu0 0
        %2254 = vmatpush1.bf16.msra.mxu0 0
        %2255 = vmatprep.subr.bf16.mxu0 0
        %2256 = vmatpush1.bf16.msra.mxu0 0
        %2257 = vmatprep.subr.bf16.mxu0 0
        %2258 = vmatpush1.bf16.msra.mxu0 0
        %2259 = vmatprep.subr.bf16.mxu0 0
        %2260 = vmatpush1.bf16.msra.mxu0 0
        %2261 = vmatprep.mubr.bf16.mxu0 0
        %2262 = vmatmul.mubr.bf16.gmra.mrb[0].mxu0 %v2164
        %v2263 = vpop.f32.mrb[0].mxu0
        %v2264 = vadd.f32 0.0, %v2263
        %v2265 = vpop.f32.mrb[0].mxu0
        %v2266 = vpop.f32.mrb[0].mxu0
        %v2267 = vadd.f32 0.0, %v2266
        %v2268 = vpop.f32.mrb[0].mxu0
        %2269 = vdwg.mxu0
        %v2270 = vadd.f32 %v2162, %v2264
        %v2271 = vadd.f32 %v2163, %v2267
        %v2272 = vadd.f32 %v1449, %v2270
        %v2273 = vadd.f32 %v1450, %v2271
        %2274 = vadd.xlane.f32.xlu0 %v2272
        %v2275 = vpop.xlane.xlu0 %2274
        %2276 = vadd.xlane.f32.xlu0 %v2273
        %v2277 = vpop.xlane.xlu0 %2276
        %v2278 = vmul.f32 %v2275, 0.03125
        %v2279 = vmul.f32 %v2277, 0.03125
        %v2280 = vmul.f32 %v2272, %v2272
        %v2281 = vmul.f32 %v2273, %v2273
        %2282 = vadd.xlane.f32.xlu0 %v2280
        %v2283 = vpop.xlane.xlu0 %2282
        %2284 = vadd.xlane.f32.xlu0 %v2281
        %v2285 = vpop.xlane.xlu0 %2284
        %v2286 = vmul.f32 %v2283, 0.03125
        %v2287 = vmul.f32 %v2285, 0.03125
        %v2288 = vmul.f32 %v2278, %v2278
        %v2289 = vmul.f32 %v2279, %v2279
        %v2290 = vsub.f32 %v2286, %v2288
        %v2291 = vsub.f32 %v2287, %v2289
        %v2292 = vmax.f32 %v2290, 0.0
        %v2293 = vmax.f32 %v2291, 0.0
        %v2294 = vsub.f32 %v2272, %v2278
        %v2295 = vsub.f32 %v2273, %v2279
        %v2296 = vadd.f32 %v2292, 1e-12
        %v2297 = vadd.f32 %v2293, 1e-12
        %v2298 = vrsqrt.pop %v2296
        %v2299 = vrsqrt.pop %v2297
        %v2300 = vmul.f32 %v2294, %v2298
        %v2301 = vmul.f32 %v2295, %v2299
        %v2302 = vlaneseq
        %v2303 = vshrl.u32 %v2302, 7
        %v2304 = vsub.s32 7, %v2303
        %v2305 = vrot.slane %v1452, %v2304
        %v2306 = vmul.f32 %v2300, %v2305
        %v2307 = vmul.f32 %v2301, %v2305
        %v2308 = vlaneseq
        %v2309 = vshrl.u32 %v2308, 7
        %v2310 = vsub.s32 0, %v2309
        %v2311 = vrot.slane %v1453, %v2310
        %v2312 = vadd.f32 %v2306, %v2311
        %v2313 = vadd.f32 %v2307, %v2311
        %v2314 = vpack.c.bf16 %v2313, %v2312
        %v2315 = vld [vmem:[%s2052 + $0x80] sm:$0xf]
        %v2316 = vld [vmem:[%s2052 + $0x84] sm:$0xf]
        %v2317 = vld [vmem:[%s2052 + $0x88] sm:$0xf]
        %v2318 = vld [vmem:[%s2052 + $0x8c] sm:$0xf]
        %v2319 = vld [vmem:[%s2052 + $0x90] sm:$0xf]
        %v2320 = vld [vmem:[%s2052 + $0x94] sm:$0xf]
        %v2321 = vld [vmem:[%s2052 + $0x98] sm:$0xf]
        %v2322 = vld [vmem:[%s2052 + $0x9c] sm:$0xf]
        %v2323 = vld [vmem:[%s2052 + $0xa0] sm:$0xf]
        %v2324 = vld [vmem:[%s2052 + $0xa4] sm:$0xf]
        %v2325 = vld [vmem:[%s2052 + $0xa8] sm:$0xf]
        %v2326 = vld [vmem:[%s2052 + $0xac] sm:$0xf]
        %v2327 = vld [vmem:[%s2052 + $0xb0] sm:$0xf]
        %v2328 = vld [vmem:[%s2052 + $0xb4] sm:$0xf]
        %v2329 = vld [vmem:[%s2052 + $0xb8] sm:$0xf]
        %v2330 = vld [vmem:[%s2052 + $0xbc] sm:$0xf]
        %v2331 = vlaneseq
        %v2332 = vshrl.u32 %v2331, 7
        %v2333 = vsub.s32 1, %v2332
        %v2334 = vrot.slane %v1453, %v2333
        %v2351 = vunpack.c.l.b16 %v2315
        %v2352 = vunpack.c.l.b16 %v2316
        %v2353 = vunpack.c.l.b16 %v2317
        %v2354 = vunpack.c.l.b16 %v2318
        %v2355 = vunpack.c.l.b16 %v2319
        %v2356 = vunpack.c.l.b16 %v2320
        %v2357 = vunpack.c.l.b16 %v2321
        %v2358 = vunpack.c.l.b16 %v2322
        %v2359 = vunpack.c.l.b16 %v2323
        %v2360 = vunpack.c.l.b16 %v2324
        %v2361 = vunpack.c.l.b16 %v2325
        %v2362 = vunpack.c.l.b16 %v2326
        %v2363 = vunpack.c.l.b16 %v2327
        %v2364 = vunpack.c.l.b16 %v2328
        %v2365 = vunpack.c.l.b16 %v2329
        %v2366 = vunpack.c.l.b16 %v2330
        %v2367 = vpack.c.b16 %v2352, %v2351
        %v2368 = vpack.c.b16 %v2354, %v2353
        %v2369 = vpack.c.b16 %v2356, %v2355
        %v2370 = vpack.c.b16 %v2358, %v2357
        %v2371 = vpack.c.b16 %v2360, %v2359
        %v2372 = vpack.c.b16 %v2362, %v2361
        %v2373 = vpack.c.b16 %v2364, %v2363
        %v2374 = vpack.c.b16 %v2366, %v2365
        %2383 = vmatprep.subr.bf16.mxu0 0
        %2384 = vmatpush1.bf16.msra.mxu0 %v2367
        %2385 = vmatprep.subr.bf16.mxu0 0
        %2386 = vmatpush1.bf16.msra.mxu0 %v2368
        %2387 = vmatprep.subr.bf16.mxu0 0
        %2388 = vmatpush1.bf16.msra.mxu0 %v2369
        %2389 = vmatprep.subr.bf16.mxu0 0
        %2390 = vmatpush1.bf16.msra.mxu0 %v2370
        %2391 = vmatprep.subr.bf16.mxu0 0
        %2392 = vmatpush1.bf16.msra.mxu0 %v2371
        %2393 = vmatprep.subr.bf16.mxu0 0
        %2394 = vmatpush1.bf16.msra.mxu0 %v2372
        %2395 = vmatprep.subr.bf16.mxu0 0
        %2396 = vmatpush1.bf16.msra.mxu0 %v2373
        %2397 = vmatprep.subr.bf16.mxu0 0
        %2398 = vmatpush1.bf16.msra.mxu0 %v2374
        %2399 = vmatprep.subr.bf16.mxu0 0
        %2400 = vmatpush1.bf16.msra.mxu0 0
        %2401 = vmatprep.subr.bf16.mxu0 0
        %2402 = vmatpush1.bf16.msra.mxu0 0
        %2403 = vmatprep.subr.bf16.mxu0 0
        %2404 = vmatpush1.bf16.msra.mxu0 0
        %2405 = vmatprep.subr.bf16.mxu0 0
        %2406 = vmatpush1.bf16.msra.mxu0 0
        %2407 = vmatprep.subr.bf16.mxu0 0
        %2408 = vmatpush1.bf16.msra.mxu0 0
        %2409 = vmatprep.subr.bf16.mxu0 0
        %2410 = vmatpush1.bf16.msra.mxu0 0
        %2411 = vmatprep.subr.bf16.mxu0 0
        %2412 = vmatpush1.bf16.msra.mxu0 0
        %2413 = vmatprep.subr.bf16.mxu0 0
        %2414 = vmatpush1.bf16.msra.mxu0 0
        %2415 = vmatprep.mubr.bf16.mxu0 0
        %2416 = vmatmul.mubr.bf16.gmra.mrb[0].mxu0 %v2314
        %v2417 = vpop.f32.mrb[0].mxu0
        %v2418 = vadd.f32 %v2334, %v2417
        %v2419 = vpop.f32.mrb[0].mxu0
        %v2420 = vpop.f32.mrb[0].mxu0
        %v2421 = vadd.f32 %v2334, %v2420
        %v2422 = vpop.f32.mrb[0].mxu0
        %2423 = vdwg.mxu0
        %v2424 = vmul.f32 %v2418, 0.5
        %v2425 = vmul.f32 %v2421, 0.5
        %v2426 = vmul.f32 %v2418, 0.044715
        %v2427 = vmul.f32 %v2421, 0.044715
        %v2428 = vmul.f32 %v2426, %v2418
        %v2429 = vmul.f32 %v2427, %v2421
        %v2430 = vmul.f32 %v2428, %v2418
        %v2431 = vmul.f32 %v2429, %v2421
        %v2432 = vadd.f32 %v2418, %v2430
        %v2433 = vadd.f32 %v2421, %v2431
        %v2434 = vmul.f32 %v2432, 0.7978846
        %v2435 = vmul.f32 %v2433, 0.7978846
        %v2436 = vtanh.pop %v2434
        %v2437 = vtanh.pop %v2435
        %v2438 = vadd.f32 %v2436, 1.0
        %v2439 = vadd.f32 %v2437, 1.0
        %v2440 = vmul.f32 %v2424, %v2438
        %v2441 = vmul.f32 %v2425, %v2439
        %v2442 = vpack.c.bf16 %v2441, %v2440
        %v2443 = vld [vmem:[%s2052 + $0xc0] sm:$0xf]
        %v2444 = vld [vmem:[%s2052 + $0xc4] sm:$0xf]
        %v2445 = vld [vmem:[%s2052 + $0xc8] sm:$0xf]
        %v2446 = vld [vmem:[%s2052 + $0xcc] sm:$0xf]
        %v2447 = vld [vmem:[%s2052 + $0xd0] sm:$0xf]
        %v2448 = vld [vmem:[%s2052 + $0xd4] sm:$0xf]
        %v2449 = vld [vmem:[%s2052 + $0xd8] sm:$0xf]
        %v2450 = vld [vmem:[%s2052 + $0xdc] sm:$0xf]
        %v2451 = vld [vmem:[%s2052 + $0xe0] sm:$0xf]
        %v2452 = vld [vmem:[%s2052 + $0xe4] sm:$0xf]
        %v2453 = vld [vmem:[%s2052 + $0xe8] sm:$0xf]
        %v2454 = vld [vmem:[%s2052 + $0xec] sm:$0xf]
        %v2455 = vld [vmem:[%s2052 + $0xf0] sm:$0xf]
        %v2456 = vld [vmem:[%s2052 + $0xf4] sm:$0xf]
        %v2457 = vld [vmem:[%s2052 + $0xf8] sm:$0xf]
        %v2458 = vld [vmem:[%s2052 + $0xfc] sm:$0xf]
        %v2459 = vlaneseq
        %v2460 = vshrl.u32 %v2459, 7
        %v2461 = vsub.s32 2, %v2460
        %v2462 = vrot.slane %v1453, %v2461
        %v2479 = vunpack.c.l.b16 %v2443
        %v2480 = vunpack.c.l.b16 %v2444
        %v2481 = vunpack.c.l.b16 %v2445
        %v2482 = vunpack.c.l.b16 %v2446
        %v2483 = vunpack.c.l.b16 %v2447
        %v2484 = vunpack.c.l.b16 %v2448
        %v2485 = vunpack.c.l.b16 %v2449
        %v2486 = vunpack.c.l.b16 %v2450
        %v2487 = vunpack.c.l.b16 %v2451
        %v2488 = vunpack.c.l.b16 %v2452
        %v2489 = vunpack.c.l.b16 %v2453
        %v2490 = vunpack.c.l.b16 %v2454
        %v2491 = vunpack.c.l.b16 %v2455
        %v2492 = vunpack.c.l.b16 %v2456
        %v2493 = vunpack.c.l.b16 %v2457
        %v2494 = vunpack.c.l.b16 %v2458
        %v2495 = vpack.c.b16 %v2480, %v2479
        %v2496 = vpack.c.b16 %v2482, %v2481
        %v2497 = vpack.c.b16 %v2484, %v2483
        %v2498 = vpack.c.b16 %v2486, %v2485
        %v2499 = vpack.c.b16 %v2488, %v2487
        %v2500 = vpack.c.b16 %v2490, %v2489
        %v2501 = vpack.c.b16 %v2492, %v2491
        %v2502 = vpack.c.b16 %v2494, %v2493
        %2511 = vmatprep.subr.bf16.mxu0 0
        %2512 = vmatpush1.bf16.msra.mxu0 %v2495
        %2513 = vmatprep.subr.bf16.mxu0 0
        %2514 = vmatpush1.bf16.msra.mxu0 %v2496
        %2515 = vmatprep.subr.bf16.mxu0 0
        %2516 = vmatpush1.bf16.msra.mxu0 %v2497
        %2517 = vmatprep.subr.bf16.mxu0 0
        %2518 = vmatpush1.bf16.msra.mxu0 %v2498
        %2519 = vmatprep.subr.bf16.mxu0 0
        %2520 = vmatpush1.bf16.msra.mxu0 %v2499
        %2521 = vmatprep.subr.bf16.mxu0 0
        %2522 = vmatpush1.bf16.msra.mxu0 %v2500
        %2523 = vmatprep.subr.bf16.mxu0 0
        %2524 = vmatpush1.bf16.msra.mxu0 %v2501
        %2525 = vmatprep.subr.bf16.mxu0 0
        %2526 = vmatpush1.bf16.msra.mxu0 %v2502
        %2527 = vmatprep.subr.bf16.mxu0 0
        %2528 = vmatpush1.bf16.msra.mxu0 0
        %2529 = vmatprep.subr.bf16.mxu0 0
        %2530 = vmatpush1.bf16.msra.mxu0 0
        %2531 = vmatprep.subr.bf16.mxu0 0
        %2532 = vmatpush1.bf16.msra.mxu0 0
        %2533 = vmatprep.subr.bf16.mxu0 0
        %2534 = vmatpush1.bf16.msra.mxu0 0
        %2535 = vmatprep.subr.bf16.mxu0 0
        %2536 = vmatpush1.bf16.msra.mxu0 0
        %2537 = vmatprep.subr.bf16.mxu0 0
        %2538 = vmatpush1.bf16.msra.mxu0 0
        %2539 = vmatprep.subr.bf16.mxu0 0
        %2540 = vmatpush1.bf16.msra.mxu0 0
        %2541 = vmatprep.subr.bf16.mxu0 0
        %2542 = vmatpush1.bf16.msra.mxu0 0
        %2543 = vmatprep.mubr.bf16.mxu0 0
        %2544 = vmatmul.mubr.bf16.gmra.mrb[0].mxu0 %v2442
        %v2545 = vpop.f32.mrb[0].mxu0
        %v2546 = vadd.f32 %v2462, %v2545
        %v2547 = vpop.f32.mrb[0].mxu0
        %v2548 = vpop.f32.mrb[0].mxu0
        %v2549 = vadd.f32 %v2462, %v2548
        %v2550 = vpop.f32.mrb[0].mxu0
        %2551 = vdwg.mxu0
        %v2552 = vadd.f32 %v2312, %v2546
        %v2553 = vadd.f32 %v2313, %v2549
        %2554 = vadd.xlane.f32.xlu0 %v2552
        %v2555 = vpop.xlane.xlu0 %2554
        %2556 = vadd.xlane.f32.xlu0 %v2553
        %v2557 = vpop.xlane.xlu0 %2556
        %v2558 = vmul.f32 %v2555, 0.03125
        %v2559 = vmul.f32 %v2557, 0.03125
        %v2560 = vmul.f32 %v2552, %v2552
        %v2561 = vmul.f32 %v2553, %v2553
        %2562 = vadd.xlane.f32.xlu0 %v2560
        %v2563 = vpop.xlane.xlu0 %2562
        %2564 = vadd.xlane.f32.xlu0 %v2561
        %v2565 = vpop.xlane.xlu0 %2564
        %v2566 = vmul.f32 %v2563, 0.03125
        %v2567 = vmul.f32 %v2565, 0.03125
        %v2568 = vmul.f32 %v2558, %v2558
        %v2569 = vmul.f32 %v2559, %v2559
        %v2570 = vsub.f32 %v2566, %v2568
        %v2571 = vsub.f32 %v2567, %v2569
        %v2572 = vmax.f32 %v2570, 0.0
        %v2573 = vmax.f32 %v2571, 0.0
        %v2574 = vsub.f32 %v2552, %v2558
        %v2575 = vsub.f32 %v2553, %v2559
        %v2576 = vadd.f32 %v2572, 1e-12
        %v2577 = vadd.f32 %v2573, 1e-12
        %v2578 = vrsqrt.pop %v2576
        %v2579 = vrsqrt.pop %v2577
        %v2580 = vmul.f32 %v2574, %v2578
        %v2581 = vmul.f32 %v2575, %v2579
        %v2582 = vlaneseq
        %v2583 = vshrl.u32 %v2582, 7
        %v2584 = vsub.s32 3, %v2583
        %v2585 = vrot.slane %v1453, %v2584
        %v2586 = vmul.f32 %v2580, %v2585
        %v2587 = vmul.f32 %v2581, %v2585
        %v2588 = vlaneseq
        %v2589 = vshrl.u32 %v2588, 7
        %v2590 = vsub.s32 4, %v2589
        %v2591 = vrot.slane %v1453, %v2590
        %v2592 = vadd.f32 %v2586, %v2591
        %v2593 = vadd.f32 %v2587, %v2591
        %2594 = vst [vmem:[%s261] sm:$0xff] %v2592
        %2595 = vst [vmem:[%s261 + $0x8] sm:$0xff] %v2593
        %s2596 = smul.u32 2, %s17
        %p2597 = scmp.lt.s32.totalorder %s2596, 3
        %s2598 = scalar_select %p2597, %s2596, 3
        %s2599 = smul.addr %s2598, 8
        %s2600 = scalar_lea.vmem %s5, %s2599
        // Predicated region
        $region45: #{encoding_model_forward.1} parent=39 // pred_check
          %p2601 = pneg %p150
        $region46: #{encoding_model_forward.1} parent=39 // pred_check_branch
          %2603 = sbr.rel (%p2601) target = $region48
        $region47: #{encoding_model_forward.1} parent=39 // pred_region
          %s2604 = smul.u32 2, %s17
        $region48: #{encoding_model_forward.1} parent=39 // pred_fallthru
          _
      $region40: #{encoding_model_forward.1} parent=5 // pred_fallthru
        _
      %p2605 = scmp.le.s32.totalorder 2, %s12
      // Predicated region
      $region49: #{encoding_model_forward.1} parent=5 // pred_check
        %p2606 = pneg %p2605
      $region50: #{encoding_model_forward.1} parent=5 // pred_check_branch
        %2608 = sbr.rel (%p2606) target = $region52
      $region51: #{encoding_model_forward.1} parent=5 // pred_region
        %s2609 = ssub.s32 %s12, 2
        // Predicated region
        $region53: #{encoding_model_forward.1} parent=51 // pred_check
          %p2610 = pneg %p156
        $region54: #{encoding_model_forward.1} parent=51 // pred_check_branch
          %2612 = sbr.rel (%p2610) target = $region56
        $region55: #{encoding_model_forward.1} parent=51 // pred_region
          %s2613 = smul.u32 2, %s18
          %p2614 = scmp.lt.s32.totalorder %s2613, 3
          %s2615 = scalar_select %p2614, %s2613, 3
          %s2616 = smul.addr %s2615, 8
          %s2617 = scalar_lea.vmem %s5, %s2616
        $region56: #{encoding_model_forward.1} parent=51 // pred_fallthru
          _
      $region52: #{encoding_model_forward.1} parent=5 // pred_fallthru
        _
    $region6: #{encoding_model_forward.1} parent=1 // loop_footer
      %s16 = sadd.s32 1, %s12
    $region7: #{encoding_model_forward.1} parent=1 // loop_footer_branch
      %11 = sbr.rel target = $region3
    $region8: #{encoding_model_forward.1} parent=1 // loop_exit
      _
    %2618 = vsyncpa [#allocation3], 1
    %s2619 = scalar_lea.sflag [#allocation3], 1
    %2620 = vsyncpa %s2619, 1

</llo_original>
